<compile_context>
chip_gen: v7x
topology: tpu7x:2x2x1
jax: 0.10.0
libtpu: 0.0.40
codegen_flags: <defaults>
</compile_context>

<pallas_src>
import jax
import jax.numpy as jnp
from jax.experimental import pallas as pl
from jax.experimental.pallas import tpu as pltpu


# ------------------------------------------------------------------ small helpers ----
def _pad128(c):
    return -(-int(c) // 128) * 128


def _pad8(c):
    return -(-int(c) // 8) * 8


# -------------------------------------------------------------------------- conv -----
def conv2d_relu(x, w, b, *, padding=0, relu=True, fuse_pool=False,
                max_tile_rows=64, block_budget_bytes=10 << 20,
                vmem_limit_bytes=48 << 20, out_dtype=jnp.bfloat16):
    """Stride-1 KxK conv + bias (+ ReLU) (+ fused 2x2/2 max pool), NHWC, one kernel.

    x: [N, H, W, Cin] bf16, w: [K, K, Cin, Cout] bf16, b: [Cout] f32.
    The zero-padded tile is built inside the kernel in a FLAT bf16 VMEM scratch; the
    K*K taps are contiguous slices of it (full padded-width matmuls).  The grid is
    (batch, output-row-tiles) with a 1-row halo via extra BlockSpecs; row tiling is
    cdiv-based (masked short last tile).
    """
    N, H, W, Cin = map(int, x.shape)
    K = int(w.shape[0])
    Cout = int(w.shape[3])
    p = int(padding)
    Ho = H + 2 * p - K + 1
    Wo = W + 2 * p - K + 1
    Wp = W + 2 * p                         # row stride of the flat padded scratch

    if fuse_pool:
        assert Ho % 2 == 0 and Wo % 2 == 0, "fused 2x2 pool needs even conv output"

    tileable = (p == 1 and K == 3)         # halo row fetch only implemented for 3x3/pad1
    cl_in, cl_out = _pad128(Cin), _pad128(Cout)
    if tileable:
        per_row = (W * cl_in * 2 * 2                                   # x block (dbl)
                   + (Wo // 2 if fuse_pool else Wo) * cl_out * 2 * 2
                   // (2 if fuse_pool else 1)                          # out block (dbl)
                   + Wp * cl_in * 2                                    # bf16 scratch
                   + Wp * cl_out * 4)                                  # f32 accumulator
        fixed = (2 * 2 * K * K * _pad8(Cin) * cl_out                   # weights (dbl)
                 + 2 * 2 * W * cl_in * 2                               # halo rows (dbl)
                 + (64 << 10))
        cap = max(1, (block_budget_bytes - fixed) // per_row) \
            if fixed < block_budget_bytes else 1
        tile_h = int(min(Ho, max_tile_rows, cap))
        if fuse_pool and tile_h % 2:
            tile_h = max(2, tile_h - 1)
    else:
        tile_h = Ho
    RT = -(-Ho // tile_h)
    use_halo = tileable and RT > 1
    V_last = Ho - (RT - 1) * tile_h        # valid conv rows in the final (cdiv) tile
    data_rows = tile_h if tileable else H  # x rows copied into the scratch per step
    buf_rows = data_rows + 2 * p
    rows_out = tile_h if tileable else Ho  # conv rows produced per grid step
    M = rows_out * Wp                      # tap slice / accumulator row count
    F = buf_rows * Wp + (K - 1)            # flat scratch rows (K-1 tail slack)
    out_h = Ho // 2 if fuse_pool else Ho
    out_w = Wo // 2 if fuse_pool else Wo
    tile_out_h = rows_out // 2 if fuse_pool else rows_out
    xdt = x.dtype

    b2 = b.reshape(1, Cout).astype(jnp.float32)
    wb = w.astype(jnp.bfloat16)

    def kernel(*refs):
        if use_halo:
            x_ref, top_ref, bot_ref, w_ref, b_ref, o_ref, buf_ref, acc_ref = refs
        else:
            x_ref, w_ref, b_ref, o_ref, buf_ref, acc_ref = refs

        # ---- build the zero-padded input tile in the flat bf16 scratch -------------
        # (padded row r lives at flat rows [r*Wp, (r+1)*Wp))
        for r in range(data_rows):
            buf_ref[pl.ds((r + p) * Wp + p, W), :] = x_ref[0, r]

        if p > 0:
            # Border-only zeroing: the interior is fully overwritten above; the right
            # pad of row r-1 and the left pad of row r are flat-adjacent, so one small
            # store per row boundary replaces a full-buffer memset.
            buf_ref[pl.ds(0, p), :] = jnp.zeros((p, Cin), xdt)
            zlr = jnp.zeros((2 * p, Cin), xdt)
            for r in range(1, buf_rows):
                buf_ref[pl.ds(r * Wp - p, 2 * p), :] = zlr
            buf_ref[pl.ds(buf_rows * Wp - p, p + K - 1), :] = (
                jnp.zeros((p + K - 1, Cin), xdt))

            zrow = jnp.zeros((p * Wp, Cin), xdt)
            if use_halo:
                rt = pl.program_id(1)

                @pl.when(rt == 0)                         # image top -> zero pad row
                def _():
                    buf_ref[pl.ds(0, p * Wp), :] = zrow

                @pl.when(rt > 0)                          # interior -> real halo row
                def _():
                    buf_ref[pl.ds(p, W), :] = top_ref[0, 0]

                # Bottom pad row.  On the (possibly short) final cdiv tile the row
                # after the last *valid* data row must be zero; it may hold OOB
                # garbage from the copy loop above, so this store comes after it.
                @pl.when(rt == RT - 1)
                def _():
                    buf_ref[pl.ds((V_last + p) * Wp, p * Wp), :] = zrow

                @pl.when(rt < RT - 1)                     # interior -> real halo row
                def _():
                    buf_ref[pl.ds((data_rows + p) * Wp + p, W), :] = bot_ref[0, 0]
            else:
                buf_ref[pl.ds(0, p * Wp), :] = zrow
                buf_ref[pl.ds((data_rows + p) * Wp, p * Wp), :] = zrow
        elif K > 1:
            # unpadded path: only the K-1 tail slack (read by the discarded garbage
            # columns) needs a deterministic value
            buf_ref[pl.ds(buf_rows * Wp, K - 1), :] = jnp.zeros((K - 1, Cin), xdt)

        # ---- K*K shifted-tap matmuls over the flat scratch (MXU, f32 accumulate) ---
        # Full padded-width taps: contiguous (M, Cin) slices at static offsets -> no
        # per-tap slice+reshape copies; bias folded into the first tap.
        acc_ref[...] = (jnp.dot(buf_ref[pl.ds(0, M), :], w_ref[0, 0],
                                preferred_element_type=jnp.float32) + b_ref[...])
        for kh in range(K):
            for kw in range(K):
                if kh == 0 and kw == 0:
                    continue
                acc_ref[...] += jnp.dot(buf_ref[pl.ds(kh * Wp + kw, M), :],
                                        w_ref[kh, kw],
                                        preferred_element_type=jnp.float32)
        # TODO(synk): Cout-tiled register accumulation would remove the K*K-1 f32
        # accumulator read-modify-writes through VMEM (review item); left as is.

        res = acc_ref[...]
        if relu:
            res = jnp.maximum(res, 0.0)
        res = res.reshape(rows_out, Wp, Cout)[:, :Wo, :]   # crop garbage cols (once)
        if fuse_pool:                                       # 2x2/2 max pool epilogue
            res = jnp.max(res.reshape(rows_out // 2, 2, Wo // 2, 2, Cout),
                          axis=(1, 3))
        o_ref[0] = res.astype(o_ref.dtype)

    if use_halo:
        in_specs = [
            pl.BlockSpec((1, tile_h, W, Cin), lambda n, rt: (n, rt, 0, 0)),
            # 1-row top / bottom halos (H block size 1 -> block index == row index)
            pl.BlockSpec((1, 1, W, Cin),
                         lambda n, rt: (n, jnp.maximum(rt * tile_h - 1, 0), 0, 0)),
            pl.BlockSpec((1, 1, W, Cin),
                         lambda n, rt: (n, jnp.minimum(rt * tile_h + tile_h, H - 1),
                                        0, 0)),
        ]
        inputs = (x, x, x)
    else:
        in_specs = [pl.BlockSpec((1, data_rows, W, Cin), lambda n, rt: (n, 0, 0, 0))]
        inputs = (x,)
    # TODO(synk): on v7x, pipeline_mode=pl.Buffered(1) on these constant-index blocks
    # would reclaim the duplicated weight buffer; left default for portability.
    in_specs += [pl.BlockSpec((K, K, Cin, Cout), lambda n, rt: (0, 0, 0, 0)),
                 pl.BlockSpec((1, Cout), lambda n, rt: (0, 0))]
    inputs += (wb, b2)

    return pl.pallas_call(
        kernel,
        out_shape=jax.ShapeDtypeStruct((N, out_h, out_w, Cout), out_dtype),
        grid=(N, RT),
        in_specs=in_specs,
        out_specs=pl.BlockSpec((1, tile_out_h, out_w, Cout),
                               lambda n, rt: (n, rt, 0, 0)),
        scratch_shapes=[pltpu.VMEM((F, Cin), xdt),
                        pltpu.VMEM((M, Cout), jnp.float32)],
        compiler_params=pltpu.CompilerParams(
            dimension_semantics=("parallel", "parallel"),
            vmem_limit_bytes=vmem_limit_bytes),
    )(*inputs)


# ---------------------------------------------------------------------- max pool -----
def maxpool_2x2(x, ceil_mode=False, block_budget_bytes=8 << 20,
                vmem_limit_bytes=48 << 20):
    """Standalone fused MaxPool2d(2, 2[, ceil_mode]) on NHWC (fallback when the pool
    cannot be fused into the preceding conv, e.g. odd spatial dims / ceil_mode pad).

    The wrapper reshape (N,H,W,C) -> (N*Ho,2,Wo,2C) is free on the HBM array; the
    kernel reduces the H pair with a plane max and the W pair with a lane-slice max.
    """
    N, H, W, C = map(int, x.shape)
    if ceil_mode:
        Ho, Wo = -(-H // 2), -(-W // 2)
        ph, pw = 2 * Ho - H, 2 * Wo - W
        if ph or pw:
            # trailing-edge pad; -inf keeps max semantics (every window still holds
            # at least one real element).
            x = jnp.pad(x, ((0, 0), (0, ph), (0, pw), (0, 0)),
                        constant_values=-jnp.inf)
    else:
        Ho, Wo = H // 2, W // 2
        if H != 2 * Ho or W != 2 * Wo:
            x = x[:, :2 * Ho, :2 * Wo, :]

    xr = x.reshape(N * Ho, 2, Wo, 2 * C)
    rows = N * Ho
    per_row = 2 * Wo * _pad128(2 * C) * 2 * 2 + Wo * _pad128(C) * 2 * 2
    tile = int(min(rows, max(1, block_budget_bytes // per_row)))
    grid = (-(-rows // tile),)

    def kernel(x_ref, o_ref):
        v = x_ref[...]
        m = jnp.maximum(v[:, 0], v[:, 1])                     # reduce the H pair
        o_ref[...] = jnp.maximum(m[:, :, :C], m[:, :, C:])    # reduce the W pair

    out = pl.pallas_call(
        kernel,
        out_shape=jax.ShapeDtypeStruct((rows, Wo, C), x.dtype),
        grid=grid,
        in_specs=[pl.BlockSpec((tile, 2, Wo, 2 * C), lambda t: (t, 0, 0, 0))],
        out_specs=pl.BlockSpec((tile, Wo, C), lambda t: (t, 0, 0)),
        compiler_params=pltpu.CompilerParams(
            dimension_semantics=("parallel",),
            vmem_limit_bytes=vmem_limit_bytes),
    )(xr)
    return out.reshape(N, Ho, Wo, C)


# ------------------------------------------------------------------------- L2Norm ----
def l2norm(x, gamma, eps=1e-10, block_budget_bytes=8 << 20):
    """SSD L2Norm: per-pixel channel L2 normalisation scaled by gamma (f32 output)."""
    N, H, W, C = map(int, x.shape)
    rows = N * H * W
    xf = x.reshape(rows, C)
    g2 = gamma.reshape(1, C).astype(jnp.float32)
    per_row = _pad128(C) * (2 * 2 + 4 * 2)
    tile = int(min(rows, max(1, block_budget_bytes // per_row)))
    grid = (-(-rows // tile),)

    def kernel(x_ref, g_ref, o_ref):
        v = x_ref[...].astype(jnp.float32)
        # exact reciprocal (parity with the torch L2Norm); the divide is on a
        # (tile, 1) column so its VPU cost is negligible.
        inv = 1.0 / (jnp.sqrt(jnp.sum(v * v, axis=-1, keepdims=True)) + eps)
        o_ref[...] = v * inv * g_ref[...]

    out = pl.pallas_call(
        kernel,
        out_shape=jax.ShapeDtypeStruct((rows, C), jnp.float32),
        grid=grid,
        in_specs=[pl.BlockSpec((tile, C), lambda t: (t, 0)),
                  pl.BlockSpec((1, C), lambda t: (0, 0))],
        out_specs=pl.BlockSpec((tile, C), lambda t: (t, 0)),
        compiler_params=pltpu.CompilerParams(dimension_semantics=("parallel",)),
    )(xf, g2)
    return out.reshape(N, H, W, C)


# --------------------------------------------------------------------- parameters ----
VGG_CFG = [64, 64, 'M', 128, 128, 'M', 256, 256, 256, 'C', 512, 512, 512, 'M',
           512, 512, 512]                      # base['300']
MBOX_CFG = [4, 6, 6, 6, 4, 4]                  # mbox['300'] (what add_extras receives)


def _conv_init(key, k, cin, cout):
    std = (2.0 / (k * k * cin)) ** 0.5
    w = std * jax.random.normal(key, (k, k, cin, cout), jnp.float32)
    return w.astype(jnp.bfloat16), jnp.zeros((cout,), jnp.float32)


def init_params(key):
    params = {'vgg': [], 'extras': []}
    # vgg[:23] - every Conv2d (3x3, pad 1) is followed by a ReLU, which we fuse.
    in_c, layer_idx = 3, 0
    for v in VGG_CFG:
        if layer_idx >= 23:
            break
        if v == 'M':
            params['vgg'].append(('pool', False)); layer_idx += 1
        elif v == 'C':
            params['vgg'].append(('pool', True)); layer_idx += 1
        else:
            key, sk = jax.random.split(key)
            params['vgg'].append(('conv',) + _conv_init(sk, 3, in_c, v))
            layer_idx += 2                      # Conv2d + ReLU in the torch ModuleList
            in_c = v
    # extras (see TODO(synk) about in_channels=512 at the top of this file).
    in_c, flag = 512, False
    for v in MBOX_CFG:
        ks = (1, 3)[flag]
        key, sk = jax.random.split(key)
        params['extras'].append(_conv_init(sk, ks, in_c, v))
        flag = not flag
        in_c = v
    params['l2norm_gamma'] = jnp.full((512,), 20.0, jnp.float32)
    return params


# ------------------------------------------------------------------------ forward ----
def ssd_backbone_forward(params, x_nchw):
    # NCHW in (PyTorch convention) -> NHWC bf16 inside -> NCHW f32 sources out.
    x = jnp.transpose(x_nchw, (0, 2, 3, 1)).astype(jnp.bfloat16)
    vgg = params['vgg']
    i = 0
    while i < len(vgg):
        layer = vgg[i]
        if layer[0] == 'conv':
            _, w, b = layer
            nxt = vgg[i + 1] if i + 1 < len(vgg) else None
            # Fuse the following 2x2 pool into the conv epilogue when the conv output
            # is even-sized (ceil == floor there); otherwise fall back to the
            # standalone pool kernel.
            fuse = (nxt is not None and nxt[0] == 'pool'
                    and x.shape[1] % 2 == 0 and x.shape[2] % 2 == 0)
            x = conv2d_relu(x, w, b, padding=1, relu=True, fuse_pool=fuse)
            i += 2 if fuse else 1
        else:
            x = maxpool_2x2(x, ceil_mode=layer[1])
            i += 1
    sources = [l2norm(x, params['l2norm_gamma'])]
    # TODO(synk): each extras 1x1+3x3 pair could be fused into one pallas_call to cut
    # launch overhead on these tiny tensors (review item); kept as separate calls.
    for k, (w, b) in enumerate(params['extras']):
        x = conv2d_relu(x, w, b, padding=0, relu=True)
        if k % 2 == 1:
            sources.append(x.astype(jnp.float32))
    return [jnp.transpose(s, (0, 3, 1, 2)) for s in sources]


# --------------------------------------------------------------------- references ----
def _conv_ref(x, w, b, padding, relu=True):
    out = jax.lax.conv_general_dilated(
        x.astype(jnp.float32), w.astype(jnp.float32), (1, 1),
        [(padding, padding), (padding, padding)],
        dimension_numbers=('NHWC', 'HWIO', 'NHWC'))
    out = out + b.reshape(1, 1, 1, -1).astype(jnp.float32)
    return jnp.maximum(out, 0.0) if relu else out


def _pool_ref(y):
    n, h, w, c = y.shape
    return jnp.max(y.reshape(n, h // 2, 2, w // 2, 2, c), axis=(2, 4))


def _assert_close(name, out, ref, tol=5e-3):
    out = jnp.asarray(out, jnp.float32)
    ref = jnp.asarray(ref, jnp.float32)
    err = float(jnp.max(jnp.abs(out - ref)))
    scale = float(jnp.max(jnp.abs(ref))) + 1e-6
    assert err / scale < tol, f"{name}: relative error {err / scale:.3e}"


if __name__ == "__main__":
    key = jax.random.PRNGKey(0)
    k1, k2, k3, k4, k5, k6, kx = jax.random.split(key, 7)

    # --- unit checks against pure-JAX references (these exercise the halo path, the
    #     short cdiv last tile, the fused-pool epilogue, and the p=0 / 1x1 paths) ----
    xa = jax.random.normal(k1, (1, 13, 12, 16), jnp.float32).astype(jnp.bfloat16)
    wa = (0.2 * jax.random.normal(k2, (3, 3, 16, 32), jnp.float32)).astype(jnp.bfloat16)
    ba = 0.1 * jax.random.normal(k3, (32,), jnp.float32)
    out = conv2d_relu(xa, wa, ba, padding=1, relu=True, max_tile_rows=5,
                      out_dtype=jnp.float32)
    _assert_close("conv3x3 pad1 (halo + short last tile)", out,
                  _conv_ref(xa, wa, ba, 1))

    xb = jax.random.normal(k4, (2, 14, 16, 24), jnp.float32).astype(jnp.bfloat16)
    wb_ = (0.2 * jax.random.normal(k5, (3, 3, 24, 32), jnp.float32)).astype(jnp.bfloat16)
    bb = 0.1 * jax.random.normal(k6, (32,), jnp.float32)
    out = conv2d_relu(xb, wb_, bb, padding=1, relu=True, fuse_pool=True,
                      max_tile_rows=4, out_dtype=jnp.float32)
    _assert_close("conv3x3 + fused 2x2 pool", out,
                  _pool_ref(_conv_ref(xb, wb_, bb, 1)))

    xc = xa[:, :9, :10, :8]
    wc = wa[:, :, :8, :16]
    out = conv2d_relu(xc, wc, ba[:16], padding=0, relu=True, out_dtype=jnp.float32)
    _assert_close("conv3x3 unpadded", out, _conv_ref(xc, wc, ba[:16], 0))

    wd = wa[:1, :1, :16, :32]
    out = conv2d_relu(xa, wd, ba, padding=0, relu=True, out_dtype=jnp.float32)
    _assert_close("conv1x1", out, _conv_ref(xa, wd, ba, 0))

    xp = jax.random.normal(k2, (1, 7, 9, 16), jnp.float32).astype(jnp.bfloat16)
    refp = _pool_ref(jnp.pad(xp.astype(jnp.float32),
                             ((0, 0), (0, 1), (0, 1), (0, 0)),
                             constant_values=-jnp.inf))
    _assert_close("maxpool 2x2 ceil", maxpool_2x2(xp, ceil_mode=True), refp)

    xn = jax.random.normal(k3, (1, 5, 6, 32), jnp.float32).astype(jnp.bfloat16)
    gn = jnp.full((32,), 20.0, jnp.float32)
    vn = xn.astype(jnp.float32)
    refn = vn / (jnp.sqrt(jnp.sum(vn * vn, -1, keepdims=True)) + 1e-10) * gn
    _assert_close("l2norm", l2norm(xn, gn), refn)

    # --- full SSDBackbone forward -----------------------------------------------
    # Small SSD-style input: NCHW, 3 channels, 64x64 spatial (vgg[:23] downsamples /8,
    # leaving enough spatial extent for the unpadded 3x3 extras convolutions).
    params = init_params(k1)
    x = jax.random.normal(kx, (2, 3, 64, 64), jnp.float32)
    sources = jax.block_until_ready(ssd_backbone_forward(params, x))
    shapes = [tuple(s.shape) for s in sources]
    assert shapes == [(2, 512, 8, 8), (2, 6, 6, 6), (2, 6, 4, 4), (2, 4, 2, 2)], shapes
    assert all(bool(jnp.all(jnp.isfinite(s))) for s in sources)
    print("KERNEL_OK")
</pallas_src>

<mosaic_0001>
module attributes {stable_mosaic.version = 11 : i64} {
  func.func @kernel(%arg0: i32, %arg1: i32, %arg2: memref<1x5x12x16xbf16, #tpu.memory_space<vmem>>, %arg3: memref<1x1x12x16xbf16, #tpu.memory_space<vmem>>, %arg4: memref<1x1x12x16xbf16, #tpu.memory_space<vmem>>, %arg5: memref<3x3x16x32xbf16, #tpu.memory_space<vmem>>, %arg6: memref<1x32xf32, #tpu.memory_space<vmem>>, %arg7: memref<1x5x12x32xf32, #tpu.memory_space<vmem>>, %arg8: memref<100x16xbf16, #tpu.memory_space<vmem>>, %arg9: memref<70x32xf32, #tpu.memory_space<vmem>>) attributes {dimension_semantics = [#tpu.dimension_semantics<parallel>, #tpu.dimension_semantics<parallel>], iteration_bounds = array<i64: 1, 3>, scalar_prefetch = 0 : i64, scratch_operands = 2 : i64, tpu.core_type = #tpu.core_type<tc>, window_params = [{transform_indices = @transform_0, window_bounds = array<i64: 1, 5, 12, 16>}, {transform_indices = @transform_1, window_bounds = array<i64: 1, 1, 12, 16>}, {transform_indices = @transform_2, window_bounds = array<i64: 1, 1, 12, 16>}, {pipeline_mode = #tpu.pipeline_mode<synchronous>, transform_indices = @transform_3, window_bounds = array<i64: 3, 3, 16, 32>}, {pipeline_mode = #tpu.pipeline_mode<synchronous>, transform_indices = @transform_4, window_bounds = array<i64: 1, 32>}, {transform_indices = @transform_5, window_bounds = array<i64: 1, 5, 12, 32>}]} {
    %c0 = arith.constant 0 : index
    %c0_0 = arith.constant 0 : index
    %c0_1 = arith.constant 0 : index
    %c0_2 = arith.constant 0 : index
    %0 = vector.load %arg2[%c0, %c0_0, %c0_1, %c0_2] : memref<1x5x12x16xbf16, #tpu.memory_space<vmem>>, vector<1x1x12x16xbf16>
    %1 = vector.shape_cast %0 : vector<1x1x12x16xbf16> to vector<12x16xbf16>
    %c15 = arith.constant 15 : index
    %c0_3 = arith.constant 0 : index
    %2 = vector.load %arg8[%c15, %c0_3] : memref<100x16xbf16, #tpu.memory_space<vmem>>, vector<12x16xbf16>
    tpu.vector_store %arg8[%c15, %c0_3], %1 {strides = array<i32>} : memref<100x16xbf16, #tpu.memory_space<vmem>>, vector<12x16xbf16>,
    %c0_4 = arith.constant 0 : index
    %c1 = arith.constant 1 : index
    %c0_5 = arith.constant 0 : index
    %c0_6 = arith.constant 0 : index
    %3 = vector.load %arg2[%c0_4, %c1, %c0_5, %c0_6] : memref<1x5x12x16xbf16, #tpu.memory_space<vmem>>, vector<1x1x12x16xbf16>
    %4 = vector.shape_cast %3 : vector<1x1x12x16xbf16> to vector<12x16xbf16>
    %c29 = arith.constant 29 : index
    %c0_7 = arith.constant 0 : index
    %5 = vector.load %arg8[%c29, %c0_7] : memref<100x16xbf16, #tpu.memory_space<vmem>>, vector<12x16xbf16>
    tpu.vector_store %arg8[%c29, %c0_7], %4 {strides = array<i32>} : memref<100x16xbf16, #tpu.memory_space<vmem>>, vector<12x16xbf16>,
    %c0_8 = arith.constant 0 : index
    %c2 = arith.constant 2 : index
    %c0_9 = arith.constant 0 : index
    %c0_10 = arith.constant 0 : index
    %6 = vector.load %arg2[%c0_8, %c2, %c0_9, %c0_10] : memref<1x5x12x16xbf16, #tpu.memory_space<vmem>>, vector<1x1x12x16xbf16>
    %7 = vector.shape_cast %6 : vector<1x1x12x16xbf16> to vector<12x16xbf16>
    %c43 = arith.constant 43 : index
    %c0_11 = arith.constant 0 : index
    %8 = vector.load %arg8[%c43, %c0_11] : memref<100x16xbf16, #tpu.memory_space<vmem>>, vector<12x16xbf16>
    tpu.vector_store %arg8[%c43, %c0_11], %7 {strides = array<i32>} : memref<100x16xbf16, #tpu.memory_space<vmem>>, vector<12x16xbf16>,
    %c0_12 = arith.constant 0 : index
    %c3 = arith.constant 3 : index
    %c0_13 = arith.constant 0 : index
    %c0_14 = arith.constant 0 : index
    %9 = vector.load %arg2[%c0_12, %c3, %c0_13, %c0_14] : memref<1x5x12x16xbf16, #tpu.memory_space<vmem>>, vector<1x1x12x16xbf16>
    %10 = vector.shape_cast %9 : vector<1x1x12x16xbf16> to vector<12x16xbf16>
    %c57 = arith.constant 57 : index
    %c0_15 = arith.constant 0 : index
    %11 = vector.load %arg8[%c57, %c0_15] : memref<100x16xbf16, #tpu.memory_space<vmem>>, vector<12x16xbf16>
    tpu.vector_store %arg8[%c57, %c0_15], %10 {strides = array<i32>} : memref<100x16xbf16, #tpu.memory_space<vmem>>, vector<12x16xbf16>,
    %c0_16 = arith.constant 0 : index
    %c4 = arith.constant 4 : index
    %c0_17 = arith.constant 0 : index
    %c0_18 = arith.constant 0 : index
    %12 = vector.load %arg2[%c0_16, %c4, %c0_17, %c0_18] : memref<1x5x12x16xbf16, #tpu.memory_space<vmem>>, vector<1x1x12x16xbf16>
    %13 = vector.shape_cast %12 : vector<1x1x12x16xbf16> to vector<12x16xbf16>
    %c71 = arith.constant 71 : index
    %c0_19 = arith.constant 0 : index
    %14 = vector.load %arg8[%c71, %c0_19] : memref<100x16xbf16, #tpu.memory_space<vmem>>, vector<12x16xbf16>
    tpu.vector_store %arg8[%c71, %c0_19], %13 {strides = array<i32>} : memref<100x16xbf16, #tpu.memory_space<vmem>>, vector<12x16xbf16>,
    %cst = arith.constant 0.000000e+00 : bf16
    %15 = vector.broadcast %cst : bf16 to vector<1x16xbf16>
    %c0_20 = arith.constant 0 : index
    %c0_21 = arith.constant 0 : index
    %16 = vector.load %arg8[%c0_20, %c0_21] : memref<100x16xbf16, #tpu.memory_space<vmem>>, vector<1x16xbf16>
    tpu.vector_store %arg8[%c0_20, %c0_21], %15 {strides = array<i32>} : memref<100x16xbf16, #tpu.memory_space<vmem>>, vector<1x16xbf16>,
    %cst_22 = arith.constant 0.000000e+00 : bf16
    %17 = vector.broadcast %cst_22 : bf16 to vector<2x16xbf16>
    %c13 = arith.constant 13 : index
    %c0_23 = arith.constant 0 : index
    %18 = vector.load %arg8[%c13, %c0_23] : memref<100x16xbf16, #tpu.memory_space<vmem>>, vector<2x16xbf16>
    tpu.vector_store %arg8[%c13, %c0_23], %17 {strides = array<i32>} : memref<100x16xbf16, #tpu.memory_space<vmem>>, vector<2x16xbf16>,
    %c27 = arith.constant 27 : index
    %c0_24 = arith.constant 0 : index
    %19 = vector.load %arg8[%c27, %c0_24] : memref<100x16xbf16, #tpu.memory_space<vmem>>, vector<2x16xbf16>
    tpu.vector_store %arg8[%c27, %c0_24], %17 {strides = array<i32>} : memref<100x16xbf16, #tpu.memory_space<vmem>>, vector<2x16xbf16>,
    %c41 = arith.constant 41 : index
    %c0_25 = arith.constant 0 : index
    %20 = vector.load %arg8[%c41, %c0_25] : memref<100x16xbf16, #tpu.memory_space<vmem>>, vector<2x16xbf16>
    tpu.vector_store %arg8[%c41, %c0_25], %17 {strides = array<i32>} : memref<100x16xbf16, #tpu.memory_space<vmem>>, vector<2x16xbf16>,
    %c55 = arith.constant 55 : index
    %c0_26 = arith.constant 0 : index
    %21 = vector.load %arg8[%c55, %c0_26] : memref<100x16xbf16, #tpu.memory_space<vmem>>, vector<2x16xbf16>
    tpu.vector_store %arg8[%c55, %c0_26], %17 {strides = array<i32>} : memref<100x16xbf16, #tpu.memory_space<vmem>>, vector<2x16xbf16>,
    %c69 = arith.constant 69 : index
    %c0_27 = arith.constant 0 : index
    %22 = vector.load %arg8[%c69, %c0_27] : memref<100x16xbf16, #tpu.memory_space<vmem>>, vector<2x16xbf16>
    tpu.vector_store %arg8[%c69, %c0_27], %17 {strides = array<i32>} : memref<100x16xbf16, #tpu.memory_space<vmem>>, vector<2x16xbf16>,
    %c83 = arith.constant 83 : index
    %c0_28 = arith.constant 0 : index
    %23 = vector.load %arg8[%c83, %c0_28] : memref<100x16xbf16, #tpu.memory_space<vmem>>, vector<2x16xbf16>
    tpu.vector_store %arg8[%c83, %c0_28], %17 {strides = array<i32>} : memref<100x16xbf16, #tpu.memory_space<vmem>>, vector<2x16xbf16>,
    %cst_29 = arith.constant 0.000000e+00 : bf16
    %24 = vector.broadcast %cst_29 : bf16 to vector<3x16xbf16>
    %c97 = arith.constant 97 : index
    %c0_30 = arith.constant 0 : index
    %25 = vector.load %arg8[%c97, %c0_30] : memref<100x16xbf16, #tpu.memory_space<vmem>>, vector<3x16xbf16>
    tpu.vector_store %arg8[%c97, %c0_30], %24 {strides = array<i32>} : memref<100x16xbf16, #tpu.memory_space<vmem>>, vector<3x16xbf16>,
    %cst_31 = arith.constant 0.000000e+00 : bf16
    %26 = vector.broadcast %cst_31 : bf16 to vector<14x16xbf16>
    %c0_i32 = arith.constant 0 : i32
    %27 = arith.cmpi eq, %arg1, %c0_i32 : i32
    %28 = arith.extui %27 : i1 to i32
    %c0_i32_32 = arith.constant 0 : i32
    %29 = arith.cmpi ne, %28, %c0_i32_32 : i32
    scf.if %29 {
      %c0_140 = arith.constant 0 : index
      %c0_141 = arith.constant 0 : index
      %111 = vector.load %arg8[%c0_140, %c0_141] : memref<100x16xbf16, #tpu.memory_space<vmem>>, vector<14x16xbf16>
      tpu.vector_store %arg8[%c0_140, %c0_141], %26 {strides = array<i32>} : memref<100x16xbf16, #tpu.memory_space<vmem>>, vector<14x16xbf16>,
    } else {
    }
    %c0_i32_33 = arith.constant 0 : i32
    %30 = arith.cmpi sgt, %arg1, %c0_i32_33 : i32
    %31 = arith.extui %30 : i1 to i32
    %c0_i32_34 = arith.constant 0 : i32
    %32 = arith.cmpi ne, %31, %c0_i32_34 : i32
    scf.if %32 {
      %c0_140 = arith.constant 0 : index
      %c0_141 = arith.constant 0 : index
      %c0_142 = arith.constant 0 : index
      %c0_143 = arith.constant 0 : index
      %111 = vector.load %arg3[%c0_140, %c0_141, %c0_142, %c0_143] : memref<1x1x12x16xbf16, #tpu.memory_space<vmem>>, vector<1x1x12x16xbf16>
      %112 = vector.shape_cast %111 : vector<1x1x12x16xbf16> to vector<12x16xbf16>
      %c1_144 = arith.constant 1 : index
      %c0_145 = arith.constant 0 : index
      %113 = vector.load %arg8[%c1_144, %c0_145] : memref<100x16xbf16, #tpu.memory_space<vmem>>, vector<12x16xbf16>
      tpu.vector_store %arg8[%c1_144, %c0_145], %112 {strides = array<i32>} : memref<100x16xbf16, #tpu.memory_space<vmem>>, vector<12x16xbf16>,
    } else {
    }
    %c2_i32 = arith.constant 2 : i32
    %33 = arith.cmpi eq, %arg1, %c2_i32 : i32
    %34 = arith.extui %33 : i1 to i32
    %c0_i32_35 = arith.constant 0 : i32
    %35 = arith.cmpi ne, %34, %c0_i32_35 : i32
    scf.if %35 {
      %c56 = arith.constant 56 : index
      %c0_140 = arith.constant 0 : index
      %111 = vector.load %arg8[%c56, %c0_140] : memref<100x16xbf16, #tpu.memory_space<vmem>>, vector<14x16xbf16>
      tpu.vector_store %arg8[%c56, %c0_140], %26 {strides = array<i32>} : memref<100x16xbf16, #tpu.memory_space<vmem>>, vector<14x16xbf16>,
    } else {
    }
    %c2_i32_36 = arith.constant 2 : i32
    %36 = arith.cmpi slt, %arg1, %c2_i32_36 : i32
    %37 = arith.extui %36 : i1 to i32
    %c0_i32_37 = arith.constant 0 : i32
    %38 = arith.cmpi ne, %37, %c0_i32_37 : i32
    scf.if %38 {
      %c0_140 = arith.constant 0 : index
      %c0_141 = arith.constant 0 : index
      %c0_142 = arith.constant 0 : index
      %c0_143 = arith.constant 0 : index
      %111 = vector.load %arg4[%c0_140, %c0_141, %c0_142, %c0_143] : memref<1x1x12x16xbf16, #tpu.memory_space<vmem>>, vector<1x1x12x16xbf16>
      %112 = vector.shape_cast %111 : vector<1x1x12x16xbf16> to vector<12x16xbf16>
      %c85 = arith.constant 85 : index
      %c0_144 = arith.constant 0 : index
      %113 = vector.load %arg8[%c85, %c0_144] : memref<100x16xbf16, #tpu.memory_space<vmem>>, vector<12x16xbf16>
      tpu.vector_store %arg8[%c85, %c0_144], %112 {strides = array<i32>} : memref<100x16xbf16, #tpu.memory_space<vmem>>, vector<12x16xbf16>,
    } else {
    }
    %c0_38 = arith.constant 0 : index
    %c0_39 = arith.constant 0 : index
    %39 = vector.load %arg8[%c0_38, %c0_39] : memref<100x16xbf16, #tpu.memory_space<vmem>>, vector<70x16xbf16>
    %c0_40 = arith.constant 0 : index
    %c0_41 = arith.constant 0 : index
    %c0_42 = arith.constant 0 : index
    %c0_43 = arith.constant 0 : index
    %40 = vector.load %arg5[%c0_40, %c0_41, %c0_42, %c0_43] : memref<3x3x16x32xbf16, #tpu.memory_space<vmem>>, vector<1x1x16x32xbf16>
    %41 = vector.shape_cast %40 : vector<1x1x16x32xbf16> to vector<16x32xbf16>
    %cst_44 = arith.constant dense<0.000000e+00> : vector<70x32xf32>
    %42 = tpu.matmul %39, %41, %cst_44 {dimension_numbers = #tpu.dot_dimension_numbers<[1], [0], [0], [1], [0, 0, 1, 1], [], []>} : vector<70x16xbf16>, vector<16x32xbf16>, vector<70x32xf32> -> vector<70x32xf32>
    %c0_45 = arith.constant 0 : index
    %c0_46 = arith.constant 0 : index
    %43 = vector.load %arg6[%c0_45, %c0_46] : memref<1x32xf32, #tpu.memory_space<vmem>>, vector<1x32xf32>
    %44 = vector.broadcast %43 : vector<1x32xf32> to vector<70x32xf32>
    %45 = arith.addf %42, %44 : vector<70x32xf32>
    %c0_47 = arith.constant 0 : index
    %c0_48 = arith.constant 0 : index
    %46 = vector.load %arg9[%c0_47, %c0_48] : memref<70x32xf32, #tpu.memory_space<vmem>>, vector<70x32xf32>
    tpu.vector_store %arg9[%c0_47, %c0_48], %45 {strides = array<i32>} : memref<70x32xf32, #tpu.memory_space<vmem>>, vector<70x32xf32>,
    %c0_49 = arith.constant 0 : index
    %c0_50 = arith.constant 0 : index
    %47 = vector.load %arg9[%c0_49, %c0_50] : memref<70x32xf32, #tpu.memory_space<vmem>>, vector<70x32xf32>
    %c1_51 = arith.constant 1 : index
    %c0_52 = arith.constant 0 : index
    %48 = vector.load %arg8[%c1_51, %c0_52] : memref<100x16xbf16, #tpu.memory_space<vmem>>, vector<70x16xbf16>
    %c0_53 = arith.constant 0 : index
    %c1_54 = arith.constant 1 : index
    %c0_55 = arith.constant 0 : index
    %c0_56 = arith.constant 0 : index
    %49 = vector.load %arg5[%c0_53, %c1_54, %c0_55, %c0_56] : memref<3x3x16x32xbf16, #tpu.memory_space<vmem>>, vector<1x1x16x32xbf16>
    %50 = vector.shape_cast %49 : vector<1x1x16x32xbf16> to vector<16x32xbf16>
    %cst_57 = arith.constant dense<0.000000e+00> : vector<70x32xf32>
    %51 = tpu.matmul %48, %50, %cst_57 {dimension_numbers = #tpu.dot_dimension_numbers<[1], [0], [0], [1], [0, 0, 1, 1], [], []>} : vector<70x16xbf16>, vector<16x32xbf16>, vector<70x32xf32> -> vector<70x32xf32>
    %52 = arith.addf %47, %51 : vector<70x32xf32>
    %c0_58 = arith.constant 0 : index
    %c0_59 = arith.constant 0 : index
    %53 = vector.load %arg9[%c0_58, %c0_59] : memref<70x32xf32, #tpu.memory_space<vmem>>, vector<70x32xf32>
    tpu.vector_store %arg9[%c0_58, %c0_59], %52 {strides = array<i32>} : memref<70x32xf32, #tpu.memory_space<vmem>>, vector<70x32xf32>,
    %c0_60 = arith.constant 0 : index
    %c0_61 = arith.constant 0 : index
    %54 = vector.load %arg9[%c0_60, %c0_61] : memref<70x32xf32, #tpu.memory_space<vmem>>, vector<70x32xf32>
    %c2_62 = arith.constant 2 : index
    %c0_63 = arith.constant 0 : index
    %55 = vector.load %arg8[%c2_62, %c0_63] : memref<100x16xbf16, #tpu.memory_space<vmem>>, vector<70x16xbf16>
    %c0_64 = arith.constant 0 : index
    %c2_65 = arith.constant 2 : index
    %c0_66 = arith.constant 0 : index
    %c0_67 = arith.constant 0 : index
    %56 = vector.load %arg5[%c0_64, %c2_65, %c0_66, %c0_67] : memref<3x3x16x32xbf16, #tpu.memory_space<vmem>>, vector<1x1x16x32xbf16>
    %57 = vector.shape_cast %56 : vector<1x1x16x32xbf16> to vector<16x32xbf16>
    %cst_68 = arith.constant dense<0.000000e+00> : vector<70x32xf32>
    %58 = tpu.matmul %55, %57, %cst_68 {dimension_numbers = #tpu.dot_dimension_numbers<[1], [0], [0], [1], [0, 0, 1, 1], [], []>} : vector<70x16xbf16>, vector<16x32xbf16>, vector<70x32xf32> -> vector<70x32xf32>
    %59 = arith.addf %54, %58 : vector<70x32xf32>
    %c0_69 = arith.constant 0 : index
    %c0_70 = arith.constant 0 : index
    %60 = vector.load %arg9[%c0_69, %c0_70] : memref<70x32xf32, #tpu.memory_space<vmem>>, vector<70x32xf32>
    tpu.vector_store %arg9[%c0_69, %c0_70], %59 {strides = array<i32>} : memref<70x32xf32, #tpu.memory_space<vmem>>, vector<70x32xf32>,
    %c0_71 = arith.constant 0 : index
    %c0_72 = arith.constant 0 : index
    %61 = vector.load %arg9[%c0_71, %c0_72] : memref<70x32xf32, #tpu.memory_space<vmem>>, vector<70x32xf32>
    %c14 = arith.constant 14 : index
    %c0_73 = arith.constant 0 : index
    %62 = vector.load %arg8[%c14, %c0_73] : memref<100x16xbf16, #tpu.memory_space<vmem>>, vector<70x16xbf16>
    %c1_74 = arith.constant 1 : index
    %c0_75 = arith.constant 0 : index
    %c0_76 = arith.constant 0 : index
    %c0_77 = arith.constant 0 : index
    %63 = vector.load %arg5[%c1_74, %c0_75, %c0_76, %c0_77] : memref<3x3x16x32xbf16, #tpu.memory_space<vmem>>, vector<1x1x16x32xbf16>
    %64 = vector.shape_cast %63 : vector<1x1x16x32xbf16> to vector<16x32xbf16>
    %cst_78 = arith.constant dense<0.000000e+00> : vector<70x32xf32>
    %65 = tpu.matmul %62, %64, %cst_78 {dimension_numbers = #tpu.dot_dimension_numbers<[1], [0], [0], [1], [0, 0, 1, 1], [], []>} : vector<70x16xbf16>, vector<16x32xbf16>, vector<70x32xf32> -> vector<70x32xf32>
    %66 = arith.addf %61, %65 : vector<70x32xf32>
    %c0_79 = arith.constant 0 : index
    %c0_80 = arith.constant 0 : index
    %67 = vector.load %arg9[%c0_79, %c0_80] : memref<70x32xf32, #tpu.memory_space<vmem>>, vector<70x32xf32>
    tpu.vector_store %arg9[%c0_79, %c0_80], %66 {strides = array<i32>} : memref<70x32xf32, #tpu.memory_space<vmem>>, vector<70x32xf32>,
    %c0_81 = arith.constant 0 : index
    %c0_82 = arith.constant 0 : index
    %68 = vector.load %arg9[%c0_81, %c0_82] : memref<70x32xf32, #tpu.memory_space<vmem>>, vector<70x32xf32>
    %c15_83 = arith.constant 15 : index
    %c0_84 = arith.constant 0 : index
    %69 = vector.load %arg8[%c15_83, %c0_84] : memref<100x16xbf16, #tpu.memory_space<vmem>>, vector<70x16xbf16>
    %c1_85 = arith.constant 1 : index
    %c1_86 = arith.constant 1 : index
    %c0_87 = arith.constant 0 : index
    %c0_88 = arith.constant 0 : index
    %70 = vector.load %arg5[%c1_85, %c1_86, %c0_87, %c0_88] : memref<3x3x16x32xbf16, #tpu.memory_space<vmem>>, vector<1x1x16x32xbf16>
    %71 = vector.shape_cast %70 : vector<1x1x16x32xbf16> to vector<16x32xbf16>
    %cst_89 = arith.constant dense<0.000000e+00> : vector<70x32xf32>
    %72 = tpu.matmul %69, %71, %cst_89 {dimension_numbers = #tpu.dot_dimension_numbers<[1], [0], [0], [1], [0, 0, 1, 1], [], []>} : vector<70x16xbf16>, vector<16x32xbf16>, vector<70x32xf32> -> vector<70x32xf32>
    %73 = arith.addf %68, %72 : vector<70x32xf32>
    %c0_90 = arith.constant 0 : index
    %c0_91 = arith.constant 0 : index
    %74 = vector.load %arg9[%c0_90, %c0_91] : memref<70x32xf32, #tpu.memory_space<vmem>>, vector<70x32xf32>
    tpu.vector_store %arg9[%c0_90, %c0_91], %73 {strides = array<i32>} : memref<70x32xf32, #tpu.memory_space<vmem>>, vector<70x32xf32>,
    %c0_92 = arith.constant 0 : index
    %c0_93 = arith.constant 0 : index
    %75 = vector.load %arg9[%c0_92, %c0_93] : memref<70x32xf32, #tpu.memory_space<vmem>>, vector<70x32xf32>
    %c16 = arith.constant 16 : index
    %c0_94 = arith.constant 0 : index
    %76 = vector.load %arg8[%c16, %c0_94] : memref<100x16xbf16, #tpu.memory_space<vmem>>, vector<70x16xbf16>
    %c1_95 = arith.constant 1 : index
    %c2_96 = arith.constant 2 : index
    %c0_97 = arith.constant 0 : index
    %c0_98 = arith.constant 0 : index
    %77 = vector.load %arg5[%c1_95, %c2_96, %c0_97, %c0_98] : memref<3x3x16x32xbf16, #tpu.memory_space<vmem>>, vector<1x1x16x32xbf16>
    %78 = vector.shape_cast %77 : vector<1x1x16x32xbf16> to vector<16x32xbf16>
    %cst_99 = arith.constant dense<0.000000e+00> : vector<70x32xf32>
    %79 = tpu.matmul %76, %78, %cst_99 {dimension_numbers = #tpu.dot_dimension_numbers<[1], [0], [0], [1], [0, 0, 1, 1], [], []>} : vector<70x16xbf16>, vector<16x32xbf16>, vector<70x32xf32> -> vector<70x32xf32>
    %80 = arith.addf %75, %79 : vector<70x32xf32>
    %c0_100 = arith.constant 0 : index
    %c0_101 = arith.constant 0 : index
    %81 = vector.load %arg9[%c0_100, %c0_101] : memref<70x32xf32, #tpu.memory_space<vmem>>, vector<70x32xf32>
    tpu.vector_store %arg9[%c0_100, %c0_101], %80 {strides = array<i32>} : memref<70x32xf32, #tpu.memory_space<vmem>>, vector<70x32xf32>,
    %c0_102 = arith.constant 0 : index
    %c0_103 = arith.constant 0 : index
    %82 = vector.load %arg9[%c0_102, %c0_103] : memref<70x32xf32, #tpu.memory_space<vmem>>, vector<70x32xf32>
    %c28 = arith.constant 28 : index
    %c0_104 = arith.constant 0 : index
    %83 = vector.load %arg8[%c28, %c0_104] : memref<100x16xbf16, #tpu.memory_space<vmem>>, vector<70x16xbf16>
    %c2_105 = arith.constant 2 : index
    %c0_106 = arith.constant 0 : index
    %c0_107 = arith.constant 0 : index
    %c0_108 = arith.constant 0 : index
    %84 = vector.load %arg5[%c2_105, %c0_106, %c0_107, %c0_108] : memref<3x3x16x32xbf16, #tpu.memory_space<vmem>>, vector<1x1x16x32xbf16>
    %85 = vector.shape_cast %84 : vector<1x1x16x32xbf16> to vector<16x32xbf16>
    %cst_109 = arith.constant dense<0.000000e+00> : vector<70x32xf32>
    %86 = tpu.matmul %83, %85, %cst_109 {dimension_numbers = #tpu.dot_dimension_numbers<[1], [0], [0], [1], [0, 0, 1, 1], [], []>} : vector<70x16xbf16>, vector<16x32xbf16>, vector<70x32xf32> -> vector<70x32xf32>
    %87 = arith.addf %82, %86 : vector<70x32xf32>
    %c0_110 = arith.constant 0 : index
    %c0_111 = arith.constant 0 : index
    %88 = vector.load %arg9[%c0_110, %c0_111] : memref<70x32xf32, #tpu.memory_space<vmem>>, vector<70x32xf32>
    tpu.vector_store %arg9[%c0_110, %c0_111], %87 {strides = array<i32>} : memref<70x32xf32, #tpu.memory_space<vmem>>, vector<70x32xf32>,
    %c0_112 = arith.constant 0 : index
    %c0_113 = arith.constant 0 : index
    %89 = vector.load %arg9[%c0_112, %c0_113] : memref<70x32xf32, #tpu.memory_space<vmem>>, vector<70x32xf32>
    %c29_114 = arith.constant 29 : index
    %c0_115 = arith.constant 0 : index
    %90 = vector.load %arg8[%c29_114, %c0_115] : memref<100x16xbf16, #tpu.memory_space<vmem>>, vector<70x16xbf16>
    %c2_116 = arith.constant 2 : index
    %c1_117 = arith.constant 1 : index
    %c0_118 = arith.constant 0 : index
    %c0_119 = arith.constant 0 : index
    %91 = vector.load %arg5[%c2_116, %c1_117, %c0_118, %c0_119] : memref<3x3x16x32xbf16, #tpu.memory_space<vmem>>, vector<1x1x16x32xbf16>
    %92 = vector.shape_cast %91 : vector<1x1x16x32xbf16> to vector<16x32xbf16>
    %cst_120 = arith.constant dense<0.000000e+00> : vector<70x32xf32>
    %93 = tpu.matmul %90, %92, %cst_120 {dimension_numbers = #tpu.dot_dimension_numbers<[1], [0], [0], [1], [0, 0, 1, 1], [], []>} : vector<70x16xbf16>, vector<16x32xbf16>, vector<70x32xf32> -> vector<70x32xf32>
    %94 = arith.addf %89, %93 : vector<70x32xf32>
    %c0_121 = arith.constant 0 : index
    %c0_122 = arith.constant 0 : index
    %95 = vector.load %arg9[%c0_121, %c0_122] : memref<70x32xf32, #tpu.memory_space<vmem>>, vector<70x32xf32>
    tpu.vector_store %arg9[%c0_121, %c0_122], %94 {strides = array<i32>} : memref<70x32xf32, #tpu.memory_space<vmem>>, vector<70x32xf32>,
    %c0_123 = arith.constant 0 : index
    %c0_124 = arith.constant 0 : index
    %96 = vector.load %arg9[%c0_123, %c0_124] : memref<70x32xf32, #tpu.memory_space<vmem>>, vector<70x32xf32>
    %c30 = arith.constant 30 : index
    %c0_125 = arith.constant 0 : index
    %97 = vector.load %arg8[%c30, %c0_125] : memref<100x16xbf16, #tpu.memory_space<vmem>>, vector<70x16xbf16>
    %c2_126 = arith.constant 2 : index
    %c2_127 = arith.constant 2 : index
    %c0_128 = arith.constant 0 : index
    %c0_129 = arith.constant 0 : index
    %98 = vector.load %arg5[%c2_126, %c2_127, %c0_128, %c0_129] : memref<3x3x16x32xbf16, #tpu.memory_space<vmem>>, vector<1x1x16x32xbf16>
    %99 = vector.shape_cast %98 : vector<1x1x16x32xbf16> to vector<16x32xbf16>
    %cst_130 = arith.constant dense<0.000000e+00> : vector<70x32xf32>
    %100 = tpu.matmul %97, %99, %cst_130 {dimension_numbers = #tpu.dot_dimension_numbers<[1], [0], [0], [1], [0, 0, 1, 1], [], []>} : vector<70x16xbf16>, vector<16x32xbf16>, vector<70x32xf32> -> vector<70x32xf32>
    %101 = arith.addf %96, %100 : vector<70x32xf32>
    %c0_131 = arith.constant 0 : index
    %c0_132 = arith.constant 0 : index
    %102 = vector.load %arg9[%c0_131, %c0_132] : memref<70x32xf32, #tpu.memory_space<vmem>>, vector<70x32xf32>
    tpu.vector_store %arg9[%c0_131, %c0_132], %101 {strides = array<i32>} : memref<70x32xf32, #tpu.memory_space<vmem>>, vector<70x32xf32>,
    %c0_133 = arith.constant 0 : index
    %c0_134 = arith.constant 0 : index
    %103 = vector.load %arg9[%c0_133, %c0_134] : memref<70x32xf32, #tpu.memory_space<vmem>>, vector<70x32xf32>
    %cst_135 = arith.constant 0.000000e+00 : f32
    %104 = vector.broadcast %cst_135 : f32 to vector<70x32xf32>
    %105 = arith.maximumf %103, %104 : vector<70x32xf32>
    %106 = vector.shape_cast %105 : vector<70x32xf32> to vector<5x14x32xf32>
    %107 = vector.extract_strided_slice %106 {offsets = [0, 0, 0], sizes = [5, 12, 32], strides = [1, 1, 1]} : vector<5x14x32xf32> to vector<5x12x32xf32>
    %c0_136 = arith.constant 0 : index
    %c0_137 = arith.constant 0 : index
    %c0_138 = arith.constant 0 : index
    %c0_139 = arith.constant 0 : index
    %108 = vector.load %arg7[%c0_136, %c0_137, %c0_138, %c0_139] : memref<1x5x12x32xf32, #tpu.memory_space<vmem>>, vector<1x5x12x32xf32>
    %109 = vector.shape_cast %108 : vector<1x5x12x32xf32> to vector<5x12x32xf32>
    %110 = vector.shape_cast %107 : vector<5x12x32xf32> to vector<1x5x12x32xf32>
    tpu.vector_store %arg7[%c0_136, %c0_137, %c0_138, %c0_139], %110 {strides = array<i32>} : memref<1x5x12x32xf32, #tpu.memory_space<vmem>>, vector<1x5x12x32xf32>,
    return
  }
  func.func @transform_0(%arg0: i32, %arg1: i32) -> (i32, i32, i32, i32) {
    %c0_i32 = arith.constant 0 : i32
    %c0_i32_0 = arith.constant 0 : i32
    %c0_i32_1 = arith.constant 0 : i32
    return %arg0, %arg1, %c0_i32, %c0_i32_0 : i32, i32, i32, i32
  }
  func.func @transform_1(%arg0: i32, %arg1: i32) -> (i32, i32, i32, i32) {
    %c5_i32 = arith.constant 5 : i32
    %0 = arith.muli %arg1, %c5_i32 : i32
    %c1_i32 = arith.constant 1 : i32
    %1 = arith.subi %0, %c1_i32 : i32
    %c0_i32 = arith.constant 0 : i32
    %2 = arith.maxsi %1, %c0_i32 : i32
    %c0_i32_0 = arith.constant 0 : i32
    %c0_i32_1 = arith.constant 0 : i32
    %c0_i32_2 = arith.constant 0 : i32
    return %arg0, %2, %c0_i32_0, %c0_i32_1 : i32, i32, i32, i32
  }
  func.func @transform_2(%arg0: i32, %arg1: i32) -> (i32, i32, i32, i32) {
    %c5_i32 = arith.constant 5 : i32
    %0 = arith.muli %arg1, %c5_i32 : i32
    %c5_i32_0 = arith.constant 5 : i32
    %1 = arith.addi %0, %c5_i32_0 : i32
    %c12_i32 = arith.constant 12 : i32
    %2 = arith.minsi %1, %c12_i32 : i32
    %c0_i32 = arith.constant 0 : i32
    %c0_i32_1 = arith.constant 0 : i32
    %c0_i32_2 = arith.constant 0 : i32
    return %arg0, %2, %c0_i32, %c0_i32_1 : i32, i32, i32, i32
  }
  func.func @transform_3(%arg0: i32, %arg1: i32) -> (i32, i32, i32, i32) {
    %c0_i32 = arith.constant 0 : i32
    %c0_i32_0 = arith.constant 0 : i32
    %c0_i32_1 = arith.constant 0 : i32
    %c0_i32_2 = arith.constant 0 : i32
    %c0_i32_3 = arith.constant 0 : i32
    return %c0_i32, %c0_i32_0, %c0_i32_1, %c0_i32_2 : i32, i32, i32, i32
  }
  func.func @transform_4(%arg0: i32, %arg1: i32) -> (i32, i32) {
    %c0_i32 = arith.constant 0 : i32
    %c0_i32_0 = arith.constant 0 : i32
    %c0_i32_1 = arith.constant 0 : i32
    return %c0_i32, %c0_i32_0 : i32, i32
  }
  func.func @transform_5(%arg0: i32, %arg1: i32) -> (i32, i32, i32, i32) {
    %c0_i32 = arith.constant 0 : i32
    %c0_i32_0 = arith.constant 0 : i32
    %c0_i32_1 = arith.constant 0 : i32
    return %arg0, %arg1, %c0_i32, %c0_i32_0 : i32, i32, i32, i32
  }
}

</mosaic_0001>

<llo_original>
// kernel: tpu_custom_call.1
$region0: #{tpu_custom_call.1}
  #allocation0 [shape = 'u32[]', space=smem, size = 0x4, offset = 0x4, fixed_abs, tag = 'smem constant byte address 0x4 - core index']
  #allocation1 [shape = 'u32[144,128]{1,0:T(1,128)}', space=vmem, size = 0x12000, scoped, tag = 'internal scratch']
  #allocation2 [shape = 'bf16[100,16]{1,0:T(8,128)(2,1)}', space=vmem, size = 0x6800, scoped, tag = 'scratch operand']
  #allocation3 [shape = 'f32[70,32]{1,0:T(8,128)}', space=vmem, size = 0x9000, scoped, tag = 'scratch operand']
  %s0 = inlined_call_operand.vmem [shape: bf16[1,13,12,16], index: 0, kind: input, shape index: {}]
  %s1 = inlined_call_operand.vmem [shape: bf16[1,13,12,16], index: 1, kind: input, shape index: {}]
  %s2 = inlined_call_operand.vmem [shape: bf16[1,13,12,16], index: 2, kind: input, shape index: {}]
  %s3 = inlined_call_operand.vmem [shape: bf16[3,3,16,32], index: 3, kind: input, shape index: {}]
  %s4 = inlined_call_operand.vmem [shape: f32[1,32], index: 4, kind: input, shape index: {}]
  %s5 = inlined_call_operand.vmem [shape: f32[1,13,12,32], index: 5, kind: output, shape index: {}]
  %s6 = sld [smem:[#allocation0]]
  $region117: #{tpu_custom_call.1} parent=0
    _
  %s8 = ssub.s32 1, %s6
  %s9 = scalar_select 0, %s8, %s6
  $region1: #{tpu_custom_call.1} parent=0
    #allocation4 [shape = 'u8[81920]{0}', space=vmem, size = 0x14000, scoped, tag = 'output window, operand 0']
    loop: start=0, step=1, limit=5
    $region2: #{tpu_custom_call.1} parent=1 // loop_pre_header
      _
    $region3: #{tpu_custom_call.1} parent=1 // loop_header
      %s11 = sphi 0, %s15
      %p12 = scmp.ge.s32.totalorder %s11, 5
      %s18 = sphi 0, %s30
      %s19 = sphi 0, %s26
      %s20 = sphi 0, %s18
      %s21 = sphi 0, %s19
      %s22 = sphi 0, %s20
      %s23 = sphi 0, %s21
      %s35 = sphi 0, %s37
      %s38 = sphi 0, %s35
      %s39 = sphi 0, %s38
      %s55 = sphi 0, %s39
      %s71 = sphi 0, %s73
      %s74 = sphi 0, %s71
      %s75 = sphi 0, %s74
      %s91 = sphi 0, %s75
      %s107 = sphi 0, %s109
      %s110 = sphi 0, %s107
      %s111 = sphi 0, %s110
      %s127 = sphi 0, %s111
      %s131 = sphi 0, %s131
      %s133 = sphi 0, %s131
      %s134 = sphi 0, %s133
      %s148 = sphi 0, %s134
      %s152 = sphi 0, %s152
      %s154 = sphi 0, %s152
      %s155 = sphi 0, %s154
      %s169 = sphi 0, %s155
      %s177 = sphi 0, %s179
      %s180 = sphi 0, %s177
      %s181 = sphi 0, %s180
      %s197 = sphi 0, %s181
    $region4: #{tpu_custom_call.1} parent=1 // loop_header_branch
      %14 = sbr.rel (%p12) target = $region8
    $region5: #{tpu_custom_call.1} parent=1 // loop_body
      %s16 = ssub.s32 %s11, 1
      %s17 = ssub.s32 %s11, 2
      %s24 = sadd.s32 1, %s19
      %p25 = scmp.ge.s32.totalorder %s24, 3
      %s26 = scalar_select %p25, 0, %s24
      %s27 = sadd.s32 1, %s18
      %s28 = scalar_select %p25, %s27, %s18
      %p29 = scmp.ge.s32.totalorder %s28, 1
      %s30 = scalar_select %p29, 0, %s28
      %s31 = ssub.s32 %s18, %s30
      %s32 = ssub.s32 %s19, %s26
      %s33 = sor.u32 %s31, %s32
      %p34 = scmp.eq.s32.totalorder %s33, 0
      %s36 = sadd.s32 %s35, 1
      %s37 = scalar_select %p34, %s35, %s36
      %p40 = pneg %p34
      %p41 = scmp.eq.s32.totalorder %s11, 2
      %p42 = por %p40, %p41
      %p43 = scmp.ne.s32.totalorder %s35, %s38
      %p44 = scmp.eq.s32.totalorder %s11, 0
      %p45 = por %p43, %p44
      %p46 = scmp.ne.s32.totalorder %s35, %s38
      %p47 = scmp.eq.s32.totalorder %s16, 2
      %p48 = por %p46, %p47
      %p49 = scmp.ne.s32.totalorder %s38, %s39
      %p50 = scmp.eq.s32.totalorder %s16, 0
      %p51 = por %p49, %p50
      %p52 = scmp.ne.s32.totalorder %s38, %s39
      %p53 = scmp.eq.s32.totalorder %s17, 2
      %p54 = por %p52, %p53
      %p56 = scmp.ne.s32.totalorder %s39, %s55
      %p57 = scmp.eq.s32.totalorder %s17, 0
      %p58 = por %p56, %p57
      %s59 = smul.u32 %s19, 5
      %s60 = ssub.s32 %s59, 1
      %p61 = scmp.gt.s32.totalorder %s60, 0
      %s62 = scalar_select %p61, %s60, 0
      %s63 = smul.u32 %s26, 5
      %s64 = ssub.s32 %s63, 1
      %p65 = scmp.gt.s32.totalorder %s64, 0
      %s66 = scalar_select %p65, %s64, 0
      %s67 = ssub.s32 %s18, %s30
      %s68 = ssub.s32 %s62, %s66
      %s69 = sor.u32 %s67, %s68
      %p70 = scmp.eq.s32.totalorder %s69, 0
      %s72 = sadd.s32 %s71, 1
      %s73 = scalar_select %p70, %s71, %s72
      %p76 = pneg %p70
      %p77 = scmp.eq.s32.totalorder %s11, 2
      %p78 = por %p76, %p77
      %p79 = scmp.ne.s32.totalorder %s71, %s74
      %p80 = scmp.eq.s32.totalorder %s11, 0
      %p81 = por %p79, %p80
      %p82 = scmp.ne.s32.totalorder %s71, %s74
      %p83 = scmp.eq.s32.totalorder %s16, 2
      %p84 = por %p82, %p83
      %p85 = scmp.ne.s32.totalorder %s74, %s75
      %p86 = scmp.eq.s32.totalorder %s16, 0
      %p87 = por %p85, %p86
      %p88 = scmp.ne.s32.totalorder %s74, %s75
      %p89 = scmp.eq.s32.totalorder %s17, 2
      %p90 = por %p88, %p89
      %p92 = scmp.ne.s32.totalorder %s75, %s91
      %p93 = scmp.eq.s32.totalorder %s17, 0
      %p94 = por %p92, %p93
      %s95 = smul.u32 %s19, 5
      %s96 = sadd.s32 %s95, 5
      %p97 = scmp.lt.s32.totalorder %s96, 12
      %s98 = scalar_select %p97, %s96, 12
      %s99 = smul.u32 %s26, 5
      %s100 = sadd.s32 %s99, 5
      %p101 = scmp.lt.s32.totalorder %s100, 12
      %s102 = scalar_select %p101, %s100, 12
      %s103 = ssub.s32 %s18, %s30
      %s104 = ssub.s32 %s98, %s102
      %s105 = sor.u32 %s103, %s104
      %p106 = scmp.eq.s32.totalorder %s105, 0
      %s108 = sadd.s32 %s107, 1
      %s109 = scalar_select %p106, %s107, %s108
      %p112 = pneg %p106
      %p113 = scmp.eq.s32.totalorder %s11, 2
      %p114 = por %p112, %p113
      %p115 = scmp.ne.s32.totalorder %s107, %s110
      %p116 = scmp.eq.s32.totalorder %s11, 0
      %p117 = por %p115, %p116
      %p118 = scmp.ne.s32.totalorder %s107, %s110
      %p119 = scmp.eq.s32.totalorder %s16, 2
      %p120 = por %p118, %p119
      %p121 = scmp.ne.s32.totalorder %s110, %s111
      %p122 = scmp.eq.s32.totalorder %s16, 0
      %p123 = por %p121, %p122
      %p124 = scmp.ne.s32.totalorder %s110, %s111
      %p125 = scmp.eq.s32.totalorder %s17, 2
      %p126 = por %p124, %p125
      %p128 = scmp.ne.s32.totalorder %s111, %s127
      %p129 = scmp.eq.s32.totalorder %s17, 0
      %p130 = por %p128, %p129
      %s132 = sadd.s32 %s131, 1
      %p135 = scmp.eq.s32.totalorder %s11, 2
      %p136 = scmp.ne.s32.totalorder %s131, %s133
      %p137 = scmp.eq.s32.totalorder %s11, 0
      %p138 = por %p136, %p137
      %p139 = scmp.ne.s32.totalorder %s131, %s133
      %p140 = scmp.eq.s32.totalorder %s16, 2
      %p141 = por %p139, %p140
      %p142 = scmp.ne.s32.totalorder %s133, %s134
      %p143 = scmp.eq.s32.totalorder %s16, 0
      %p144 = por %p142, %p143
      %p145 = scmp.ne.s32.totalorder %s133, %s134
      %p146 = scmp.eq.s32.totalorder %s17, 2
      %p147 = por %p145, %p146
      %p149 = scmp.ne.s32.totalorder %s134, %s148
      %p150 = scmp.eq.s32.totalorder %s17, 0
      %p151 = por %p149, %p150
      %s153 = sadd.s32 %s152, 1
      %p156 = scmp.eq.s32.totalorder %s11, 2
      %p157 = scmp.ne.s32.totalorder %s152, %s154
      %p158 = scmp.eq.s32.totalorder %s11, 0
      %p159 = por %p157, %p158
      %p160 = scmp.ne.s32.totalorder %s152, %s154
      %p161 = scmp.eq.s32.totalorder %s16, 2
      %p162 = por %p160, %p161
      %p163 = scmp.ne.s32.totalorder %s154, %s155
      %p164 = scmp.eq.s32.totalorder %s16, 0
      %p165 = por %p163, %p164
      %p166 = scmp.ne.s32.totalorder %s154, %s155
      %p167 = scmp.eq.s32.totalorder %s17, 2
      %p168 = por %p166, %p167
      %p170 = scmp.ne.s32.totalorder %s155, %s169
      %p171 = scmp.eq.s32.totalorder %s17, 0
      %p172 = por %p170, %p171
      %s173 = ssub.s32 %s18, %s30
      %s174 = ssub.s32 %s19, %s26
      %s175 = sor.u32 %s173, %s174
      %p176 = scmp.eq.s32.totalorder %s175, 0
      %s178 = sadd.s32 %s177, 1
      %s179 = scalar_select %p176, %s177, %s178
      %p182 = pneg %p176
      %p183 = scmp.eq.s32.totalorder %s11, 2
      %p184 = por %p182, %p183
      %p185 = scmp.ne.s32.totalorder %s177, %s180
      %p186 = scmp.eq.s32.totalorder %s11, 0
      %p187 = por %p185, %p186
      %p188 = scmp.ne.s32.totalorder %s177, %s180
      %p189 = scmp.eq.s32.totalorder %s16, 2
      %p190 = por %p188, %p189
      %p191 = scmp.ne.s32.totalorder %s180, %s181
      %p192 = scmp.eq.s32.totalorder %s16, 0
      %p193 = por %p191, %p192
      %p194 = scmp.ne.s32.totalorder %s180, %s181
      %p195 = scmp.eq.s32.totalorder %s17, 2
      %p196 = por %p194, %p195
      %p198 = scmp.ne.s32.totalorder %s181, %s197
      %p199 = scmp.eq.s32.totalorder %s17, 0
      %p200 = por %p198, %p199
      %p201 = scmp.le.s32.totalorder 1, %s11
      %p202 = scmp.lt.s32.totalorder %s11, 4
      %p203 = pnand %p201, %p202
      %p204 = pneg %p203
      // Predicated region
      $region9: #{tpu_custom_call.1} parent=5 // pred_check
        _
      $region10: #{tpu_custom_call.1} parent=5 // pred_check_branch
        %206 = sbr.rel (%p203) target = $region12
      $region11: #{tpu_custom_call.1} parent=5 // pred_region
        %s207 = ssub.s32 %s11, 1
        // Predicated region
        $region13: #{tpu_custom_call.1} parent=11 // pred_check
          %p208 = pneg %p144
        $region14: #{tpu_custom_call.1} parent=11 // pred_check_branch
          %210 = sbr.rel (%p208) target = $region16
        $region15: #{tpu_custom_call.1} parent=11 // pred_region
          _
        $region16: #{tpu_custom_call.1} parent=11 // pred_fallthru
          _
        // Predicated region
        $region17: #{tpu_custom_call.1} parent=11 // pred_check
          %p211 = pneg %p165
        $region18: #{tpu_custom_call.1} parent=11 // pred_check_branch
          %213 = sbr.rel (%p211) target = $region20
        $region19: #{tpu_custom_call.1} parent=11 // pred_region
          _
        $region20: #{tpu_custom_call.1} parent=11 // pred_fallthru
          _
      $region12: #{tpu_custom_call.1} parent=5 // pred_fallthru
        _
      %p214 = scmp.lt.s32.totalorder %s11, 3
      // Predicated region
      $region21: #{tpu_custom_call.1} parent=5 // pred_check
        %p215 = pneg %p214
      $region22: #{tpu_custom_call.1} parent=5 // pred_check_branch
        %217 = sbr.rel (%p215) target = $region24
      $region23: #{tpu_custom_call.1} parent=5 // pred_region
        // Predicated region
        $region25: #{tpu_custom_call.1} parent=23 // pred_check
          %p218 = pneg %p45
        $region26: #{tpu_custom_call.1} parent=23 // pred_check_branch
          %220 = sbr.rel (%p218) target = $region28
        $region27: #{tpu_custom_call.1} parent=23 // pred_region
          %s221 = smul.u32 5, %s19
          %s222 = ssub.s32 13, %s221
          %p223 = scmp.lt.s32.totalorder %s222, 5
          %s224 = scalar_select %p223, %s222, 5
          %s225 = smul.u32 64, %s224
          %s226 = smul.u32 %s225, 2
          %p227 = scmp.lt.s32.totalorder %s18, 0
          %s228 = scalar_select %p227, %s18, 0
          %p229 = scmp.lt.s32.totalorder %s221, 12
          %s230 = scalar_select %p229, %s221, 12
          %s231 = smul.addr %s230, 2
          %s232 = smul.addr %s228, 26
          %s233 = sadd.s32 %s231, %s232
          %s234 = smul.addr %s233, 4
          %s235 = scalar_lea.vmem %s0, %s234
          %s236 = smul.u32 5, %s19
          %s237 = ssub.s32 13, %s236
          %p238 = scmp.lt.s32.totalorder %s237, 5
          %s239 = scalar_select %p238, %s237, 5
          %s240 = smul.u32 64, %s239
          %s241 = smul.u32 %s240, 2
        $region28: #{tpu_custom_call.1} parent=23 // pred_fallthru
          _
        // Predicated region
        $region29: #{tpu_custom_call.1} parent=23 // pred_check
          %p242 = pneg %p81
        $region30: #{tpu_custom_call.1} parent=23 // pred_check_branch
          %244 = sbr.rel (%p242) target = $region32
        $region31: #{tpu_custom_call.1} parent=23 // pred_region
          %s245 = smul.u32 %s19, 5
          %s246 = ssub.s32 %s245, 1
          %p247 = scmp.gt.s32.totalorder %s246, 0
          %s248 = scalar_select %p247, %s246, 0
          %p249 = scmp.lt.s32.totalorder %s18, 0
          %s250 = scalar_select %p249, %s18, 0
          %p251 = scmp.lt.s32.totalorder %s248, 12
          %s252 = scalar_select %p251, %s248, 12
          %s253 = smul.addr %s252, 2
          %s254 = smul.addr %s250, 26
          %s255 = sadd.s32 %s253, %s254
          %s256 = smul.addr %s255, 4
          %s257 = scalar_lea.vmem %s1, %s256
          %s258 = smul.u32 %s19, 5
          %s259 = ssub.s32 %s258, 1
          %p260 = scmp.gt.s32.totalorder %s259, 0
          %s261 = scalar_select %p260, %s259, 0
        $region32: #{tpu_custom_call.1} parent=23 // pred_fallthru
          _
        // Predicated region
        $region33: #{tpu_custom_call.1} parent=23 // pred_check
          %p262 = pneg %p117
        $region34: #{tpu_custom_call.1} parent=23 // pred_check_branch
          %264 = sbr.rel (%p262) target = $region36
        $region35: #{tpu_custom_call.1} parent=23 // pred_region
          %s265 = smul.u32 %s19, 5
          %s266 = sadd.s32 %s265, 5
          %p267 = scmp.lt.s32.totalorder %s266, 12
          %s268 = scalar_select %p267, %s266, 12
          %p269 = scmp.lt.s32.totalorder %s18, 0
          %s270 = scalar_select %p269, %s18, 0
          %p271 = scmp.lt.s32.totalorder %s268, 12
          %s272 = scalar_select %p271, %s268, 12
          %s273 = smul.addr %s272, 2
          %s274 = smul.addr %s270, 26
          %s275 = sadd.s32 %s273, %s274
          %s276 = smul.addr %s275, 4
          %s277 = scalar_lea.vmem %s2, %s276
          %s278 = smul.u32 %s19, 5
          %s279 = sadd.s32 %s278, 5
          %p280 = scmp.lt.s32.totalorder %s279, 12
          %s281 = scalar_select %p280, %s279, 12
        $region36: #{tpu_custom_call.1} parent=23 // pred_fallthru
          _
      $region24: #{tpu_custom_call.1} parent=5 // pred_fallthru
        _
      %p282 = scmp.le.s32.totalorder 1, %s11
      %p283 = scmp.lt.s32.totalorder %s11, 4
      %p284 = pnand %p282, %p283
      %p285 = pneg %p284
      // Predicated region
      $region37: #{tpu_custom_call.1} parent=5 // pred_check
        _
      $region38: #{tpu_custom_call.1} parent=5 // pred_check_branch
        %287 = sbr.rel (%p284) target = $region40
      $region39: #{tpu_custom_call.1} parent=5 // pred_region
        %s288 = ssub.s32 %s11, 1
        %s289 = smul.u32 5, %s21
        %s290 = ssub.s32 13, %s289
        %p291 = scmp.lt.s32.totalorder %s290, 5
        %s292 = scalar_select %p291, %s290, 5
        %s293 = smul.u32 64, %s292
        %s294 = smul.u32 %s293, 2
        %p295 = scmp.lt.s32.totalorder %s20, 0
        %s296 = scalar_select %p295, %s20, 0
        %p297 = scmp.lt.s32.totalorder %s289, 12
        %s298 = scalar_select %p297, %s289, 12
        %s299 = smul.addr %s298, 2
        %s300 = smul.addr %s296, 26
        %s301 = sadd.s32 %s299, %s300
        %s302 = smul.addr %s301, 4
        %s303 = scalar_lea.vmem %s0, %s302
        %p304 = pneg %p51
        %p305 = pneg %p48
        %s306 = smul.u32 %s21, 5
        %s307 = ssub.s32 %s306, 1
        %p308 = scmp.gt.s32.totalorder %s307, 0
        %s309 = scalar_select %p308, %s307, 0
        %p310 = scmp.lt.s32.totalorder %s20, 0
        %s311 = scalar_select %p310, %s20, 0
        %p312 = scmp.lt.s32.totalorder %s309, 12
        %s313 = scalar_select %p312, %s309, 12
        %s314 = smul.addr %s313, 2
        %s315 = smul.addr %s311, 26
        %s316 = sadd.s32 %s314, %s315
        %s317 = smul.addr %s316, 4
        %s318 = scalar_lea.vmem %s1, %s317
        %p319 = pneg %p87
        %p320 = pneg %p84
        %s321 = smul.u32 %s21, 5
        %s322 = sadd.s32 %s321, 5
        %p323 = scmp.lt.s32.totalorder %s322, 12
        %s324 = scalar_select %p323, %s322, 12
        %p325 = scmp.lt.s32.totalorder %s20, 0
        %s326 = scalar_select %p325, %s20, 0
        %p327 = scmp.lt.s32.totalorder %s324, 12
        %s328 = scalar_select %p327, %s324, 12
        %s329 = smul.addr %s328, 2
        %s330 = smul.addr %s326, 26
        %s331 = sadd.s32 %s329, %s330
        %s332 = smul.addr %s331, 4
        %s333 = scalar_lea.vmem %s2, %s332
        %p334 = pneg %p123
        %p335 = pneg %p120
        %p336 = pneg %p144
        %p337 = pneg %p141
        %p338 = pneg %p165
        %p339 = pneg %p162
        %p340 = pneg %p193
        %p341 = pneg %p190
        %s342 = sand.u32 %s180, 1
        %s343 = sand.u32 %s180, 1
        %s344 = smul.addr %s343, 80
        %s345 = scalar_lea.vmem [#allocation4], %s344
        %s346 = smul.u32 5, %s21
        %s347 = ssub.s32 13, %s346
        %p348 = scmp.lt.s32.totalorder %s347, 5
        %s349 = scalar_select %p348, %s347, 5
        %s350 = smul.u32 64, %s349
        %s351 = smul.u32 %s350, 2
        %p352 = scmp.lt.s32.totalorder %s20, 0
        %s353 = scalar_select %p352, %s20, 0
        %p354 = scmp.lt.s32.totalorder %s346, 12
        %s355 = scalar_select %p354, %s346, 12
        %s356 = smul.addr %s355, 2
        %s357 = smul.addr %s353, 26
        %s358 = sadd.s32 %s356, %s357
        %s359 = smul.addr %s358, 4
        %s360 = scalar_lea.vmem %s0, %s359
        %s361 = smul.u32 5, %s21
        %s362 = ssub.s32 13, %s361
        %p363 = scmp.lt.s32.totalorder %s362, 5
        %s364 = scalar_select %p363, %s362, 5
        %s365 = smul.u32 64, %s364
        %s366 = smul.u32 %s365, 2
        %s367 = smul.u32 %s21, 5
        %s368 = ssub.s32 %s367, 1
        %p369 = scmp.gt.s32.totalorder %s368, 0
        %s370 = scalar_select %p369, %s368, 0
        %p371 = scmp.lt.s32.totalorder %s20, 0
        %s372 = scalar_select %p371, %s20, 0
        %p373 = scmp.lt.s32.totalorder %s370, 12
        %s374 = scalar_select %p373, %s370, 12
        %s375 = smul.addr %s374, 2
        %s376 = smul.addr %s372, 26
        %s377 = sadd.s32 %s375, %s376
        %s378 = smul.addr %s377, 4
        %s379 = scalar_lea.vmem %s1, %s378
        %s380 = smul.u32 %s21, 5
        %s381 = ssub.s32 %s380, 1
        %p382 = scmp.gt.s32.totalorder %s381, 0
        %s383 = scalar_select %p382, %s381, 0
        %s384 = smul.u32 %s21, 5
        %s385 = sadd.s32 %s384, 5
        %p386 = scmp.lt.s32.totalorder %s385, 12
        %s387 = scalar_select %p386, %s385, 12
        %p388 = scmp.lt.s32.totalorder %s20, 0
        %s389 = scalar_select %p388, %s20, 0
        %p390 = scmp.lt.s32.totalorder %s387, 12
        %s391 = scalar_select %p390, %s387, 12
        %s392 = smul.addr %s391, 2
        %s393 = smul.addr %s389, 26
        %s394 = sadd.s32 %s392, %s393
        %s395 = smul.addr %s394, 4
        %s396 = scalar_lea.vmem %s2, %s395
        %s397 = smul.u32 %s21, 5
        %s398 = sadd.s32 %s397, 5
        %p399 = scmp.lt.s32.totalorder %s398, 12
        %s400 = scalar_select %p399, %s398, 12
        %s401 = smul.u32 5, %s21
        %s402 = ssub.s32 13, %s401
        %p403 = scmp.lt.s32.totalorder %s402, 5
        %s404 = scalar_select %p403, %s402, 5
        %s405 = smul.u32 128, %s404
        %s406 = smul.u32 %s405, 2
        %v408 = vld [vmem:[%s360] sm:$0xf]
        %v409 = vld [vmem:[%s360 + $0x4] sm:$0x3]
        %vm410 = vsmask.f32 3328
        %vm411 = vsmask.f32 7440
        %vm412 = vmor %vm410, %vm411
        %v414 = vshll.u32 %v408, 16
        %v416 = vrot.slane %v414, 5
        %v417 = vshrl.u32 %v408, 16
        %v419 = vrot.slane %v417, 4
        %v420 = vor.u32 %v419, %v416
        %v421 = vrot.slane %v420, 4
        %v423 = vshll.u32 %v409, 16
        %v425 = vrot.slane %v423, 5
        %v426 = vsel %vm412, %v421, %v425
        %v427 = vshrl.u32 %v409, 16
        %v429 = vrot.slane %v427, 4
        %v430 = vor.u32 %v429, %v425
        %v431 = vrot.slane %v430, 4
        %vm435 = vcmask 125955
        %vm436 = vsmask.f32 7950
        %vm437 = vmand %vm435, %vm436
        %v438 = vld [vmem:[#allocation2 + $0x4] sm:$0x8]
        %v439 = vsel %vm437, %v416, %v438
        %440 = vst [vmem:[#allocation2 + $0x4] sm:$0x8] %v439
        %vm441 = vcmask 125952
        %442 = vst.msk [vmem:[#allocation2 + $0x8] sm:$0xf] %vm441, %v426
        %vm443 = vcmask 123904
        %vm444 = vsmask.f32 1280
        %vm445 = vmand %vm443, %vm444
        %v446 = vld [vmem:[#allocation2 + $0xc] sm:$0x3]
        %v447 = vsel %vm445, %v431, %v446
        %448 = vst [vmem:[#allocation2 + $0xc] sm:$0x3] %v447
        %s449 = scalar_lea.vmem %s360, 8
        %v450 = vld [vmem:[%s449] sm:$0xf]
        %v451 = vld [vmem:[%s449 + $0x4] sm:$0x3]
        %vm452 = vsmask.f32 2304
        %vm453 = vsmask.f32 6416
        %vm454 = vmor %vm452, %vm453
        %v456 = vshrl.u32 %v450, 16
        %v458 = vrot.slane %v456, 5
        %v459 = vshll.u32 %v450, 16
        %v461 = vrot.slane %v459, 6
        %v462 = vor.u32 %v458, %v461
        %v463 = vrot.slane %v462, 4
        %v465 = vshrl.u32 %v451, 16
        %v467 = vrot.slane %v465, 5
        %v468 = vshll.u32 %v451, 16
        %v470 = vrot.slane %v468, 6
        %v471 = vor.u32 %v467, %v470
        %v472 = vsel %vm454, %v463, %v471
        %v473 = vrot.slane %v467, 4
        %vm477 = vcmask 125954
        %vm478 = vsmask.f32 7946
        %vm479 = vmand %vm477, %vm478
        %v480 = vld [vmem:[#allocation2 + $0xc] sm:$0xc]
        %v481 = vsel %vm479, %v462, %v480
        %482 = vst [vmem:[#allocation2 + $0xc] sm:$0xc] %v481
        %483 = vst.msk [vmem:[#allocation2 + $0x10] sm:$0xf] %vm441, %v472
        %vm484 = vcmask 122880
        %vm485 = vsmask.f32 256
        %vm486 = vmand %vm484, %vm485
        %v487 = vld [vmem:[#allocation2 + $0x14] sm:$0x1]
        %v488 = vsel %vm486, %v473, %v487
        %489 = vst [vmem:[#allocation2 + $0x14] sm:$0x1] %v488
        %s490 = scalar_lea.vmem %s360, 16
        %v491 = vld [vmem:[%s490] sm:$0xf]
        %v492 = vld [vmem:[%s490 + $0x4] sm:$0x3]
        %vm493 = vsmask.f32 5392
        %vm494 = vmor %vm444, %vm493
        %v496 = vshrl.u32 %v491, 16
        %v498 = vrot.slane %v496, 6
        %v499 = vshll.u32 %v491, 16
        %v501 = vrot.slane %v499, 7
        %v502 = vor.u32 %v498, %v501
        %v503 = vrot.slane %v502, 4
        %v505 = vshrl.u32 %v492, 16
        %v507 = vrot.slane %v505, 6
        %v508 = vshll.u32 %v492, 16
        %v510 = vrot.slane %v508, 7
        %v511 = vor.u32 %v507, %v510
        %v512 = vsel %vm494, %v503, %v511
        %vm515 = vcmask 125953
        %vm516 = vsmask.f32 7942
        %vm517 = vmand %vm515, %vm516
        %v518 = vld [vmem:[#allocation2 + $0x14] sm:$0xe]
        %v519 = vsel %vm517, %v502, %v518
        %520 = vst [vmem:[#allocation2 + $0x14] sm:$0xe] %v519
        %vm521 = vcmask 125952
        %vm522 = vmand %vm521, %vm410
        %v523 = vld [vmem:[#allocation2 + $0x18] sm:$0xf]
        %v524 = vsel %vm522, %v512, %v523
        %525 = vst [vmem:[#allocation2 + $0x18] sm:$0xf] %v524
        %s526 = scalar_lea.vmem %s360, 24
        %v527 = vld [vmem:[%s526] sm:$0xf]
        %v528 = vld [vmem:[%s526 + $0x4] sm:$0x3]
        %vm529 = vsmask.f32 4368
        %vm530 = vmor %vm485, %vm529
        %v532 = vshrl.u32 %v527, 16
        %v534 = vrot.slane %v532, 7
        %v535 = vshll.u32 %v527, 16
        %v537 = vor.u32 %v534, %v535
        %v538 = vrot.slane %v534, 4
        %v540 = vshrl.u32 %v528, 16
        %v542 = vrot.slane %v540, 7
        %v543 = vshll.u32 %v528, 16
        %v545 = vor.u32 %v542, %v543
        %v546 = vsel %vm530, %v538, %v545
        %vm549 = vsmask.f32 7938
        %vm550 = vmand %vm521, %vm549
        %v551 = vld [vmem:[#allocation2 + $0x1c] sm:$0xf]
        %v552 = vsel %vm550, %v537, %v551
        %553 = vst [vmem:[#allocation2 + $0x1c] sm:$0xf] %v552
        %vm554 = vcmask 124928
        %vm555 = vmand %vm554, %vm452
        %v556 = vld [vmem:[#allocation2 + $0x20] sm:$0x7]
        %v557 = vsel %vm555, %v546, %v556
        %558 = vst [vmem:[#allocation2 + $0x20] sm:$0x7] %v557
        %s559 = scalar_lea.vmem %s360, 32
        %v560 = vld [vmem:[%s559] sm:$0xf]
        %v561 = vld [vmem:[%s559 + $0x4] sm:$0x3]
        %v563 = vshll.u32 %v560, 16
        %v565 = vrot.slane %v563, 5
        %v566 = vshrl.u32 %v560, 16
        %v568 = vrot.slane %v566, 4
        %v569 = vor.u32 %v568, %v565
        %v570 = vrot.slane %v569, 4
        %v572 = vshll.u32 %v561, 16
        %v574 = vrot.slane %v572, 5
        %v575 = vsel %vm412, %v570, %v574
        %v576 = vshrl.u32 %v561, 16
        %v578 = vrot.slane %v576, 4
        %v579 = vor.u32 %v578, %v574
        %v580 = vrot.slane %v579, 4
        %v584 = vld [vmem:[#allocation2 + $0x20] sm:$0x8]
        %v585 = vsel %vm437, %v565, %v584
        %586 = vst [vmem:[#allocation2 + $0x20] sm:$0x8] %v585
        %587 = vst.msk [vmem:[#allocation2 + $0x24] sm:$0xf] %vm441, %v575
        %v588 = vld [vmem:[#allocation2 + $0x28] sm:$0x3]
        %v589 = vsel %vm445, %v580, %v588
        %590 = vst [vmem:[#allocation2 + $0x28] sm:$0x3] %v589
        %v591 = vld [vmem:[#allocation2] sm:$0x1]
        %v592 = vsel %vm486, 0, %v591
        %593 = vst [vmem:[#allocation2] sm:$0x1] %v592
        %vm594 = vsmask.f32 3338
        %vm595 = vmand %vm477, %vm594
        %v596 = vld [vmem:[#allocation2 + $0x4] sm:$0xc]
        %v597 = vsel %vm595, 0, %v596
        %598 = vst [vmem:[#allocation2 + $0x4] sm:$0xc] %v597
        %vm599 = vcmask 124929
        %vm600 = vsmask.f32 2310
        %vm601 = vmand %vm599, %vm600
        %v602 = vld [vmem:[#allocation2 + $0xc] sm:$0x6]
        %v603 = vsel %vm601, 0, %v602
        %604 = vst [vmem:[#allocation2 + $0xc] sm:$0x6] %v603
        %vm605 = vsmask.f32 1282
        %vm606 = vmand %vm443, %vm605
        %v607 = vld [vmem:[#allocation2 + $0x14] sm:$0x3]
        %v608 = vsel %vm606, 0, %v607
        %609 = vst [vmem:[#allocation2 + $0x14] sm:$0x3] %v608
        %v610 = vld [vmem:[#allocation2 + $0x18] sm:$0x8]
        %v611 = vsel %vm437, 0, %v610
        %612 = vst [vmem:[#allocation2 + $0x18] sm:$0x8] %v611
        %v613 = vld [vmem:[#allocation2 + $0x1c] sm:$0x1]
        %v614 = vsel %vm486, 0, %v613
        %615 = vst [vmem:[#allocation2 + $0x1c] sm:$0x1] %v614
        %v616 = vld [vmem:[#allocation2 + $0x20] sm:$0xc]
        %v617 = vsel %vm595, 0, %v616
        %618 = vst [vmem:[#allocation2 + $0x20] sm:$0xc] %v617
        %v619 = vld [vmem:[#allocation2 + $0x28] sm:$0x6]
        %v620 = vsel %vm601, 0, %v619
        %621 = vst [vmem:[#allocation2 + $0x28] sm:$0x6] %v620
        %vm622 = vmand %vm443, %vm549
        %v623 = vld [vmem:[#allocation2 + $0x30] sm:$0x3]
        %v624 = vsel %vm622, 0, %v623
        %625 = vst [vmem:[#allocation2 + $0x30] sm:$0x3] %v624
        %p626 = scmp.eq.s32.totalorder %s21, 0
        // Predicated region
        $region41: #{tpu_custom_call.1} parent=39 // pred_check
          %p627 = pneg %p626
        $region42: #{tpu_custom_call.1} parent=39 // pred_check_branch
          %629 = sbr.rel (%p627) target = $region44
        $region43: #{tpu_custom_call.1} parent=39 // pred_region
          %630 = vst.msk [vmem:[#allocation2] sm:$0xf] %vm441, 0
          %vm631 = vcmask 124928
          %632 = vst.msk [vmem:[#allocation2 + $0x4] sm:$0x7] %vm631, 0
        $region44: #{tpu_custom_call.1} parent=39 // pred_fallthru
          _
        %p633 = scmp.gt.s32.totalorder %s21, 0
        // Predicated region
        $region45: #{tpu_custom_call.1} parent=39 // pred_check
          %p634 = pneg %p633
        $region46: #{tpu_custom_call.1} parent=39 // pred_check_branch
          %636 = sbr.rel (%p634) target = $region48
        $region47: #{tpu_custom_call.1} parent=39 // pred_region
          %v637 = vld [vmem:[%s379] sm:$0xf]
          %v638 = vld [vmem:[%s379 + $0x4] sm:$0x3]
          %v640 = vshrl.u32 %v637, 16
          %v642 = vrot.slane %v640, 7
          %v643 = vshll.u32 %v637, 16
          %v645 = vor.u32 %v642, %v643
          %v646 = vrot.slane %v642, 4
          %v648 = vshrl.u32 %v638, 16
          %v650 = vrot.slane %v648, 7
          %v651 = vshll.u32 %v638, 16
          %v653 = vor.u32 %v650, %v651
          %v654 = vsel %vm530, %v646, %v653
          %v657 = vld [vmem:[#allocation2] sm:$0xf]
          %v658 = vsel %vm550, %v645, %v657
          %659 = vst [vmem:[#allocation2] sm:$0xf] %v658
          %v660 = vld [vmem:[#allocation2 + $0x4] sm:$0x7]
          %v661 = vsel %vm555, %v654, %v660
          %662 = vst [vmem:[#allocation2 + $0x4] sm:$0x7] %v661
        $region48: #{tpu_custom_call.1} parent=39 // pred_fallthru
          _
        %p663 = scmp.eq.s32.totalorder %s21, 2
        // Predicated region
        $region49: #{tpu_custom_call.1} parent=39 // pred_check
          %p664 = pneg %p663
        $region50: #{tpu_custom_call.1} parent=39 // pred_check_branch
          %666 = sbr.rel (%p664) target = $region52
        $region51: #{tpu_custom_call.1} parent=39 // pred_region
          %667 = vst.msk [vmem:[#allocation2 + $0x1c] sm:$0xf] %vm441, 0
          %vm668 = vcmask 124928
          %669 = vst.msk [vmem:[#allocation2 + $0x20] sm:$0x7] %vm668, 0
        $region52: #{tpu_custom_call.1} parent=39 // pred_fallthru
          _
        %p670 = scmp.lt.s32.totalorder %s21, 2
        // Predicated region
        $region53: #{tpu_custom_call.1} parent=39 // pred_check
          %p671 = pneg %p670
        $region54: #{tpu_custom_call.1} parent=39 // pred_check_branch
          %673 = sbr.rel (%p671) target = $region56
        $region55: #{tpu_custom_call.1} parent=39 // pred_region
          %v674 = vld [vmem:[%s396] sm:$0xf]
          %v675 = vld [vmem:[%s396 + $0x4] sm:$0x3]
          %v677 = vshrl.u32 %v674, 16
          %v679 = vrot.slane %v677, 5
          %v680 = vshll.u32 %v674, 16
          %v682 = vrot.slane %v680, 6
          %v683 = vor.u32 %v679, %v682
          %v684 = vrot.slane %v683, 4
          %v686 = vshrl.u32 %v675, 16
          %v688 = vrot.slane %v686, 5
          %v689 = vshll.u32 %v675, 16
          %v691 = vrot.slane %v689, 6
          %v692 = vor.u32 %v688, %v691
          %v693 = vsel %vm454, %v684, %v692
          %v694 = vrot.slane %v688, 4
          %v698 = vld [vmem:[#allocation2 + $0x28] sm:$0xc]
          %v699 = vsel %vm479, %v683, %v698
          %700 = vst [vmem:[#allocation2 + $0x28] sm:$0xc] %v699
          %701 = vst.msk [vmem:[#allocation2 + $0x2c] sm:$0xf] %vm441, %v693
          %v702 = vld [vmem:[#allocation2 + $0x30] sm:$0x1]
          %v703 = vsel %vm486, %v694, %v702
          %704 = vst [vmem:[#allocation2 + $0x30] sm:$0x1] %v703
        $region56: #{tpu_custom_call.1} parent=39 // pred_fallthru
          _
        %v705 = vld [vmem:[#allocation2] sm:$0xf]
        %v706 = vld [vmem:[#allocation2 + $0x4] sm:$0xf]
        %v707 = vld [vmem:[#allocation2 + $0x8] sm:$0xf]
        %v708 = vld [vmem:[#allocation2 + $0xc] sm:$0xf]
        %v709 = vld [vmem:[#allocation2 + $0x10] sm:$0xf]
        %v710 = vld [vmem:[#allocation2 + $0x14] sm:$0xf]
        %v711 = vld [vmem:[#allocation2 + $0x18] sm:$0xf]
        %v712 = vld [vmem:[#allocation2 + $0x1c] sm:$0xf]
        %v713 = vld [vmem:[#allocation2 + $0x20] sm:$0x7]
        %v714 = vld [vmem:[%s3] sm:$0xf]
        %v715 = vld [vmem:[%s3 + $0x4] sm:$0xf]
        %v716 = vld [vmem:[%s4] sm:$0x1]
        %v718 = vlaneseq
        %v719 = vshrl.u32 %v718, 7
        %v720 = vsub.s32 0, %v719
        %v721 = vrot.slane %v716, %v720
        %v732 = vunpack.c.l.b16 %v705
        %v733 = vunpack.c.l.b16 %v706
        %v734 = vunpack.c.l.b16 %v707
        %v735 = vunpack.c.l.b16 %v708
        %v736 = vunpack.c.l.b16 %v709
        %v737 = vunpack.c.l.b16 %v710
        %v738 = vunpack.c.l.b16 %v711
        %v739 = vunpack.c.l.b16 %v712
        %v740 = vunpack.c.l.b16 %v713
        %v741 = vpack.c.b16 %v733, %v732
        %v742 = vpack.c.b16 %v735, %v734
        %v743 = vpack.c.b16 %v737, %v736
        %v744 = vpack.c.b16 %v739, %v738
        %v745 = vpack.c.b16 %v740, %v740
        %v748 = vunpack.c.l.b16 %v714
        %v749 = vunpack.c.l.b16 %v715
        %v750 = vpack.c.b16 %v749, %v748
        %vm752 = vcmask 130048
        %v754 = vsel %vm752, %v741, 0
        %v757 = vsel %vm752, %v742, 0
        %v760 = vsel %vm752, %v743, 0
        %v763 = vsel %vm752, %v744, 0
        %v766 = vsel %vm752, %v745, 0
        %768 = vmatprep.subr.bf16.mxu0 0
        %769 = vmatpush1.bf16.msra.mxu0 %v750
        %770 = vmatprep.subr.bf16.mxu0 0
        %771 = vmatpush1.bf16.msra.mxu0 0
        %772 = vmatprep.subr.bf16.mxu0 0
        %773 = vmatpush1.bf16.msra.mxu0 0
        %774 = vmatprep.subr.bf16.mxu0 0
        %775 = vmatpush1.bf16.msra.mxu0 0
        %776 = vmatprep.subr.bf16.mxu0 0
        %777 = vmatpush1.bf16.msra.mxu0 0
        %778 = vmatprep.subr.bf16.mxu0 0
        %779 = vmatpush1.bf16.msra.mxu0 0
        %780 = vmatprep.subr.bf16.mxu0 0
        %781 = vmatpush1.bf16.msra.mxu0 0
        %782 = vmatprep.subr.bf16.mxu0 0
        %783 = vmatpush1.bf16.msra.mxu0 0
        %784 = vmatprep.subr.bf16.mxu0 0
        %785 = vmatpush1.bf16.msra.mxu0 0
        %786 = vmatprep.subr.bf16.mxu0 0
        %787 = vmatpush1.bf16.msra.mxu0 0
        %788 = vmatprep.subr.bf16.mxu0 0
        %789 = vmatpush1.bf16.msra.mxu0 0
        %790 = vmatprep.subr.bf16.mxu0 0
        %791 = vmatpush1.bf16.msra.mxu0 0
        %792 = vmatprep.subr.bf16.mxu0 0
        %793 = vmatpush1.bf16.msra.mxu0 0
        %794 = vmatprep.subr.bf16.mxu0 0
        %795 = vmatpush1.bf16.msra.mxu0 0
        %796 = vmatprep.subr.bf16.mxu0 0
        %797 = vmatpush1.bf16.msra.mxu0 0
        %798 = vmatprep.subr.bf16.mxu0 0
        %799 = vmatpush1.bf16.msra.mxu0 0
        %800 = vmatprep.mubr.bf16.mxu0 0
        %801 = vmatmul.mubr.bf16.gmra.mrb[0].mxu0 %v754
        %v802 = vpop.f32.mrb[0].mxu0
        %v803 = vadd.f32 %v721, %v802
        %v804 = vpop.f32.mrb[0].mxu0
        %v805 = vpop.f32.mrb[0].mxu0
        %v806 = vadd.f32 %v721, %v805
        %v807 = vpop.f32.mrb[0].mxu0
        %808 = vmatprep.mubr.bf16.mxu0 0
        %809 = vmatmul.mubr.bf16.gmra.mrb[0].mxu0 %v757
        %v810 = vpop.f32.mrb[0].mxu0
        %v811 = vadd.f32 %v721, %v810
        %v812 = vpop.f32.mrb[0].mxu0
        %v813 = vpop.f32.mrb[0].mxu0
        %v814 = vadd.f32 %v721, %v813
        %v815 = vpop.f32.mrb[0].mxu0
        %816 = vmatprep.mubr.bf16.mxu0 0
        %817 = vmatmul.mubr.bf16.gmra.mrb[0].mxu0 %v760
        %v818 = vpop.f32.mrb[0].mxu0
        %v819 = vadd.f32 %v721, %v818
        %v820 = vpop.f32.mrb[0].mxu0
        %v821 = vpop.f32.mrb[0].mxu0
        %v822 = vadd.f32 %v721, %v821
        %v823 = vpop.f32.mrb[0].mxu0
        %824 = vmatprep.mubr.bf16.mxu0 0
        %825 = vmatmul.mubr.bf16.gmra.mrb[0].mxu0 %v763
        %v826 = vpop.f32.mrb[0].mxu0
        %v827 = vadd.f32 %v721, %v826
        %v828 = vpop.f32.mrb[0].mxu0
        %v829 = vpop.f32.mrb[0].mxu0
        %v830 = vadd.f32 %v721, %v829
        %v831 = vpop.f32.mrb[0].mxu0
        %832 = vmatprep.mubr.bf16.mxu0 0
        %833 = vmatmul.mubr.bf16.gmra.mrb[0].mxu0 %v766
        %v834 = vpop.f32.mrb[0].mxu0
        %v835 = vadd.f32 %v721, %v834
        %v836 = vpop.f32.mrb[0].mxu0
        %v837 = vpop.f32.mrb[0].mxu0
        %v838 = vpop.f32.mrb[0].mxu0
        %839 = vdwg.mxu0
        %vm840 = vcmask 261120
        %841 = vst.msk [vmem:[#allocation3] sm:$0xff] %vm840, %v803
        %842 = vst.msk [vmem:[#allocation3 + $0x8] sm:$0xff] %vm840, %v806
        %843 = vst.msk [vmem:[#allocation3 + $0x10] sm:$0xff] %vm840, %v811
        %844 = vst.msk [vmem:[#allocation3 + $0x18] sm:$0xff] %vm840, %v814
        %845 = vst.msk [vmem:[#allocation3 + $0x20] sm:$0xff] %vm840, %v819
        %846 = vst.msk [vmem:[#allocation3 + $0x28] sm:$0xff] %vm840, %v822
        %847 = vst.msk [vmem:[#allocation3 + $0x30] sm:$0xff] %vm840, %v827
        %848 = vst.msk [vmem:[#allocation3 + $0x38] sm:$0xff] %vm840, %v830
        %vm849 = vcmask 259072
        %850 = vst.msk [vmem:[#allocation3 + $0x40] sm:$0x3f] %vm849, %v835
        %v851 = vld [vmem:[#allocation3] sm:$0xff]
        %v852 = vld [vmem:[#allocation3 + $0x8] sm:$0xff]
        %v853 = vld [vmem:[#allocation3 + $0x10] sm:$0xff]
        %v854 = vld [vmem:[#allocation3 + $0x18] sm:$0xff]
        %v855 = vld [vmem:[#allocation3 + $0x20] sm:$0xff]
        %v856 = vld [vmem:[#allocation3 + $0x28] sm:$0xff]
        %v857 = vld [vmem:[#allocation3 + $0x30] sm:$0xff]
        %v858 = vld [vmem:[#allocation3 + $0x38] sm:$0xff]
        %v859 = vld [vmem:[#allocation3 + $0x40] sm:$0x3f]
        %v860 = vld [vmem:[#allocation2] sm:$0xf]
        %v861 = vld [vmem:[#allocation2 + $0x4] sm:$0xf]
        %v862 = vld [vmem:[#allocation2 + $0x8] sm:$0xf]
        %v863 = vld [vmem:[#allocation2 + $0xc] sm:$0xf]
        %v864 = vld [vmem:[#allocation2 + $0x10] sm:$0xf]
        %v865 = vld [vmem:[#allocation2 + $0x14] sm:$0xf]
        %v866 = vld [vmem:[#allocation2 + $0x18] sm:$0xf]
        %v867 = vld [vmem:[#allocation2 + $0x1c] sm:$0xf]
        %v868 = vld [vmem:[#allocation2 + $0x20] sm:$0xf]
        %s869 = scalar_lea.vmem %s3, 8
        %v870 = vld [vmem:[%s869] sm:$0xf]
        %v871 = vld [vmem:[%s869 + $0x4] sm:$0xf]
        %v881 = vunpack.c.l.b16 %v860
        %v882 = vunpack.c.l.b16 %v861
        %v883 = vunpack.c.l.b16 %v862
        %v884 = vunpack.c.l.b16 %v863
        %v885 = vunpack.c.l.b16 %v864
        %v886 = vunpack.c.l.b16 %v865
        %v887 = vunpack.c.l.b16 %v866
        %v888 = vunpack.c.l.b16 %v867
        %v889 = vunpack.c.l.b16 %v868
        %v890 = vpack.c.b16 %v882, %v881
        %v891 = vpack.c.b16 %v884, %v883
        %v892 = vpack.c.b16 %v886, %v885
        %v893 = vpack.c.b16 %v888, %v887
        %v894 = vpack.c.b16 %v889, %v889
        %vm895 = vsmask.f32 7424
        %v897 = vshrl.u32 %v890, 16
        %v899 = vshll.u32 %v890, 16
        %v901 = vrot.slane %v899, 1
        %v902 = vor.u32 %v897, %v901
        %v904 = vshll.u32 %v891, 16
        %v906 = vrot.slane %v904, 1
        %v907 = vsel %vm895, %v902, %v906
        %v908 = vshrl.u32 %v891, 16
        %v910 = vor.u32 %v908, %v906
        %v912 = vshll.u32 %v892, 16
        %v914 = vrot.slane %v912, 1
        %v915 = vsel %vm895, %v910, %v914
        %v916 = vshrl.u32 %v892, 16
        %v918 = vor.u32 %v916, %v914
        %v920 = vshll.u32 %v893, 16
        %v922 = vrot.slane %v920, 1
        %v923 = vsel %vm895, %v918, %v922
        %v924 = vshrl.u32 %v893, 16
        %v926 = vor.u32 %v924, %v922
        %v928 = vshll.u32 %v894, 16
        %v930 = vrot.slane %v928, 1
        %v931 = vsel %vm895, %v926, %v930
        %v932 = vshrl.u32 %v894, 16
        %v934 = vor.u32 %v932, %v930
        %v937 = vunpack.c.l.b16 %v870
        %v938 = vunpack.c.l.b16 %v871
        %v939 = vpack.c.b16 %v938, %v937
        %v942 = vsel %vm752, %v907, 0
        %v945 = vsel %vm752, %v915, 0
        %v948 = vsel %vm752, %v923, 0
        %v951 = vsel %vm752, %v931, 0
        %v954 = vsel %vm752, %v934, 0
        %956 = vmatprep.subr.bf16.mxu0 0
        %957 = vmatpush1.bf16.msra.mxu0 %v939
        %958 = vmatprep.subr.bf16.mxu0 0
        %959 = vmatpush1.bf16.msra.mxu0 0
        %960 = vmatprep.subr.bf16.mxu0 0
        %961 = vmatpush1.bf16.msra.mxu0 0
        %962 = vmatprep.subr.bf16.mxu0 0
        %963 = vmatpush1.bf16.msra.mxu0 0
        %964 = vmatprep.subr.bf16.mxu0 0
        %965 = vmatpush1.bf16.msra.mxu0 0
        %966 = vmatprep.subr.bf16.mxu0 0
        %967 = vmatpush1.bf16.msra.mxu0 0
        %968 = vmatprep.subr.bf16.mxu0 0
        %969 = vmatpush1.bf16.msra.mxu0 0
        %970 = vmatprep.subr.bf16.mxu0 0
        %971 = vmatpush1.bf16.msra.mxu0 0
        %972 = vmatprep.subr.bf16.mxu0 0
        %973 = vmatpush1.bf16.msra.mxu0 0
        %974 = vmatprep.subr.bf16.mxu0 0
        %975 = vmatpush1.bf16.msra.mxu0 0
        %976 = vmatprep.subr.bf16.mxu0 0
        %977 = vmatpush1.bf16.msra.mxu0 0
        %978 = vmatprep.subr.bf16.mxu0 0
        %979 = vmatpush1.bf16.msra.mxu0 0
        %980 = vmatprep.subr.bf16.mxu0 0
        %981 = vmatpush1.bf16.msra.mxu0 0
        %982 = vmatprep.subr.bf16.mxu0 0
        %983 = vmatpush1.bf16.msra.mxu0 0
        %984 = vmatprep.subr.bf16.mxu0 0
        %985 = vmatpush1.bf16.msra.mxu0 0
        %986 = vmatprep.subr.bf16.mxu0 0
        %987 = vmatpush1.bf16.msra.mxu0 0
        %988 = vmatprep.mubr.bf16.mxu0 0
        %989 = vmatmul.mubr.bf16.gmra.mrb[0].mxu0 %v942
        %v990 = vpop.f32.mrb[0].mxu0
        %v991 = vadd.f32 0.0, %v990
        %v992 = vpop.f32.mrb[0].mxu0
        %v993 = vpop.f32.mrb[0].mxu0
        %v994 = vadd.f32 0.0, %v993
        %v995 = vpop.f32.mrb[0].mxu0
        %996 = vmatprep.mubr.bf16.mxu0 0
        %997 = vmatmul.mubr.bf16.gmra.mrb[0].mxu0 %v945
        %v998 = vpop.f32.mrb[0].mxu0
        %v999 = vadd.f32 0.0, %v998
        %v1000 = vpop.f32.mrb[0].mxu0
        %v1001 = vpop.f32.mrb[0].mxu0
        %v1002 = vadd.f32 0.0, %v1001
        %v1003 = vpop.f32.mrb[0].mxu0
        %1004 = vmatprep.mubr.bf16.mxu0 0
        %1005 = vmatmul.mubr.bf16.gmra.mrb[0].mxu0 %v948
        %v1006 = vpop.f32.mrb[0].mxu0
        %v1007 = vadd.f32 0.0, %v1006
        %v1008 = vpop.f32.mrb[0].mxu0
        %v1009 = vpop.f32.mrb[0].mxu0
        %v1010 = vadd.f32 0.0, %v1009
        %v1011 = vpop.f32.mrb[0].mxu0
        %1012 = vmatprep.mubr.bf16.mxu0 0
        %1013 = vmatmul.mubr.bf16.gmra.mrb[0].mxu0 %v951
        %v1014 = vpop.f32.mrb[0].mxu0
        %v1015 = vadd.f32 0.0, %v1014
        %v1016 = vpop.f32.mrb[0].mxu0
        %v1017 = vpop.f32.mrb[0].mxu0
        %v1018 = vadd.f32 0.0, %v1017
        %v1019 = vpop.f32.mrb[0].mxu0
        %1020 = vmatprep.mubr.bf16.mxu0 0
        %1021 = vmatmul.mubr.bf16.gmra.mrb[0].mxu0 %v954
        %v1022 = vpop.f32.mrb[0].mxu0
        %v1023 = vadd.f32 0.0, %v1022
        %v1024 = vpop.f32.mrb[0].mxu0
        %v1025 = vpop.f32.mrb[0].mxu0
        %v1026 = vpop.f32.mrb[0].mxu0
        %1027 = vdwg.mxu0
        %v1028 = vadd.f32 %v851, %v991
        %v1029 = vadd.f32 %v852, %v994
        %v1030 = vadd.f32 %v853, %v999
        %v1031 = vadd.f32 %v854, %v1002
        %v1032 = vadd.f32 %v855, %v1007
        %v1033 = vadd.f32 %v856, %v1010
        %v1034 = vadd.f32 %v857, %v1015
        %v1035 = vadd.f32 %v858, %v1018
        %v1036 = vadd.f32 %v859, %v1023
        %1037 = vst.msk [vmem:[#allocation3] sm:$0xff] %vm840, %v1028
        %1038 = vst.msk [vmem:[#allocation3 + $0x8] sm:$0xff] %vm840, %v1029
        %1039 = vst.msk [vmem:[#allocation3 + $0x10] sm:$0xff] %vm840, %v1030
        %1040 = vst.msk [vmem:[#allocation3 + $0x18] sm:$0xff] %vm840, %v1031
        %1041 = vst.msk [vmem:[#allocation3 + $0x20] sm:$0xff] %vm840, %v1032
        %1042 = vst.msk [vmem:[#allocation3 + $0x28] sm:$0xff] %vm840, %v1033
        %1043 = vst.msk [vmem:[#allocation3 + $0x30] sm:$0xff] %vm840, %v1034
        %1044 = vst.msk [vmem:[#allocation3 + $0x38] sm:$0xff] %vm840, %v1035
        %1045 = vst.msk [vmem:[#allocation3 + $0x40] sm:$0x3f] %vm849, %v1036
        %v1046 = vld [vmem:[#allocation3] sm:$0xff]
        %v1047 = vld [vmem:[#allocation3 + $0x8] sm:$0xff]
        %v1048 = vld [vmem:[#allocation3 + $0x10] sm:$0xff]
        %v1049 = vld [vmem:[#allocation3 + $0x18] sm:$0xff]
        %v1050 = vld [vmem:[#allocation3 + $0x20] sm:$0xff]
        %v1051 = vld [vmem:[#allocation3 + $0x28] sm:$0xff]
        %v1052 = vld [vmem:[#allocation3 + $0x30] sm:$0xff]
        %v1053 = vld [vmem:[#allocation3 + $0x38] sm:$0xff]
        %v1054 = vld [vmem:[#allocation3 + $0x40] sm:$0x3f]
        %v1055 = vld [vmem:[#allocation2] sm:$0xe]
        %v1056 = vld [vmem:[#allocation2 + $0x4] sm:$0xf]
        %v1057 = vld [vmem:[#allocation2 + $0x8] sm:$0xf]
        %v1058 = vld [vmem:[#allocation2 + $0xc] sm:$0xf]
        %v1059 = vld [vmem:[#allocation2 + $0x10] sm:$0xf]
        %v1060 = vld [vmem:[#allocation2 + $0x14] sm:$0xf]
        %v1061 = vld [vmem:[#allocation2 + $0x18] sm:$0xf]
        %v1062 = vld [vmem:[#allocation2 + $0x1c] sm:$0xf]
        %v1063 = vld [vmem:[#allocation2 + $0x20] sm:$0xf]
        %s1064 = scalar_lea.vmem %s3, 16
        %v1065 = vld [vmem:[%s1064] sm:$0xf]
        %v1066 = vld [vmem:[%s1064 + $0x4] sm:$0xf]
        %v1076 = vunpack.c.l.b16 %v1055
        %v1077 = vunpack.c.l.b16 %v1056
        %v1078 = vunpack.c.l.b16 %v1057
        %v1079 = vunpack.c.l.b16 %v1058
        %v1080 = vunpack.c.l.b16 %v1059
        %v1081 = vunpack.c.l.b16 %v1060
        %v1082 = vunpack.c.l.b16 %v1061
        %v1083 = vunpack.c.l.b16 %v1062
        %v1084 = vunpack.c.l.b16 %v1063
        %v1085 = vpack.c.b16 %v1077, %v1076
        %v1086 = vpack.c.b16 %v1079, %v1078
        %v1087 = vpack.c.b16 %v1081, %v1080
        %v1088 = vpack.c.b16 %v1083, %v1082
        %v1089 = vpack.c.b16 %v1084, %v1084
        %vm1090 = vcmask 1046528
        %v1091 = vrot.slane %v1085, 1
        %v1092 = vrot.slane %v1086, 1
        %v1093 = vsel %vm1090, %v1091, %v1092
        %v1094 = vrot.slane %v1087, 1
        %v1095 = vsel %vm1090, %v1092, %v1094
        %v1096 = vrot.slane %v1088, 1
        %v1097 = vsel %vm1090, %v1094, %v1096
        %v1098 = vrot.slane %v1089, 1
        %v1099 = vsel %vm1090, %v1096, %v1098
        %v1102 = vunpack.c.l.b16 %v1065
        %v1103 = vunpack.c.l.b16 %v1066
        %v1104 = vpack.c.b16 %v1103, %v1102
        %v1107 = vsel %vm752, %v1093, 0
        %v1110 = vsel %vm752, %v1095, 0
        %v1113 = vsel %vm752, %v1097, 0
        %v1116 = vsel %vm752, %v1099, 0
        %v1119 = vsel %vm752, %v1098, 0
        %1121 = vmatprep.subr.bf16.mxu0 0
        %1122 = vmatpush1.bf16.msra.mxu0 %v1104
        %1123 = vmatprep.subr.bf16.mxu0 0
        %1124 = vmatpush1.bf16.msra.mxu0 0
        %1125 = vmatprep.subr.bf16.mxu0 0
        %1126 = vmatpush1.bf16.msra.mxu0 0
        %1127 = vmatprep.subr.bf16.mxu0 0
        %1128 = vmatpush1.bf16.msra.mxu0 0
        %1129 = vmatprep.subr.bf16.mxu0 0
        %1130 = vmatpush1.bf16.msra.mxu0 0
        %1131 = vmatprep.subr.bf16.mxu0 0
        %1132 = vmatpush1.bf16.msra.mxu0 0
        %1133 = vmatprep.subr.bf16.mxu0 0
        %1134 = vmatpush1.bf16.msra.mxu0 0
        %1135 = vmatprep.subr.bf16.mxu0 0
        %1136 = vmatpush1.bf16.msra.mxu0 0
        %1137 = vmatprep.subr.bf16.mxu0 0
        %1138 = vmatpush1.bf16.msra.mxu0 0
        %1139 = vmatprep.subr.bf16.mxu0 0
        %1140 = vmatpush1.bf16.msra.mxu0 0
        %1141 = vmatprep.subr.bf16.mxu0 0
        %1142 = vmatpush1.bf16.msra.mxu0 0
        %1143 = vmatprep.subr.bf16.mxu0 0
        %1144 = vmatpush1.bf16.msra.mxu0 0
        %1145 = vmatprep.subr.bf16.mxu0 0
        %1146 = vmatpush1.bf16.msra.mxu0 0
        %1147 = vmatprep.subr.bf16.mxu0 0
        %1148 = vmatpush1.bf16.msra.mxu0 0
        %1149 = vmatprep.subr.bf16.mxu0 0
        %1150 = vmatpush1.bf16.msra.mxu0 0
        %1151 = vmatprep.subr.bf16.mxu0 0
        %1152 = vmatpush1.bf16.msra.mxu0 0
        %1153 = vmatprep.mubr.bf16.mxu0 0
        %1154 = vmatmul.mubr.bf16.gmra.mrb[0].mxu0 %v1107
        %v1155 = vpop.f32.mrb[0].mxu0
        %v1156 = vadd.f32 0.0, %v1155
        %v1157 = vpop.f32.mrb[0].mxu0
        %v1158 = vpop.f32.mrb[0].mxu0
        %v1159 = vadd.f32 0.0, %v1158
        %v1160 = vpop.f32.mrb[0].mxu0
        %1161 = vmatprep.mubr.bf16.mxu0 0
        %1162 = vmatmul.mubr.bf16.gmra.mrb[0].mxu0 %v1110
        %v1163 = vpop.f32.mrb[0].mxu0
        %v1164 = vadd.f32 0.0, %v1163
        %v1165 = vpop.f32.mrb[0].mxu0
        %v1166 = vpop.f32.mrb[0].mxu0
        %v1167 = vadd.f32 0.0, %v1166
        %v1168 = vpop.f32.mrb[0].mxu0
        %1169 = vmatprep.mubr.bf16.mxu0 0
        %1170 = vmatmul.mubr.bf16.gmra.mrb[0].mxu0 %v1113
        %v1171 = vpop.f32.mrb[0].mxu0
        %v1172 = vadd.f32 0.0, %v1171
        %v1173 = vpop.f32.mrb[0].mxu0
        %v1174 = vpop.f32.mrb[0].mxu0
        %v1175 = vadd.f32 0.0, %v1174
        %v1176 = vpop.f32.mrb[0].mxu0
        %1177 = vmatprep.mubr.bf16.mxu0 0
        %1178 = vmatmul.mubr.bf16.gmra.mrb[0].mxu0 %v1116
        %v1179 = vpop.f32.mrb[0].mxu0
        %v1180 = vadd.f32 0.0, %v1179
        %v1181 = vpop.f32.mrb[0].mxu0
        %v1182 = vpop.f32.mrb[0].mxu0
        %v1183 = vadd.f32 0.0, %v1182
        %v1184 = vpop.f32.mrb[0].mxu0
        %1185 = vmatprep.mubr.bf16.mxu0 0
        %1186 = vmatmul.mubr.bf16.gmra.mrb[0].mxu0 %v1119
        %v1187 = vpop.f32.mrb[0].mxu0
        %v1188 = vadd.f32 0.0, %v1187
        %v1189 = vpop.f32.mrb[0].mxu0
        %v1190 = vpop.f32.mrb[0].mxu0
        %v1191 = vpop.f32.mrb[0].mxu0
        %1192 = vdwg.mxu0
        %v1193 = vadd.f32 %v1046, %v1156
        %v1194 = vadd.f32 %v1047, %v1159
        %v1195 = vadd.f32 %v1048, %v1164
        %v1196 = vadd.f32 %v1049, %v1167
        %v1197 = vadd.f32 %v1050, %v1172
        %v1198 = vadd.f32 %v1051, %v1175
        %v1199 = vadd.f32 %v1052, %v1180
        %v1200 = vadd.f32 %v1053, %v1183
        %v1201 = vadd.f32 %v1054, %v1188
        %1202 = vst.msk [vmem:[#allocation3] sm:$0xff] %vm840, %v1193
        %1203 = vst.msk [vmem:[#allocation3 + $0x8] sm:$0xff] %vm840, %v1194
        %1204 = vst.msk [vmem:[#allocation3 + $0x10] sm:$0xff] %vm840, %v1195
        %1205 = vst.msk [vmem:[#allocation3 + $0x18] sm:$0xff] %vm840, %v1196
        %1206 = vst.msk [vmem:[#allocation3 + $0x20] sm:$0xff] %vm840, %v1197
        %1207 = vst.msk [vmem:[#allocation3 + $0x28] sm:$0xff] %vm840, %v1198
        %1208 = vst.msk [vmem:[#allocation3 + $0x30] sm:$0xff] %vm840, %v1199
        %1209 = vst.msk [vmem:[#allocation3 + $0x38] sm:$0xff] %vm840, %v1200
        %1210 = vst.msk [vmem:[#allocation3 + $0x40] sm:$0x3f] %vm849, %v1201
        %v1211 = vld [vmem:[#allocation3] sm:$0xff]
        %v1212 = vld [vmem:[#allocation3 + $0x8] sm:$0xff]
        %v1213 = vld [vmem:[#allocation3 + $0x10] sm:$0xff]
        %v1214 = vld [vmem:[#allocation3 + $0x18] sm:$0xff]
        %v1215 = vld [vmem:[#allocation3 + $0x20] sm:$0xff]
        %v1216 = vld [vmem:[#allocation3 + $0x28] sm:$0xff]
        %v1217 = vld [vmem:[#allocation3 + $0x30] sm:$0xff]
        %v1218 = vld [vmem:[#allocation3 + $0x38] sm:$0xff]
        %v1219 = vld [vmem:[#allocation3 + $0x40] sm:$0x3f]
        %v1220 = vld [vmem:[#allocation2 + $0x4] sm:$0x8]
        %v1221 = vld [vmem:[#allocation2 + $0x8] sm:$0xf]
        %v1222 = vld [vmem:[#allocation2 + $0xc] sm:$0xf]
        %v1223 = vld [vmem:[#allocation2 + $0x10] sm:$0xf]
        %v1224 = vld [vmem:[#allocation2 + $0x14] sm:$0xf]
        %v1225 = vld [vmem:[#allocation2 + $0x18] sm:$0xf]
        %v1226 = vld [vmem:[#allocation2 + $0x1c] sm:$0xf]
        %v1227 = vld [vmem:[#allocation2 + $0x20] sm:$0xf]
        %v1228 = vld [vmem:[#allocation2 + $0x24] sm:$0xf]
        %v1229 = vld [vmem:[#allocation2 + $0x28] sm:$0x3]
        %s1230 = scalar_lea.vmem %s3, 24
        %v1231 = vld [vmem:[%s1230] sm:$0xf]
        %v1232 = vld [vmem:[%s1230 + $0x4] sm:$0xf]
        %v1243 = vunpack.c.l.b16 %v1220
        %v1244 = vunpack.c.l.b16 %v1221
        %v1245 = vunpack.c.l.b16 %v1222
        %v1246 = vunpack.c.l.b16 %v1223
        %v1247 = vunpack.c.l.b16 %v1224
        %v1248 = vunpack.c.l.b16 %v1225
        %v1249 = vunpack.c.l.b16 %v1226
        %v1250 = vunpack.c.l.b16 %v1227
        %v1251 = vunpack.c.l.b16 %v1228
        %v1252 = vunpack.c.l.b16 %v1229
        %v1253 = vpack.c.b16 %v1244, %v1243
        %v1254 = vpack.c.b16 %v1246, %v1245
        %v1255 = vpack.c.b16 %v1248, %v1247
        %v1256 = vpack.c.b16 %v1250, %v1249
        %v1257 = vpack.c.b16 %v1252, %v1251
        %vm1258 = vcmask 1044480
        %v1259 = vrot.slane %v1253, 3
        %v1260 = vrot.slane %v1254, 3
        %v1261 = vsel %vm1258, %v1259, %v1260
        %v1262 = vrot.slane %v1255, 3
        %v1263 = vsel %vm1258, %v1260, %v1262
        %v1264 = vrot.slane %v1256, 3
        %v1265 = vsel %vm1258, %v1262, %v1264
        %v1266 = vrot.slane %v1257, 3
        %v1267 = vsel %vm1258, %v1264, %v1266
        %v1270 = vunpack.c.l.b16 %v1231
        %v1271 = vunpack.c.l.b16 %v1232
        %v1272 = vpack.c.b16 %v1271, %v1270
        %v1275 = vsel %vm752, %v1261, 0
        %v1278 = vsel %vm752, %v1263, 0
        %v1281 = vsel %vm752, %v1265, 0
        %v1284 = vsel %vm752, %v1267, 0
        %v1287 = vsel %vm752, %v1266, 0
        %1289 = vmatprep.subr.bf16.mxu0 0
        %1290 = vmatpush1.bf16.msra.mxu0 %v1272
        %1291 = vmatprep.subr.bf16.mxu0 0
        %1292 = vmatpush1.bf16.msra.mxu0 0
        %1293 = vmatprep.subr.bf16.mxu0 0
        %1294 = vmatpush1.bf16.msra.mxu0 0
        %1295 = vmatprep.subr.bf16.mxu0 0
        %1296 = vmatpush1.bf16.msra.mxu0 0
        %1297 = vmatprep.subr.bf16.mxu0 0
        %1298 = vmatpush1.bf16.msra.mxu0 0
        %1299 = vmatprep.subr.bf16.mxu0 0
        %1300 = vmatpush1.bf16.msra.mxu0 0
        %1301 = vmatprep.subr.bf16.mxu0 0
        %1302 = vmatpush1.bf16.msra.mxu0 0
        %1303 = vmatprep.subr.bf16.mxu0 0
        %1304 = vmatpush1.bf16.msra.mxu0 0
        %1305 = vmatprep.subr.bf16.mxu0 0
        %1306 = vmatpush1.bf16.msra.mxu0 0
        %1307 = vmatprep.subr.bf16.mxu0 0
        %1308 = vmatpush1.bf16.msra.mxu0 0
        %1309 = vmatprep.subr.bf16.mxu0 0
        %1310 = vmatpush1.bf16.msra.mxu0 0
        %1311 = vmatprep.subr.bf16.mxu0 0
        %1312 = vmatpush1.bf16.msra.mxu0 0
        %1313 = vmatprep.subr.bf16.mxu0 0
        %1314 = vmatpush1.bf16.msra.mxu0 0
        %1315 = vmatprep.subr.bf16.mxu0 0
        %1316 = vmatpush1.bf16.msra.mxu0 0
        %1317 = vmatprep.subr.bf16.mxu0 0
        %1318 = vmatpush1.bf16.msra.mxu0 0
        %1319 = vmatprep.subr.bf16.mxu0 0
        %1320 = vmatpush1.bf16.msra.mxu0 0
        %1321 = vmatprep.mubr.bf16.mxu0 0
        %1322 = vmatmul.mubr.bf16.gmra.mrb[0].mxu0 %v1275
        %v1323 = vpop.f32.mrb[0].mxu0
        %v1324 = vadd.f32 0.0, %v1323
        %v1325 = vpop.f32.mrb[0].mxu0
        %v1326 = vpop.f32.mrb[0].mxu0
        %v1327 = vadd.f32 0.0, %v1326
        %v1328 = vpop.f32.mrb[0].mxu0
        %1329 = vmatprep.mubr.bf16.mxu0 0
        %1330 = vmatmul.mubr.bf16.gmra.mrb[0].mxu0 %v1278
        %v1331 = vpop.f32.mrb[0].mxu0
        %v1332 = vadd.f32 0.0, %v1331
        %v1333 = vpop.f32.mrb[0].mxu0
        %v1334 = vpop.f32.mrb[0].mxu0
        %v1335 = vadd.f32 0.0, %v1334
        %v1336 = vpop.f32.mrb[0].mxu0
        %1337 = vmatprep.mubr.bf16.mxu0 0
        %1338 = vmatmul.mubr.bf16.gmra.mrb[0].mxu0 %v1281
        %v1339 = vpop.f32.mrb[0].mxu0
        %v1340 = vadd.f32 0.0, %v1339
        %v1341 = vpop.f32.mrb[0].mxu0
        %v1342 = vpop.f32.mrb[0].mxu0
        %v1343 = vadd.f32 0.0, %v1342
        %v1344 = vpop.f32.mrb[0].mxu0
        %1345 = vmatprep.mubr.bf16.mxu0 0
        %1346 = vmatmul.mubr.bf16.gmra.mrb[0].mxu0 %v1284
        %v1347 = vpop.f32.mrb[0].mxu0
        %v1348 = vadd.f32 0.0, %v1347
        %v1349 = vpop.f32.mrb[0].mxu0
        %v1350 = vpop.f32.mrb[0].mxu0
        %v1351 = vadd.f32 0.0, %v1350
        %v1352 = vpop.f32.mrb[0].mxu0
        %1353 = vmatprep.mubr.bf16.mxu0 0
        %1354 = vmatmul.mubr.bf16.gmra.mrb[0].mxu0 %v1287
        %v1355 = vpop.f32.mrb[0].mxu0
        %v1356 = vadd.f32 0.0, %v1355
        %v1357 = vpop.f32.mrb[0].mxu0
        %v1358 = vpop.f32.mrb[0].mxu0
        %v1359 = vpop.f32.mrb[0].mxu0
        %1360 = vdwg.mxu0
        %v1361 = vadd.f32 %v1211, %v1324
        %v1362 = vadd.f32 %v1212, %v1327
        %v1363 = vadd.f32 %v1213, %v1332
        %v1364 = vadd.f32 %v1214, %v1335
        %v1365 = vadd.f32 %v1215, %v1340
        %v1366 = vadd.f32 %v1216, %v1343
        %v1367 = vadd.f32 %v1217, %v1348
        %v1368 = vadd.f32 %v1218, %v1351
        %v1369 = vadd.f32 %v1219, %v1356
        %1370 = vst.msk [vmem:[#allocation3] sm:$0xff] %vm840, %v1361
        %1371 = vst.msk [vmem:[#allocation3 + $0x8] sm:$0xff] %vm840, %v1362
        %1372 = vst.msk [vmem:[#allocation3 + $0x10] sm:$0xff] %vm840, %v1363
        %1373 = vst.msk [vmem:[#allocation3 + $0x18] sm:$0xff] %vm840, %v1364
        %1374 = vst.msk [vmem:[#allocation3 + $0x20] sm:$0xff] %vm840, %v1365
        %1375 = vst.msk [vmem:[#allocation3 + $0x28] sm:$0xff] %vm840, %v1366
        %1376 = vst.msk [vmem:[#allocation3 + $0x30] sm:$0xff] %vm840, %v1367
        %1377 = vst.msk [vmem:[#allocation3 + $0x38] sm:$0xff] %vm840, %v1368
        %1378 = vst.msk [vmem:[#allocation3 + $0x40] sm:$0x3f] %vm849, %v1369
        %v1379 = vld [vmem:[#allocation3] sm:$0xff]
        %v1380 = vld [vmem:[#allocation3 + $0x8] sm:$0xff]
        %v1381 = vld [vmem:[#allocation3 + $0x10] sm:$0xff]
        %v1382 = vld [vmem:[#allocation3 + $0x18] sm:$0xff]
        %v1383 = vld [vmem:[#allocation3 + $0x20] sm:$0xff]
        %v1384 = vld [vmem:[#allocation3 + $0x28] sm:$0xff]
        %v1385 = vld [vmem:[#allocation3 + $0x30] sm:$0xff]
        %v1386 = vld [vmem:[#allocation3 + $0x38] sm:$0xff]
        %v1387 = vld [vmem:[#allocation3 + $0x40] sm:$0x3f]
        %v1388 = vld [vmem:[#allocation2 + $0x4] sm:$0x8]
        %v1389 = vld [vmem:[#allocation2 + $0x8] sm:$0xf]
        %v1390 = vld [vmem:[#allocation2 + $0xc] sm:$0xf]
        %v1391 = vld [vmem:[#allocation2 + $0x10] sm:$0xf]
        %v1392 = vld [vmem:[#allocation2 + $0x14] sm:$0xf]
        %v1393 = vld [vmem:[#allocation2 + $0x18] sm:$0xf]
        %v1394 = vld [vmem:[#allocation2 + $0x1c] sm:$0xf]
        %v1395 = vld [vmem:[#allocation2 + $0x20] sm:$0xf]
        %v1396 = vld [vmem:[#allocation2 + $0x24] sm:$0xf]
        %v1397 = vld [vmem:[#allocation2 + $0x28] sm:$0x7]
        %s1398 = scalar_lea.vmem %s3, 32
        %v1399 = vld [vmem:[%s1398] sm:$0xf]
        %v1400 = vld [vmem:[%s1398 + $0x4] sm:$0xf]
        %v1411 = vunpack.c.l.b16 %v1388
        %v1412 = vunpack.c.l.b16 %v1389
        %v1413 = vunpack.c.l.b16 %v1390
        %v1414 = vunpack.c.l.b16 %v1391
        %v1415 = vunpack.c.l.b16 %v1392
        %v1416 = vunpack.c.l.b16 %v1393
        %v1417 = vunpack.c.l.b16 %v1394
        %v1418 = vunpack.c.l.b16 %v1395
        %v1419 = vunpack.c.l.b16 %v1396
        %v1420 = vunpack.c.l.b16 %v1397
        %v1421 = vpack.c.b16 %v1412, %v1411
        %v1422 = vpack.c.b16 %v1414, %v1413
        %v1423 = vpack.c.b16 %v1416, %v1415
        %v1424 = vpack.c.b16 %v1418, %v1417
        %v1425 = vpack.c.b16 %v1420, %v1419
        %vm1426 = vsmask.f32 4352
        %v1428 = vshrl.u32 %v1421, 16
        %v1430 = vrot.slane %v1428, 3
        %v1431 = vshll.u32 %v1421, 16
        %v1433 = vrot.slane %v1431, 4
        %v1434 = vor.u32 %v1430, %v1433
        %v1436 = vshrl.u32 %v1422, 16
        %v1438 = vrot.slane %v1436, 3
        %v1439 = vshll.u32 %v1422, 16
        %v1441 = vrot.slane %v1439, 4
        %v1442 = vor.u32 %v1438, %v1441
        %v1443 = vsel %vm1426, %v1434, %v1442
        %v1445 = vshrl.u32 %v1423, 16
        %v1447 = vrot.slane %v1445, 3
        %v1448 = vshll.u32 %v1423, 16
        %v1450 = vrot.slane %v1448, 4
        %v1451 = vor.u32 %v1447, %v1450
        %v1452 = vsel %vm1426, %v1442, %v1451
        %v1454 = vshrl.u32 %v1424, 16
        %v1456 = vrot.slane %v1454, 3
        %v1457 = vshll.u32 %v1424, 16
        %v1459 = vrot.slane %v1457, 4
        %v1460 = vor.u32 %v1456, %v1459
        %v1461 = vsel %vm1426, %v1451, %v1460
        %v1463 = vshrl.u32 %v1425, 16
        %v1465 = vrot.slane %v1463, 3
        %v1466 = vshll.u32 %v1425, 16
        %v1468 = vrot.slane %v1466, 4
        %v1469 = vor.u32 %v1465, %v1468
        %v1470 = vsel %vm1426, %v1460, %v1469
        %v1473 = vunpack.c.l.b16 %v1399
        %v1474 = vunpack.c.l.b16 %v1400
        %v1475 = vpack.c.b16 %v1474, %v1473
        %v1478 = vsel %vm752, %v1443, 0
        %v1481 = vsel %vm752, %v1452, 0
        %v1484 = vsel %vm752, %v1461, 0
        %v1487 = vsel %vm752, %v1470, 0
        %v1490 = vsel %vm752, %v1469, 0
        %1492 = vmatprep.subr.bf16.mxu0 0
        %1493 = vmatpush1.bf16.msra.mxu0 %v1475
        %1494 = vmatprep.subr.bf16.mxu0 0
        %1495 = vmatpush1.bf16.msra.mxu0 0
        %1496 = vmatprep.subr.bf16.mxu0 0
        %1497 = vmatpush1.bf16.msra.mxu0 0
        %1498 = vmatprep.subr.bf16.mxu0 0
        %1499 = vmatpush1.bf16.msra.mxu0 0
        %1500 = vmatprep.subr.bf16.mxu0 0
        %1501 = vmatpush1.bf16.msra.mxu0 0
        %1502 = vmatprep.subr.bf16.mxu0 0
        %1503 = vmatpush1.bf16.msra.mxu0 0
        %1504 = vmatprep.subr.bf16.mxu0 0
        %1505 = vmatpush1.bf16.msra.mxu0 0
        %1506 = vmatprep.subr.bf16.mxu0 0
        %1507 = vmatpush1.bf16.msra.mxu0 0
        %1508 = vmatprep.subr.bf16.mxu0 0
        %1509 = vmatpush1.bf16.msra.mxu0 0
        %1510 = vmatprep.subr.bf16.mxu0 0
        %1511 = vmatpush1.bf16.msra.mxu0 0
        %1512 = vmatprep.subr.bf16.mxu0 0
        %1513 = vmatpush1.bf16.msra.mxu0 0
        %1514 = vmatprep.subr.bf16.mxu0 0
        %1515 = vmatpush1.bf16.msra.mxu0 0
        %1516 = vmatprep.subr.bf16.mxu0 0
        %1517 = vmatpush1.bf16.msra.mxu0 0
        %1518 = vmatprep.subr.bf16.mxu0 0
        %1519 = vmatpush1.bf16.msra.mxu0 0
        %1520 = vmatprep.subr.bf16.mxu0 0
        %1521 = vmatpush1.bf16.msra.mxu0 0
        %1522 = vmatprep.subr.bf16.mxu0 0
        %1523 = vmatpush1.bf16.msra.mxu0 0
        %1524 = vmatprep.mubr.bf16.mxu0 0
        %1525 = vmatmul.mubr.bf16.gmra.mrb[0].mxu0 %v1478
        %v1526 = vpop.f32.mrb[0].mxu0
        %v1527 = vadd.f32 0.0, %v1526
        %v1528 = vpop.f32.mrb[0].mxu0
        %v1529 = vpop.f32.mrb[0].mxu0
        %v1530 = vadd.f32 0.0, %v1529
        %v1531 = vpop.f32.mrb[0].mxu0
        %1532 = vmatprep.mubr.bf16.mxu0 0
        %1533 = vmatmul.mubr.bf16.gmra.mrb[0].mxu0 %v1481
        %v1534 = vpop.f32.mrb[0].mxu0
        %v1535 = vadd.f32 0.0, %v1534
        %v1536 = vpop.f32.mrb[0].mxu0
        %v1537 = vpop.f32.mrb[0].mxu0
        %v1538 = vadd.f32 0.0, %v1537
        %v1539 = vpop.f32.mrb[0].mxu0
        %1540 = vmatprep.mubr.bf16.mxu0 0
        %1541 = vmatmul.mubr.bf16.gmra.mrb[0].mxu0 %v1484
        %v1542 = vpop.f32.mrb[0].mxu0
        %v1543 = vadd.f32 0.0, %v1542
        %v1544 = vpop.f32.mrb[0].mxu0
        %v1545 = vpop.f32.mrb[0].mxu0
        %v1546 = vadd.f32 0.0, %v1545
        %v1547 = vpop.f32.mrb[0].mxu0
        %1548 = vmatprep.mubr.bf16.mxu0 0
        %1549 = vmatmul.mubr.bf16.gmra.mrb[0].mxu0 %v1487
        %v1550 = vpop.f32.mrb[0].mxu0
        %v1551 = vadd.f32 0.0, %v1550
        %v1552 = vpop.f32.mrb[0].mxu0
        %v1553 = vpop.f32.mrb[0].mxu0
        %v1554 = vadd.f32 0.0, %v1553
        %v1555 = vpop.f32.mrb[0].mxu0
        %1556 = vmatprep.mubr.bf16.mxu0 0
        %1557 = vmatmul.mubr.bf16.gmra.mrb[0].mxu0 %v1490
        %v1558 = vpop.f32.mrb[0].mxu0
        %v1559 = vadd.f32 0.0, %v1558
        %v1560 = vpop.f32.mrb[0].mxu0
        %v1561 = vpop.f32.mrb[0].mxu0
        %v1562 = vpop.f32.mrb[0].mxu0
        %1563 = vdwg.mxu0
        %v1564 = vadd.f32 %v1379, %v1527
        %v1565 = vadd.f32 %v1380, %v1530
        %v1566 = vadd.f32 %v1381, %v1535
        %v1567 = vadd.f32 %v1382, %v1538
        %v1568 = vadd.f32 %v1383, %v1543
        %v1569 = vadd.f32 %v1384, %v1546
        %v1570 = vadd.f32 %v1385, %v1551
        %v1571 = vadd.f32 %v1386, %v1554
        %v1572 = vadd.f32 %v1387, %v1559
        %1573 = vst.msk [vmem:[#allocation3] sm:$0xff] %vm840, %v1564
        %1574 = vst.msk [vmem:[#allocation3 + $0x8] sm:$0xff] %vm840, %v1565
        %1575 = vst.msk [vmem:[#allocation3 + $0x10] sm:$0xff] %vm840, %v1566
        %1576 = vst.msk [vmem:[#allocation3 + $0x18] sm:$0xff] %vm840, %v1567
        %1577 = vst.msk [vmem:[#allocation3 + $0x20] sm:$0xff] %vm840, %v1568
        %1578 = vst.msk [vmem:[#allocation3 + $0x28] sm:$0xff] %vm840, %v1569
        %1579 = vst.msk [vmem:[#allocation3 + $0x30] sm:$0xff] %vm840, %v1570
        %1580 = vst.msk [vmem:[#allocation3 + $0x38] sm:$0xff] %vm840, %v1571
        %1581 = vst.msk [vmem:[#allocation3 + $0x40] sm:$0x3f] %vm849, %v1572
        %v1582 = vld [vmem:[#allocation3] sm:$0xff]
        %v1583 = vld [vmem:[#allocation3 + $0x8] sm:$0xff]
        %v1584 = vld [vmem:[#allocation3 + $0x10] sm:$0xff]
        %v1585 = vld [vmem:[#allocation3 + $0x18] sm:$0xff]
        %v1586 = vld [vmem:[#allocation3 + $0x20] sm:$0xff]
        %v1587 = vld [vmem:[#allocation3 + $0x28] sm:$0xff]
        %v1588 = vld [vmem:[#allocation3 + $0x30] sm:$0xff]
        %v1589 = vld [vmem:[#allocation3 + $0x38] sm:$0xff]
        %v1590 = vld [vmem:[#allocation3 + $0x40] sm:$0x3f]
        %v1591 = vld [vmem:[#allocation2 + $0x8] sm:$0xf]
        %v1592 = vld [vmem:[#allocation2 + $0xc] sm:$0xf]
        %v1593 = vld [vmem:[#allocation2 + $0x10] sm:$0xf]
        %v1594 = vld [vmem:[#allocation2 + $0x14] sm:$0xf]
        %v1595 = vld [vmem:[#allocation2 + $0x18] sm:$0xf]
        %v1596 = vld [vmem:[#allocation2 + $0x1c] sm:$0xf]
        %v1597 = vld [vmem:[#allocation2 + $0x20] sm:$0xf]
        %v1598 = vld [vmem:[#allocation2 + $0x24] sm:$0xf]
        %v1599 = vld [vmem:[#allocation2 + $0x28] sm:$0x7]
        %s1600 = scalar_lea.vmem %s3, 40
        %v1601 = vld [vmem:[%s1600] sm:$0xf]
        %v1602 = vld [vmem:[%s1600 + $0x4] sm:$0xf]
        %v1612 = vunpack.c.l.b16 %v1591
        %v1613 = vunpack.c.l.b16 %v1592
        %v1614 = vunpack.c.l.b16 %v1593
        %v1615 = vunpack.c.l.b16 %v1594
        %v1616 = vunpack.c.l.b16 %v1595
        %v1617 = vunpack.c.l.b16 %v1596
        %v1618 = vunpack.c.l.b16 %v1597
        %v1619 = vunpack.c.l.b16 %v1598
        %v1620 = vunpack.c.l.b16 %v1599
        %v1621 = vpack.c.b16 %v1613, %v1612
        %v1622 = vpack.c.b16 %v1615, %v1614
        %v1623 = vpack.c.b16 %v1617, %v1616
        %v1624 = vpack.c.b16 %v1619, %v1618
        %v1625 = vpack.c.b16 %v1620, %v1620
        %v1628 = vunpack.c.l.b16 %v1601
        %v1629 = vunpack.c.l.b16 %v1602
        %v1630 = vpack.c.b16 %v1629, %v1628
        %v1633 = vsel %vm752, %v1621, 0
        %v1636 = vsel %vm752, %v1622, 0
        %v1639 = vsel %vm752, %v1623, 0
        %v1642 = vsel %vm752, %v1624, 0
        %v1645 = vsel %vm752, %v1625, 0
        %1647 = vmatprep.subr.bf16.mxu0 0
        %1648 = vmatpush1.bf16.msra.mxu0 %v1630
        %1649 = vmatprep.subr.bf16.mxu0 0
        %1650 = vmatpush1.bf16.msra.mxu0 0
        %1651 = vmatprep.subr.bf16.mxu0 0
        %1652 = vmatpush1.bf16.msra.mxu0 0
        %1653 = vmatprep.subr.bf16.mxu0 0
        %1654 = vmatpush1.bf16.msra.mxu0 0
        %1655 = vmatprep.subr.bf16.mxu0 0
        %1656 = vmatpush1.bf16.msra.mxu0 0
        %1657 = vmatprep.subr.bf16.mxu0 0
        %1658 = vmatpush1.bf16.msra.mxu0 0
        %1659 = vmatprep.subr.bf16.mxu0 0
        %1660 = vmatpush1.bf16.msra.mxu0 0
        %1661 = vmatprep.subr.bf16.mxu0 0
        %1662 = vmatpush1.bf16.msra.mxu0 0
        %1663 = vmatprep.subr.bf16.mxu0 0
        %1664 = vmatpush1.bf16.msra.mxu0 0
        %1665 = vmatprep.subr.bf16.mxu0 0
        %1666 = vmatpush1.bf16.msra.mxu0 0
        %1667 = vmatprep.subr.bf16.mxu0 0
        %1668 = vmatpush1.bf16.msra.mxu0 0
        %1669 = vmatprep.subr.bf16.mxu0 0
        %1670 = vmatpush1.bf16.msra.mxu0 0
        %1671 = vmatprep.subr.bf16.mxu0 0
        %1672 = vmatpush1.bf16.msra.mxu0 0
        %1673 = vmatprep.subr.bf16.mxu0 0
        %1674 = vmatpush1.bf16.msra.mxu0 0
        %1675 = vmatprep.subr.bf16.mxu0 0
        %1676 = vmatpush1.bf16.msra.mxu0 0
        %1677 = vmatprep.subr.bf16.mxu0 0
        %1678 = vmatpush1.bf16.msra.mxu0 0
        %1679 = vmatprep.mubr.bf16.mxu0 0
        %1680 = vmatmul.mubr.bf16.gmra.mrb[0].mxu0 %v1633
        %v1681 = vpop.f32.mrb[0].mxu0
        %v1682 = vadd.f32 0.0, %v1681
        %v1683 = vpop.f32.mrb[0].mxu0
        %v1684 = vpop.f32.mrb[0].mxu0
        %v1685 = vadd.f32 0.0, %v1684
        %v1686 = vpop.f32.mrb[0].mxu0
        %1687 = vmatprep.mubr.bf16.mxu0 0
        %1688 = vmatmul.mubr.bf16.gmra.mrb[0].mxu0 %v1636
        %v1689 = vpop.f32.mrb[0].mxu0
        %v1690 = vadd.f32 0.0, %v1689
        %v1691 = vpop.f32.mrb[0].mxu0
        %v1692 = vpop.f32.mrb[0].mxu0
        %v1693 = vadd.f32 0.0, %v1692
        %v1694 = vpop.f32.mrb[0].mxu0
        %1695 = vmatprep.mubr.bf16.mxu0 0
        %1696 = vmatmul.mubr.bf16.gmra.mrb[0].mxu0 %v1639
        %v1697 = vpop.f32.mrb[0].mxu0
        %v1698 = vadd.f32 0.0, %v1697
        %v1699 = vpop.f32.mrb[0].mxu0
        %v1700 = vpop.f32.mrb[0].mxu0
        %v1701 = vadd.f32 0.0, %v1700
        %v1702 = vpop.f32.mrb[0].mxu0
        %1703 = vmatprep.mubr.bf16.mxu0 0
        %1704 = vmatmul.mubr.bf16.gmra.mrb[0].mxu0 %v1642
        %v1705 = vpop.f32.mrb[0].mxu0
        %v1706 = vadd.f32 0.0, %v1705
        %v1707 = vpop.f32.mrb[0].mxu0
        %v1708 = vpop.f32.mrb[0].mxu0
        %v1709 = vadd.f32 0.0, %v1708
        %v1710 = vpop.f32.mrb[0].mxu0
        %1711 = vmatprep.mubr.bf16.mxu0 0
        %1712 = vmatmul.mubr.bf16.gmra.mrb[0].mxu0 %v1645
        %v1713 = vpop.f32.mrb[0].mxu0
        %v1714 = vadd.f32 0.0, %v1713
        %v1715 = vpop.f32.mrb[0].mxu0
        %v1716 = vpop.f32.mrb[0].mxu0
        %v1717 = vpop.f32.mrb[0].mxu0
        %1718 = vdwg.mxu0
        %v1719 = vadd.f32 %v1582, %v1682
        %v1720 = vadd.f32 %v1583, %v1685
        %v1721 = vadd.f32 %v1584, %v1690
        %v1722 = vadd.f32 %v1585, %v1693
        %v1723 = vadd.f32 %v1586, %v1698
        %v1724 = vadd.f32 %v1587, %v1701
        %v1725 = vadd.f32 %v1588, %v1706
        %v1726 = vadd.f32 %v1589, %v1709
        %v1727 = vadd.f32 %v1590, %v1714
        %1728 = vst.msk [vmem:[#allocation3] sm:$0xff] %vm840, %v1719
        %1729 = vst.msk [vmem:[#allocation3 + $0x8] sm:$0xff] %vm840, %v1720
        %1730 = vst.msk [vmem:[#allocation3 + $0x10] sm:$0xff] %vm840, %v1721
        %1731 = vst.msk [vmem:[#allocation3 + $0x18] sm:$0xff] %vm840, %v1722
        %1732 = vst.msk [vmem:[#allocation3 + $0x20] sm:$0xff] %vm840, %v1723
        %1733 = vst.msk [vmem:[#allocation3 + $0x28] sm:$0xff] %vm840, %v1724
        %1734 = vst.msk [vmem:[#allocation3 + $0x30] sm:$0xff] %vm840, %v1725
        %1735 = vst.msk [vmem:[#allocation3 + $0x38] sm:$0xff] %vm840, %v1726
        %1736 = vst.msk [vmem:[#allocation3 + $0x40] sm:$0x3f] %vm849, %v1727
        %v1737 = vld [vmem:[#allocation3] sm:$0xff]
        %v1738 = vld [vmem:[#allocation3 + $0x8] sm:$0xff]
        %v1739 = vld [vmem:[#allocation3 + $0x10] sm:$0xff]
        %v1740 = vld [vmem:[#allocation3 + $0x18] sm:$0xff]
        %v1741 = vld [vmem:[#allocation3 + $0x20] sm:$0xff]
        %v1742 = vld [vmem:[#allocation3 + $0x28] sm:$0xff]
        %v1743 = vld [vmem:[#allocation3 + $0x30] sm:$0xff]
        %v1744 = vld [vmem:[#allocation3 + $0x38] sm:$0xff]
        %v1745 = vld [vmem:[#allocation3 + $0x40] sm:$0x3f]
        %v1746 = vld [vmem:[#allocation2 + $0xc] sm:$0xc]
        %v1747 = vld [vmem:[#allocation2 + $0x10] sm:$0xf]
        %v1748 = vld [vmem:[#allocation2 + $0x14] sm:$0xf]
        %v1749 = vld [vmem:[#allocation2 + $0x18] sm:$0xf]
        %v1750 = vld [vmem:[#allocation2 + $0x1c] sm:$0xf]
        %v1751 = vld [vmem:[#allocation2 + $0x20] sm:$0xf]
        %v1752 = vld [vmem:[#allocation2 + $0x24] sm:$0xf]
        %v1753 = vld [vmem:[#allocation2 + $0x28] sm:$0xf]
        %v1754 = vld [vmem:[#allocation2 + $0x2c] sm:$0xf]
        %v1755 = vld [vmem:[#allocation2 + $0x30] sm:$0x1]
        %s1756 = scalar_lea.vmem %s3, 48
        %v1757 = vld [vmem:[%s1756] sm:$0xf]
        %v1758 = vld [vmem:[%s1756 + $0x4] sm:$0xf]
        %v1769 = vunpack.c.l.b16 %v1746
        %v1770 = vunpack.c.l.b16 %v1747
        %v1771 = vunpack.c.l.b16 %v1748
        %v1772 = vunpack.c.l.b16 %v1749
        %v1773 = vunpack.c.l.b16 %v1750
        %v1774 = vunpack.c.l.b16 %v1751
        %v1775 = vunpack.c.l.b16 %v1752
        %v1776 = vunpack.c.l.b16 %v1753
        %v1777 = vunpack.c.l.b16 %v1754
        %v1778 = vunpack.c.l.b16 %v1755
        %v1779 = vpack.c.b16 %v1770, %v1769
        %v1780 = vpack.c.b16 %v1772, %v1771
        %v1781 = vpack.c.b16 %v1774, %v1773
        %v1782 = vpack.c.b16 %v1776, %v1775
        %v1783 = vpack.c.b16 %v1778, %v1777
        %vm1784 = vcmask 1045504
        %v1785 = vrot.slane %v1779, 2
        %v1786 = vrot.slane %v1780, 2
        %v1787 = vsel %vm1784, %v1785, %v1786
        %v1788 = vrot.slane %v1781, 2
        %v1789 = vsel %vm1784, %v1786, %v1788
        %v1790 = vrot.slane %v1782, 2
        %v1791 = vsel %vm1784, %v1788, %v1790
        %v1792 = vrot.slane %v1783, 2
        %v1793 = vsel %vm1784, %v1790, %v1792
        %v1796 = vunpack.c.l.b16 %v1757
        %v1797 = vunpack.c.l.b16 %v1758
        %v1798 = vpack.c.b16 %v1797, %v1796
        %v1801 = vsel %vm752, %v1787, 0
        %v1804 = vsel %vm752, %v1789, 0
        %v1807 = vsel %vm752, %v1791, 0
        %v1810 = vsel %vm752, %v1793, 0
        %v1813 = vsel %vm752, %v1792, 0
        %1815 = vmatprep.subr.bf16.mxu0 0
        %1816 = vmatpush1.bf16.msra.mxu0 %v1798
        %1817 = vmatprep.subr.bf16.mxu0 0
        %1818 = vmatpush1.bf16.msra.mxu0 0
        %1819 = vmatprep.subr.bf16.mxu0 0
        %1820 = vmatpush1.bf16.msra.mxu0 0
        %1821 = vmatprep.subr.bf16.mxu0 0
        %1822 = vmatpush1.bf16.msra.mxu0 0
        %1823 = vmatprep.subr.bf16.mxu0 0
        %1824 = vmatpush1.bf16.msra.mxu0 0
        %1825 = vmatprep.subr.bf16.mxu0 0
        %1826 = vmatpush1.bf16.msra.mxu0 0
        %1827 = vmatprep.subr.bf16.mxu0 0
        %1828 = vmatpush1.bf16.msra.mxu0 0
        %1829 = vmatprep.subr.bf16.mxu0 0
        %1830 = vmatpush1.bf16.msra.mxu0 0
        %1831 = vmatprep.subr.bf16.mxu0 0
        %1832 = vmatpush1.bf16.msra.mxu0 0
        %1833 = vmatprep.subr.bf16.mxu0 0
        %1834 = vmatpush1.bf16.msra.mxu0 0
        %1835 = vmatprep.subr.bf16.mxu0 0
        %1836 = vmatpush1.bf16.msra.mxu0 0
        %1837 = vmatprep.subr.bf16.mxu0 0
        %1838 = vmatpush1.bf16.msra.mxu0 0
        %1839 = vmatprep.subr.bf16.mxu0 0
        %1840 = vmatpush1.bf16.msra.mxu0 0
        %1841 = vmatprep.subr.bf16.mxu0 0
        %1842 = vmatpush1.bf16.msra.mxu0 0
        %1843 = vmatprep.subr.bf16.mxu0 0
        %1844 = vmatpush1.bf16.msra.mxu0 0
        %1845 = vmatprep.subr.bf16.mxu0 0
        %1846 = vmatpush1.bf16.msra.mxu0 0
        %1847 = vmatprep.mubr.bf16.mxu0 0
        %1848 = vmatmul.mubr.bf16.gmra.mrb[0].mxu0 %v1801
        %v1849 = vpop.f32.mrb[0].mxu0
        %v1850 = vadd.f32 0.0, %v1849
        %v1851 = vpop.f32.mrb[0].mxu0
        %v1852 = vpop.f32.mrb[0].mxu0
        %v1853 = vadd.f32 0.0, %v1852
        %v1854 = vpop.f32.mrb[0].mxu0
        %1855 = vmatprep.mubr.bf16.mxu0 0
        %1856 = vmatmul.mubr.bf16.gmra.mrb[0].mxu0 %v1804
        %v1857 = vpop.f32.mrb[0].mxu0
        %v1858 = vadd.f32 0.0, %v1857
        %v1859 = vpop.f32.mrb[0].mxu0
        %v1860 = vpop.f32.mrb[0].mxu0
        %v1861 = vadd.f32 0.0, %v1860
        %v1862 = vpop.f32.mrb[0].mxu0
        %1863 = vmatprep.mubr.bf16.mxu0 0
        %1864 = vmatmul.mubr.bf16.gmra.mrb[0].mxu0 %v1807
        %v1865 = vpop.f32.mrb[0].mxu0
        %v1866 = vadd.f32 0.0, %v1865
        %v1867 = vpop.f32.mrb[0].mxu0
        %v1868 = vpop.f32.mrb[0].mxu0
        %v1869 = vadd.f32 0.0, %v1868
        %v1870 = vpop.f32.mrb[0].mxu0
        %1871 = vmatprep.mubr.bf16.mxu0 0
        %1872 = vmatmul.mubr.bf16.gmra.mrb[0].mxu0 %v1810
        %v1873 = vpop.f32.mrb[0].mxu0
        %v1874 = vadd.f32 0.0, %v1873
        %v1875 = vpop.f32.mrb[0].mxu0
        %v1876 = vpop.f32.mrb[0].mxu0
        %v1877 = vadd.f32 0.0, %v1876
        %v1878 = vpop.f32.mrb[0].mxu0
        %1879 = vmatprep.mubr.bf16.mxu0 0
        %1880 = vmatmul.mubr.bf16.gmra.mrb[0].mxu0 %v1813
        %v1881 = vpop.f32.mrb[0].mxu0
        %v1882 = vadd.f32 0.0, %v1881
        %v1883 = vpop.f32.mrb[0].mxu0
        %v1884 = vpop.f32.mrb[0].mxu0
        %v1885 = vpop.f32.mrb[0].mxu0
        %1886 = vdwg.mxu0
        %v1887 = vadd.f32 %v1737, %v1850
        %v1888 = vadd.f32 %v1738, %v1853
        %v1889 = vadd.f32 %v1739, %v1858
        %v1890 = vadd.f32 %v1740, %v1861
        %v1891 = vadd.f32 %v1741, %v1866
        %v1892 = vadd.f32 %v1742, %v1869
        %v1893 = vadd.f32 %v1743, %v1874
        %v1894 = vadd.f32 %v1744, %v1877
        %v1895 = vadd.f32 %v1745, %v1882
        %1896 = vst.msk [vmem:[#allocation3] sm:$0xff] %vm840, %v1887
        %1897 = vst.msk [vmem:[#allocation3 + $0x8] sm:$0xff] %vm840, %v1888
        %1898 = vst.msk [vmem:[#allocation3 + $0x10] sm:$0xff] %vm840, %v1889
        %1899 = vst.msk [vmem:[#allocation3 + $0x18] sm:$0xff] %vm840, %v1890
        %1900 = vst.msk [vmem:[#allocation3 + $0x20] sm:$0xff] %vm840, %v1891
        %1901 = vst.msk [vmem:[#allocation3 + $0x28] sm:$0xff] %vm840, %v1892
        %1902 = vst.msk [vmem:[#allocation3 + $0x30] sm:$0xff] %vm840, %v1893
        %1903 = vst.msk [vmem:[#allocation3 + $0x38] sm:$0xff] %vm840, %v1894
        %1904 = vst.msk [vmem:[#allocation3 + $0x40] sm:$0x3f] %vm849, %v1895
        %v1905 = vld [vmem:[#allocation3] sm:$0xff]
        %v1906 = vld [vmem:[#allocation3 + $0x8] sm:$0xff]
        %v1907 = vld [vmem:[#allocation3 + $0x10] sm:$0xff]
        %v1908 = vld [vmem:[#allocation3 + $0x18] sm:$0xff]
        %v1909 = vld [vmem:[#allocation3 + $0x20] sm:$0xff]
        %v1910 = vld [vmem:[#allocation3 + $0x28] sm:$0xff]
        %v1911 = vld [vmem:[#allocation3 + $0x30] sm:$0xff]
        %v1912 = vld [vmem:[#allocation3 + $0x38] sm:$0xff]
        %v1913 = vld [vmem:[#allocation3 + $0x40] sm:$0x3f]
        %v1914 = vld [vmem:[#allocation2 + $0xc] sm:$0xc]
        %v1915 = vld [vmem:[#allocation2 + $0x10] sm:$0xf]
        %v1916 = vld [vmem:[#allocation2 + $0x14] sm:$0xf]
        %v1917 = vld [vmem:[#allocation2 + $0x18] sm:$0xf]
        %v1918 = vld [vmem:[#allocation2 + $0x1c] sm:$0xf]
        %v1919 = vld [vmem:[#allocation2 + $0x20] sm:$0xf]
        %v1920 = vld [vmem:[#allocation2 + $0x24] sm:$0xf]
        %v1921 = vld [vmem:[#allocation2 + $0x28] sm:$0xf]
        %v1922 = vld [vmem:[#allocation2 + $0x2c] sm:$0xf]
        %v1923 = vld [vmem:[#allocation2 + $0x30] sm:$0x3]
        %s1924 = scalar_lea.vmem %s3, 56
        %v1925 = vld [vmem:[%s1924] sm:$0xf]
        %v1926 = vld [vmem:[%s1924 + $0x4] sm:$0xf]
        %v1937 = vunpack.c.l.b16 %v1914
        %v1938 = vunpack.c.l.b16 %v1915
        %v1939 = vunpack.c.l.b16 %v1916
        %v1940 = vunpack.c.l.b16 %v1917
        %v1941 = vunpack.c.l.b16 %v1918
        %v1942 = vunpack.c.l.b16 %v1919
        %v1943 = vunpack.c.l.b16 %v1920
        %v1944 = vunpack.c.l.b16 %v1921
        %v1945 = vunpack.c.l.b16 %v1922
        %v1946 = vunpack.c.l.b16 %v1923
        %v1947 = vpack.c.b16 %v1938, %v1937
        %v1948 = vpack.c.b16 %v1940, %v1939
        %v1949 = vpack.c.b16 %v1942, %v1941
        %v1950 = vpack.c.b16 %v1944, %v1943
        %v1951 = vpack.c.b16 %v1946, %v1945
        %vm1952 = vsmask.f32 5376
        %v1954 = vshrl.u32 %v1947, 16
        %v1956 = vrot.slane %v1954, 2
        %v1957 = vshll.u32 %v1947, 16
        %v1959 = vrot.slane %v1957, 3
        %v1960 = vor.u32 %v1956, %v1959
        %v1962 = vshrl.u32 %v1948, 16
        %v1964 = vrot.slane %v1962, 2
        %v1965 = vshll.u32 %v1948, 16
        %v1967 = vrot.slane %v1965, 3
        %v1968 = vor.u32 %v1964, %v1967
        %v1969 = vsel %vm1952, %v1960, %v1968
        %v1971 = vshrl.u32 %v1949, 16
        %v1973 = vrot.slane %v1971, 2
        %v1974 = vshll.u32 %v1949, 16
        %v1976 = vrot.slane %v1974, 3
        %v1977 = vor.u32 %v1973, %v1976
        %v1978 = vsel %vm1952, %v1968, %v1977
        %v1980 = vshrl.u32 %v1950, 16
        %v1982 = vrot.slane %v1980, 2
        %v1983 = vshll.u32 %v1950, 16
        %v1985 = vrot.slane %v1983, 3
        %v1986 = vor.u32 %v1982, %v1985
        %v1987 = vsel %vm1952, %v1977, %v1986
        %v1989 = vshrl.u32 %v1951, 16
        %v1991 = vrot.slane %v1989, 2
        %v1992 = vshll.u32 %v1951, 16
        %v1994 = vrot.slane %v1992, 3
        %v1995 = vor.u32 %v1991, %v1994
        %v1996 = vsel %vm1952, %v1986, %v1995
        %v1999 = vunpack.c.l.b16 %v1925
        %v2000 = vunpack.c.l.b16 %v1926
        %v2001 = vpack.c.b16 %v2000, %v1999
        %v2004 = vsel %vm752, %v1969, 0
        %v2007 = vsel %vm752, %v1978, 0
        %v2010 = vsel %vm752, %v1987, 0
        %v2013 = vsel %vm752, %v1996, 0
        %v2016 = vsel %vm752, %v1995, 0
        %2018 = vmatprep.subr.bf16.mxu0 0
        %2019 = vmatpush1.bf16.msra.mxu0 %v2001
        %2020 = vmatprep.subr.bf16.mxu0 0
        %2021 = vmatpush1.bf16.msra.mxu0 0
        %2022 = vmatprep.subr.bf16.mxu0 0
        %2023 = vmatpush1.bf16.msra.mxu0 0
        %2024 = vmatprep.subr.bf16.mxu0 0
        %2025 = vmatpush1.bf16.msra.mxu0 0
        %2026 = vmatprep.subr.bf16.mxu0 0
        %2027 = vmatpush1.bf16.msra.mxu0 0
        %2028 = vmatprep.subr.bf16.mxu0 0
        %2029 = vmatpush1.bf16.msra.mxu0 0
        %2030 = vmatprep.subr.bf16.mxu0 0
        %2031 = vmatpush1.bf16.msra.mxu0 0
        %2032 = vmatprep.subr.bf16.mxu0 0
        %2033 = vmatpush1.bf16.msra.mxu0 0
        %2034 = vmatprep.subr.bf16.mxu0 0
        %2035 = vmatpush1.bf16.msra.mxu0 0
        %2036 = vmatprep.subr.bf16.mxu0 0
        %2037 = vmatpush1.bf16.msra.mxu0 0
        %2038 = vmatprep.subr.bf16.mxu0 0
        %2039 = vmatpush1.bf16.msra.mxu0 0
        %2040 = vmatprep.subr.bf16.mxu0 0
        %2041 = vmatpush1.bf16.msra.mxu0 0
        %2042 = vmatprep.subr.bf16.mxu0 0
        %2043 = vmatpush1.bf16.msra.mxu0 0
        %2044 = vmatprep.subr.bf16.mxu0 0
        %2045 = vmatpush1.bf16.msra.mxu0 0
        %2046 = vmatprep.subr.bf16.mxu0 0
        %2047 = vmatpush1.bf16.msra.mxu0 0
        %2048 = vmatprep.subr.bf16.mxu0 0
        %2049 = vmatpush1.bf16.msra.mxu0 0
        %2050 = vmatprep.mubr.bf16.mxu0 0
        %2051 = vmatmul.mubr.bf16.gmra.mrb[0].mxu0 %v2004
        %v2052 = vpop.f32.mrb[0].mxu0
        %v2053 = vadd.f32 0.0, %v2052
        %v2054 = vpop.f32.mrb[0].mxu0
        %v2055 = vpop.f32.mrb[0].mxu0
        %v2056 = vadd.f32 0.0, %v2055
        %v2057 = vpop.f32.mrb[0].mxu0
        %2058 = vmatprep.mubr.bf16.mxu0 0
        %2059 = vmatmul.mubr.bf16.gmra.mrb[0].mxu0 %v2007
        %v2060 = vpop.f32.mrb[0].mxu0
        %v2061 = vadd.f32 0.0, %v2060
        %v2062 = vpop.f32.mrb[0].mxu0
        %v2063 = vpop.f32.mrb[0].mxu0
        %v2064 = vadd.f32 0.0, %v2063
        %v2065 = vpop.f32.mrb[0].mxu0
        %2066 = vmatprep.mubr.bf16.mxu0 0
        %2067 = vmatmul.mubr.bf16.gmra.mrb[0].mxu0 %v2010
        %v2068 = vpop.f32.mrb[0].mxu0
        %v2069 = vadd.f32 0.0, %v2068
        %v2070 = vpop.f32.mrb[0].mxu0
        %v2071 = vpop.f32.mrb[0].mxu0
        %v2072 = vadd.f32 0.0, %v2071
        %v2073 = vpop.f32.mrb[0].mxu0
        %2074 = vmatprep.mubr.bf16.mxu0 0
        %2075 = vmatmul.mubr.bf16.gmra.mrb[0].mxu0 %v2013
        %v2076 = vpop.f32.mrb[0].mxu0
        %v2077 = vadd.f32 0.0, %v2076
        %v2078 = vpop.f32.mrb[0].mxu0
        %v2079 = vpop.f32.mrb[0].mxu0
        %v2080 = vadd.f32 0.0, %v2079
        %v2081 = vpop.f32.mrb[0].mxu0
        %2082 = vmatprep.mubr.bf16.mxu0 0
        %2083 = vmatmul.mubr.bf16.gmra.mrb[0].mxu0 %v2016
        %v2084 = vpop.f32.mrb[0].mxu0
        %v2085 = vadd.f32 0.0, %v2084
        %v2086 = vpop.f32.mrb[0].mxu0
        %v2087 = vpop.f32.mrb[0].mxu0
        %v2088 = vpop.f32.mrb[0].mxu0
        %2089 = vdwg.mxu0
        %v2090 = vadd.f32 %v1905, %v2053
        %v2091 = vadd.f32 %v1906, %v2056
        %v2092 = vadd.f32 %v1907, %v2061
        %v2093 = vadd.f32 %v1908, %v2064
        %v2094 = vadd.f32 %v1909, %v2069
        %v2095 = vadd.f32 %v1910, %v2072
        %v2096 = vadd.f32 %v1911, %v2077
        %v2097 = vadd.f32 %v1912, %v2080
        %v2098 = vadd.f32 %v1913, %v2085
        %2099 = vst.msk [vmem:[#allocation3] sm:$0xff] %vm840, %v2090
        %2100 = vst.msk [vmem:[#allocation3 + $0x8] sm:$0xff] %vm840, %v2091
        %2101 = vst.msk [vmem:[#allocation3 + $0x10] sm:$0xff] %vm840, %v2092
        %2102 = vst.msk [vmem:[#allocation3 + $0x18] sm:$0xff] %vm840, %v2093
        %2103 = vst.msk [vmem:[#allocation3 + $0x20] sm:$0xff] %vm840, %v2094
        %2104 = vst.msk [vmem:[#allocation3 + $0x28] sm:$0xff] %vm840, %v2095
        %2105 = vst.msk [vmem:[#allocation3 + $0x30] sm:$0xff] %vm840, %v2096
        %2106 = vst.msk [vmem:[#allocation3 + $0x38] sm:$0xff] %vm840, %v2097
        %2107 = vst.msk [vmem:[#allocation3 + $0x40] sm:$0x3f] %vm849, %v2098
        %v2108 = vld [vmem:[#allocation3] sm:$0xff]
        %v2109 = vld [vmem:[#allocation3 + $0x8] sm:$0xff]
        %v2110 = vld [vmem:[#allocation3 + $0x10] sm:$0xff]
        %v2111 = vld [vmem:[#allocation3 + $0x18] sm:$0xff]
        %v2112 = vld [vmem:[#allocation3 + $0x20] sm:$0xff]
        %v2113 = vld [vmem:[#allocation3 + $0x28] sm:$0xff]
        %v2114 = vld [vmem:[#allocation3 + $0x30] sm:$0xff]
        %v2115 = vld [vmem:[#allocation3 + $0x38] sm:$0xff]
        %v2116 = vld [vmem:[#allocation3 + $0x40] sm:$0x3f]
        %v2117 = vld [vmem:[#allocation2 + $0xc] sm:$0x8]
        %v2118 = vld [vmem:[#allocation2 + $0x10] sm:$0xf]
        %v2119 = vld [vmem:[#allocation2 + $0x14] sm:$0xf]
        %v2120 = vld [vmem:[#allocation2 + $0x18] sm:$0xf]
        %v2121 = vld [vmem:[#allocation2 + $0x1c] sm:$0xf]
        %v2122 = vld [vmem:[#allocation2 + $0x20] sm:$0xf]
        %v2123 = vld [vmem:[#allocation2 + $0x24] sm:$0xf]
        %v2124 = vld [vmem:[#allocation2 + $0x28] sm:$0xf]
        %v2125 = vld [vmem:[#allocation2 + $0x2c] sm:$0xf]
        %v2126 = vld [vmem:[#allocation2 + $0x30] sm:$0x3]
        %s2127 = scalar_lea.vmem %s3, 64
        %v2128 = vld [vmem:[%s2127] sm:$0xf]
        %v2129 = vld [vmem:[%s2127 + $0x4] sm:$0xf]
        %v2140 = vunpack.c.l.b16 %v2117
        %v2141 = vunpack.c.l.b16 %v2118
        %v2142 = vunpack.c.l.b16 %v2119
        %v2143 = vunpack.c.l.b16 %v2120
        %v2144 = vunpack.c.l.b16 %v2121
        %v2145 = vunpack.c.l.b16 %v2122
        %v2146 = vunpack.c.l.b16 %v2123
        %v2147 = vunpack.c.l.b16 %v2124
        %v2148 = vunpack.c.l.b16 %v2125
        %v2149 = vunpack.c.l.b16 %v2126
        %v2150 = vpack.c.b16 %v2141, %v2140
        %v2151 = vpack.c.b16 %v2143, %v2142
        %v2152 = vpack.c.b16 %v2145, %v2144
        %v2153 = vpack.c.b16 %v2147, %v2146
        %v2154 = vpack.c.b16 %v2149, %v2148
        %v2155 = vrot.slane %v2150, 3
        %v2156 = vrot.slane %v2151, 3
        %v2157 = vsel %vm1258, %v2155, %v2156
        %v2158 = vrot.slane %v2152, 3
        %v2159 = vsel %vm1258, %v2156, %v2158
        %v2160 = vrot.slane %v2153, 3
        %v2161 = vsel %vm1258, %v2158, %v2160
        %v2162 = vrot.slane %v2154, 3
        %v2163 = vsel %vm1258, %v2160, %v2162
        %v2166 = vunpack.c.l.b16 %v2128
        %v2167 = vunpack.c.l.b16 %v2129
        %v2168 = vpack.c.b16 %v2167, %v2166
        %v2171 = vsel %vm752, %v2157, 0
        %v2174 = vsel %vm752, %v2159, 0
        %v2177 = vsel %vm752, %v2161, 0
        %v2180 = vsel %vm752, %v2163, 0
        %v2183 = vsel %vm752, %v2162, 0
        %2185 = vmatprep.subr.bf16.mxu0 0
        %2186 = vmatpush1.bf16.msra.mxu0 %v2168
        %2187 = vmatprep.subr.bf16.mxu0 0
        %2188 = vmatpush1.bf16.msra.mxu0 0
        %2189 = vmatprep.subr.bf16.mxu0 0
        %2190 = vmatpush1.bf16.msra.mxu0 0
        %2191 = vmatprep.subr.bf16.mxu0 0
        %2192 = vmatpush1.bf16.msra.mxu0 0
        %2193 = vmatprep.subr.bf16.mxu0 0
        %2194 = vmatpush1.bf16.msra.mxu0 0
        %2195 = vmatprep.subr.bf16.mxu0 0
        %2196 = vmatpush1.bf16.msra.mxu0 0
        %2197 = vmatprep.subr.bf16.mxu0 0
        %2198 = vmatpush1.bf16.msra.mxu0 0
        %2199 = vmatprep.subr.bf16.mxu0 0
        %2200 = vmatpush1.bf16.msra.mxu0 0
        %2201 = vmatprep.subr.bf16.mxu0 0
        %2202 = vmatpush1.bf16.msra.mxu0 0
        %2203 = vmatprep.subr.bf16.mxu0 0
        %2204 = vmatpush1.bf16.msra.mxu0 0
        %2205 = vmatprep.subr.bf16.mxu0 0
        %2206 = vmatpush1.bf16.msra.mxu0 0
        %2207 = vmatprep.subr.bf16.mxu0 0
        %2208 = vmatpush1.bf16.msra.mxu0 0
        %2209 = vmatprep.subr.bf16.mxu0 0
        %2210 = vmatpush1.bf16.msra.mxu0 0
        %2211 = vmatprep.subr.bf16.mxu0 0
        %2212 = vmatpush1.bf16.msra.mxu0 0
        %2213 = vmatprep.subr.bf16.mxu0 0
        %2214 = vmatpush1.bf16.msra.mxu0 0
        %2215 = vmatprep.subr.bf16.mxu0 0
        %2216 = vmatpush1.bf16.msra.mxu0 0
        %2217 = vmatprep.mubr.bf16.mxu0 0
        %2218 = vmatmul.mubr.bf16.gmra.mrb[0].mxu0 %v2171
        %v2219 = vpop.f32.mrb[0].mxu0
        %v2220 = vadd.f32 0.0, %v2219
        %v2221 = vpop.f32.mrb[0].mxu0
        %v2222 = vpop.f32.mrb[0].mxu0
        %v2223 = vadd.f32 0.0, %v2222
        %v2224 = vpop.f32.mrb[0].mxu0
        %2225 = vmatprep.mubr.bf16.mxu0 0
        %2226 = vmatmul.mubr.bf16.gmra.mrb[0].mxu0 %v2174
        %v2227 = vpop.f32.mrb[0].mxu0
        %v2228 = vadd.f32 0.0, %v2227
        %v2229 = vpop.f32.mrb[0].mxu0
        %v2230 = vpop.f32.mrb[0].mxu0
        %v2231 = vadd.f32 0.0, %v2230
        %v2232 = vpop.f32.mrb[0].mxu0
        %2233 = vmatprep.mubr.bf16.mxu0 0
        %2234 = vmatmul.mubr.bf16.gmra.mrb[0].mxu0 %v2177
        %v2235 = vpop.f32.mrb[0].mxu0
        %v2236 = vadd.f32 0.0, %v2235
        %v2237 = vpop.f32.mrb[0].mxu0
        %v2238 = vpop.f32.mrb[0].mxu0
        %v2239 = vadd.f32 0.0, %v2238
        %v2240 = vpop.f32.mrb[0].mxu0
        %2241 = vmatprep.mubr.bf16.mxu0 0
        %2242 = vmatmul.mubr.bf16.gmra.mrb[0].mxu0 %v2180
        %v2243 = vpop.f32.mrb[0].mxu0
        %v2244 = vadd.f32 0.0, %v2243
        %v2245 = vpop.f32.mrb[0].mxu0
        %v2246 = vpop.f32.mrb[0].mxu0
        %v2247 = vadd.f32 0.0, %v2246
        %v2248 = vpop.f32.mrb[0].mxu0
        %2249 = vmatprep.mubr.bf16.mxu0 0
        %2250 = vmatmul.mubr.bf16.gmra.mrb[0].mxu0 %v2183
        %v2251 = vpop.f32.mrb[0].mxu0
        %v2252 = vadd.f32 0.0, %v2251
        %v2253 = vpop.f32.mrb[0].mxu0
        %v2254 = vpop.f32.mrb[0].mxu0
        %v2255 = vpop.f32.mrb[0].mxu0
        %2256 = vdwg.mxu0
        %v2257 = vadd.f32 %v2108, %v2220
        %v2258 = vadd.f32 %v2109, %v2223
        %v2259 = vadd.f32 %v2110, %v2228
        %v2260 = vadd.f32 %v2111, %v2231
        %v2261 = vadd.f32 %v2112, %v2236
        %v2262 = vadd.f32 %v2113, %v2239
        %v2263 = vadd.f32 %v2114, %v2244
        %v2264 = vadd.f32 %v2115, %v2247
        %v2265 = vadd.f32 %v2116, %v2252
        %2266 = vst.msk [vmem:[#allocation3] sm:$0xff] %vm840, %v2257
        %2267 = vst.msk [vmem:[#allocation3 + $0x8] sm:$0xff] %vm840, %v2258
        %2268 = vst.msk [vmem:[#allocation3 + $0x10] sm:$0xff] %vm840, %v2259
        %2269 = vst.msk [vmem:[#allocation3 + $0x18] sm:$0xff] %vm840, %v2260
        %2270 = vst.msk [vmem:[#allocation3 + $0x20] sm:$0xff] %vm840, %v2261
        %2271 = vst.msk [vmem:[#allocation3 + $0x28] sm:$0xff] %vm840, %v2262
        %2272 = vst.msk [vmem:[#allocation3 + $0x30] sm:$0xff] %vm840, %v2263
        %2273 = vst.msk [vmem:[#allocation3 + $0x38] sm:$0xff] %vm840, %v2264
        %2274 = vst.msk [vmem:[#allocation3 + $0x40] sm:$0x3f] %vm849, %v2265
        %v2275 = vld [vmem:[#allocation3] sm:$0xff]
        %v2276 = vld [vmem:[#allocation3 + $0x8] sm:$0xff]
        %v2277 = vld [vmem:[#allocation3 + $0x10] sm:$0xff]
        %v2278 = vld [vmem:[#allocation3 + $0x18] sm:$0xff]
        %v2279 = vld [vmem:[#allocation3 + $0x20] sm:$0xff]
        %v2280 = vld [vmem:[#allocation3 + $0x28] sm:$0xff]
        %v2281 = vld [vmem:[#allocation3 + $0x30] sm:$0xff]
        %v2282 = vld [vmem:[#allocation3 + $0x38] sm:$0xff]
        %v2283 = vld [vmem:[#allocation3 + $0x40] sm:$0x3f]
        %v2284 = vmax.f32 %v2275, 0.0
        %v2285 = vmax.f32 %v2276, 0.0
        %v2286 = vmax.f32 %v2277, 0.0
        %v2287 = vmax.f32 %v2278, 0.0
        %v2288 = vmax.f32 %v2279, 0.0
        %v2289 = vmax.f32 %v2280, 0.0
        %v2290 = vmax.f32 %v2281, 0.0
        %v2291 = vmax.f32 %v2282, 0.0
        %v2292 = vmax.f32 %v2283, 0.0
        %v2302 = vcombine.high %v2284, %v2284
        %v2304 = vunpack.c.l.s4 1983009808
        %v2305 = vunpack.c.0.s8 %v2304
        %v2306 = vlaneseq
        %v2307 = vshrl.u32 %v2306, 7
        %v2308 = vsub.s32 %v2305, %v2307
        %v2309 = vrot.slane %v2284, %v2308
        %v2311 = vunpack.c.l.s4 1983009808
        %v2312 = vunpack.c.0.s8 %v2311
        %v2313 = vlaneseq
        %v2314 = vshrl.u32 %v2313, 7
        %v2315 = vsub.s32 %v2312, %v2314
        %v2316 = vrot.slane %v2302, %v2315
        %v2317 = vcombine.high %v2309, %v2309
        %v2318 = vcombine.high %v2316, %v2316
        %v2319 = vcombine.high %v2285, %v2285
        %v2321 = vunpack.c.l.s4 1983009808
        %v2322 = vunpack.c.0.s8 %v2321
        %v2323 = vlaneseq
        %v2324 = vshrl.u32 %v2323, 7
        %v2325 = vsub.s32 %v2322, %v2324
        %v2326 = vrot.slane %v2285, %v2325
        %v2328 = vunpack.c.l.s4 1983009808
        %v2329 = vunpack.c.0.s8 %v2328
        %v2330 = vlaneseq
        %v2331 = vshrl.u32 %v2330, 7
        %v2332 = vsub.s32 %v2329, %v2331
        %v2333 = vrot.slane %v2319, %v2332
        %v2334 = vcombine.high %v2326, %v2326
        %v2335 = vcombine.high %v2333, %v2333
        %v2336 = vcombine.high %v2286, %v2286
        %v2338 = vunpack.c.l.s4 1983009808
        %v2339 = vunpack.c.0.s8 %v2338
        %v2340 = vlaneseq
        %v2341 = vshrl.u32 %v2340, 7
        %v2342 = vsub.s32 %v2339, %v2341
        %v2343 = vrot.slane %v2286, %v2342
        %v2345 = vunpack.c.l.s4 1983009808
        %v2346 = vunpack.c.0.s8 %v2345
        %v2347 = vlaneseq
        %v2348 = vshrl.u32 %v2347, 7
        %v2349 = vsub.s32 %v2346, %v2348
        %v2350 = vrot.slane %v2336, %v2349
        %v2351 = vcombine.high %v2343, %v2343
        %v2352 = vcombine.high %v2350, %v2350
        %v2353 = vcombine.high %v2287, %v2287
        %v2355 = vunpack.c.l.s4 1983009808
        %v2356 = vunpack.c.0.s8 %v2355
        %v2357 = vlaneseq
        %v2358 = vshrl.u32 %v2357, 7
        %v2359 = vsub.s32 %v2356, %v2358
        %v2360 = vrot.slane %v2287, %v2359
        %v2362 = vunpack.c.l.s4 1983009808
        %v2363 = vunpack.c.0.s8 %v2362
        %v2364 = vlaneseq
        %v2365 = vshrl.u32 %v2364, 7
        %v2366 = vsub.s32 %v2363, %v2365
        %v2367 = vrot.slane %v2353, %v2366
        %v2368 = vcombine.high %v2367, %v2367
        %v2369 = vcombine.high %v2288, %v2288
        %v2371 = vunpack.c.l.s4 1983009808
        %v2372 = vunpack.c.0.s8 %v2371
        %v2373 = vlaneseq
        %v2374 = vshrl.u32 %v2373, 7
        %v2375 = vsub.s32 %v2372, %v2374
        %v2376 = vrot.slane %v2288, %v2375
        %v2378 = vunpack.c.l.s4 1983009808
        %v2379 = vunpack.c.0.s8 %v2378
        %v2380 = vlaneseq
        %v2381 = vshrl.u32 %v2380, 7
        %v2382 = vsub.s32 %v2379, %v2381
        %v2383 = vrot.slane %v2369, %v2382
        %v2384 = vcombine.high %v2376, %v2376
        %v2385 = vcombine.high %v2383, %v2383
        %v2386 = vcombine.high %v2289, %v2289
        %v2388 = vunpack.c.l.s4 1983009808
        %v2389 = vunpack.c.0.s8 %v2388
        %v2390 = vlaneseq
        %v2391 = vshrl.u32 %v2390, 7
        %v2392 = vsub.s32 %v2389, %v2391
        %v2393 = vrot.slane %v2289, %v2392
        %v2395 = vunpack.c.l.s4 1983009808
        %v2396 = vunpack.c.0.s8 %v2395
        %v2397 = vlaneseq
        %v2398 = vshrl.u32 %v2397, 7
        %v2399 = vsub.s32 %v2396, %v2398
        %v2400 = vrot.slane %v2386, %v2399
        %v2401 = vcombine.high %v2393, %v2393
        %v2402 = vcombine.high %v2400, %v2400
        %v2403 = vcombine.high %v2290, %v2290
        %v2405 = vunpack.c.l.s4 1983009808
        %v2406 = vunpack.c.0.s8 %v2405
        %v2407 = vlaneseq
        %v2408 = vshrl.u32 %v2407, 7
        %v2409 = vsub.s32 %v2406, %v2408
        %v2410 = vrot.slane %v2290, %v2409
        %v2412 = vunpack.c.l.s4 1983009808
        %v2413 = vunpack.c.0.s8 %v2412
        %v2414 = vlaneseq
        %v2415 = vshrl.u32 %v2414, 7
        %v2416 = vsub.s32 %v2413, %v2415
        %v2417 = vrot.slane %v2403, %v2416
        %v2418 = vcombine.high %v2410, %v2410
        %v2419 = vcombine.high %v2291, %v2291
        %v2421 = vunpack.c.l.s4 1983009808
        %v2422 = vunpack.c.0.s8 %v2421
        %v2423 = vlaneseq
        %v2424 = vshrl.u32 %v2423, 7
        %v2425 = vsub.s32 %v2422, %v2424
        %v2426 = vrot.slane %v2291, %v2425
        %v2428 = vunpack.c.l.s4 1983009808
        %v2429 = vunpack.c.0.s8 %v2428
        %v2430 = vlaneseq
        %v2431 = vshrl.u32 %v2430, 7
        %v2432 = vsub.s32 %v2429, %v2431
        %v2433 = vrot.slane %v2419, %v2432
        %v2434 = vcombine.high %v2426, %v2426
        %v2435 = vcombine.high %v2433, %v2433
        %v2437 = vunpack.c.l.s4 1983009808
        %v2438 = vunpack.c.0.s8 %v2437
        %v2439 = vlaneseq
        %v2440 = vshrl.u32 %v2439, 7
        %v2441 = vsub.s32 %v2438, %v2440
        %v2442 = vrot.slane %v2292, %v2441
        %v2443 = vcombine.high %v2442, %v2442
        %v2444 = vcombine.low %v2309, %v2317
        %v2445 = vcombine.low %v2316, %v2318
        %v2447 = vunpack.c.l.s4 1983009808
        %v2448 = vunpack.c.0.s8 %v2447
        %v2449 = vlaneseq
        %v2450 = vshrl.u32 %v2449, 7
        %v2451 = vsub.s32 %v2448, %v2450
        %v2452 = vrot.slane %v2444, %v2451
        %v2454 = vunpack.c.l.s4 1983009808
        %v2455 = vunpack.c.0.s8 %v2454
        %v2456 = vlaneseq
        %v2457 = vshrl.u32 %v2456, 7
        %v2458 = vsub.s32 %v2455, %v2457
        %v2459 = vrot.slane %v2445, %v2458
        %v2460 = vcombine.low %v2452, %v2459
        %v2461 = vcombine.low %v2326, %v2334
        %v2463 = vunpack.c.l.s4 1983009808
        %v2464 = vunpack.c.0.s8 %v2463
        %v2465 = vlaneseq
        %v2466 = vshrl.u32 %v2465, 7
        %v2467 = vsub.s32 %v2464, %v2466
        %v2468 = vrot.slane %v2461, %v2467
        %v2469 = vcombine.low %v2335, %v2343
        %v2470 = vcombine.low %v2351, %v2350
        %v2472 = vunpack.c.l.s4 1983009808
        %v2473 = vunpack.c.0.s8 %v2472
        %v2474 = vlaneseq
        %v2475 = vshrl.u32 %v2474, 7
        %v2476 = vsub.s32 %v2473, %v2475
        %v2477 = vrot.slane %v2469, %v2476
        %v2479 = vunpack.c.l.s4 1983009808
        %v2480 = vunpack.c.0.s8 %v2479
        %v2481 = vlaneseq
        %v2482 = vshrl.u32 %v2481, 7
        %v2483 = vsub.s32 %v2480, %v2482
        %v2484 = vrot.slane %v2470, %v2483
        %v2485 = vcombine.low %v2477, %v2484
        %v2486 = vcombine.low %v2352, %v2360
        %v2488 = vunpack.c.l.s4 1983009808
        %v2489 = vunpack.c.0.s8 %v2488
        %v2490 = vlaneseq
        %v2491 = vshrl.u32 %v2490, 7
        %v2492 = vsub.s32 %v2489, %v2491
        %v2493 = vrot.slane %v2486, %v2492
        %v2494 = vcombine.low %v2367, %v2368
        %v2495 = vcombine.low %v2376, %v2384
        %v2497 = vunpack.c.l.s4 1983009808
        %v2498 = vunpack.c.0.s8 %v2497
        %v2499 = vlaneseq
        %v2500 = vshrl.u32 %v2499, 7
        %v2501 = vsub.s32 %v2498, %v2500
        %v2502 = vrot.slane %v2494, %v2501
        %v2504 = vunpack.c.l.s4 1983009808
        %v2505 = vunpack.c.0.s8 %v2504
        %v2506 = vlaneseq
        %v2507 = vshrl.u32 %v2506, 7
        %v2508 = vsub.s32 %v2505, %v2507
        %v2509 = vrot.slane %v2495, %v2508
        %v2510 = vcombine.low %v2502, %v2509
        %v2511 = vcombine.low %v2383, %v2385
        %v2513 = vunpack.c.l.s4 1983009808
        %v2514 = vunpack.c.0.s8 %v2513
        %v2515 = vlaneseq
        %v2516 = vshrl.u32 %v2515, 7
        %v2517 = vsub.s32 %v2514, %v2516
        %v2518 = vrot.slane %v2511, %v2517
        %v2519 = vcombine.low %v2401, %v2400
        %v2520 = vcombine.low %v2402, %v2410
        %v2522 = vunpack.c.l.s4 1983009808
        %v2523 = vunpack.c.0.s8 %v2522
        %v2524 = vlaneseq
        %v2525 = vshrl.u32 %v2524, 7
        %v2526 = vsub.s32 %v2523, %v2525
        %v2527 = vrot.slane %v2519, %v2526
        %v2529 = vunpack.c.l.s4 1983009808
        %v2530 = vunpack.c.0.s8 %v2529
        %v2531 = vlaneseq
        %v2532 = vshrl.u32 %v2531, 7
        %v2533 = vsub.s32 %v2530, %v2532
        %v2534 = vrot.slane %v2520, %v2533
        %v2535 = vcombine.low %v2527, %v2534
        %v2536 = vcombine.low %v2418, %v2417
        %v2538 = vunpack.c.l.s4 1983009808
        %v2539 = vunpack.c.0.s8 %v2538
        %v2540 = vlaneseq
        %v2541 = vshrl.u32 %v2540, 7
        %v2542 = vsub.s32 %v2539, %v2541
        %v2543 = vrot.slane %v2536, %v2542
        %v2544 = vcombine.low %v2426, %v2434
        %v2545 = vcombine.low %v2433, %v2435
        %v2547 = vunpack.c.l.s4 1983009808
        %v2548 = vunpack.c.0.s8 %v2547
        %v2549 = vlaneseq
        %v2550 = vshrl.u32 %v2549, 7
        %v2551 = vsub.s32 %v2548, %v2550
        %v2552 = vrot.slane %v2544, %v2551
        %v2554 = vunpack.c.l.s4 1983009808
        %v2555 = vunpack.c.0.s8 %v2554
        %v2556 = vlaneseq
        %v2557 = vshrl.u32 %v2556, 7
        %v2558 = vsub.s32 %v2555, %v2557
        %v2559 = vrot.slane %v2545, %v2558
        %v2560 = vcombine.low %v2552, %v2559
        %v2561 = vcombine.low %v2442, %v2443
        %v2563 = vunpack.c.l.s4 1983009808
        %v2564 = vunpack.c.0.s8 %v2563
        %v2565 = vlaneseq
        %v2566 = vshrl.u32 %v2565, 7
        %v2567 = vsub.s32 %v2564, %v2566
        %v2568 = vrot.slane %v2561, %v2567
        %2579 = vst.msk [vmem:[%s345] sm:$0xff] %vm840, %v2460
        %vm2580 = vcmask 257024
        %2581 = vst.msk [vmem:[%s345 + $0x8] sm:$0xf] %vm2580, %v2468
        %2582 = vst.msk [vmem:[%s345 + $0x10] sm:$0xff] %vm840, %v2485
        %2583 = vst.msk [vmem:[%s345 + $0x18] sm:$0xf] %vm2580, %v2493
        %2584 = vst.msk [vmem:[%s345 + $0x20] sm:$0xff] %vm840, %v2510
        %2585 = vst.msk [vmem:[%s345 + $0x28] sm:$0xf] %vm2580, %v2518
        %2586 = vst.msk [vmem:[%s345 + $0x30] sm:$0xff] %vm840, %v2535
        %2587 = vst.msk [vmem:[%s345 + $0x38] sm:$0xf] %vm2580, %v2543
        %2588 = vst.msk [vmem:[%s345 + $0x40] sm:$0xff] %vm840, %v2560
        %2589 = vst.msk [vmem:[%s345 + $0x48] sm:$0xf] %vm2580, %v2568
        %s2590 = sand.u32 %s180, 1
        %s2591 = sand.u32 %s180, 1
        %s2592 = smul.addr %s2591, 80
        %s2593 = scalar_lea.vmem [#allocation4], %s2592
        // Predicated region
        $region57: #{tpu_custom_call.1} parent=39 // pred_check
          %p2594 = pneg %p190
        $region58: #{tpu_custom_call.1} parent=39 // pred_check_branch
          %2596 = sbr.rel (%p2594) target = $region60
        $region59: #{tpu_custom_call.1} parent=39 // pred_region
          %s2597 = smul.u32 5, %s21
          %s2598 = ssub.s32 13, %s2597
          %p2599 = scmp.lt.s32.totalorder %s2598, 5
          %s2600 = scalar_select %p2599, %s2598, 5
          %s2601 = smul.u32 128, %s2600
          %s2602 = smul.u32 %s2601, 2
          %p2603 = scmp.ne.s32.totalorder 0, %s2602
          %s2604 = smul.addr %s2597, 2
          %s2605 = smul.addr %s20, 26
          %s2606 = sadd.s32 %s2604, %s2605
          %s2607 = smul.addr %s2606, 8
          %s2608 = scalar_lea.vmem %s5, %s2607
          %s2609 = smul.u32 %s2600, 2
          // Predicated region
          $region61: #{tpu_custom_call.1} parent=59 // pred_check
            %p2610 = pneg %p2603
          $region62: #{tpu_custom_call.1} parent=59 // pred_check_branch
            %2612 = sbr.rel (%p2610) target = $region64
          $region63: #{tpu_custom_call.1} parent=59 // pred_region
            // Predicated region
            $region65: #{tpu_custom_call.1} parent=63 // pred_check
              _
            $region66: #{tpu_custom_call.1} parent=63 // pred_check_branch
              %2614 = sbr.rel (0) target = $region68
            $region67: #{tpu_custom_call.1} parent=63 // pred_region
              // Predicated region
              $region87: #{tpu_custom_call.1} parent=67 // pred_check
                _
              $region88: #{tpu_custom_call.1} parent=67 // pred_check_branch
                %2682 = sbr.rel (0) target = $region90
              $region89: #{tpu_custom_call.1} parent=67 // pred_region
                %s2683 = sdiv.u32.pop %s2609, 10
                %s2684 = srem.u32.pop %s2609, 10
                // While loop
                $region91: #{tpu_custom_call.1} parent=89 // loop_pre_header
                  _
                $region92: #{tpu_custom_call.1} parent=89 // loop_header
                  %s2686 = sphi 0, %s2688
                  %p2687 = scmp.ge.s32.totalorder %s2686, %s2683
                  %s2691 = sphi 0, %s2716
                  %s2692 = sphi %s2593, %s2719
                  %s2693 = sphi %s2608, %s2720
                $region93: #{tpu_custom_call.1} parent=89 // loop_header_branch
                  %2690 = sbr.rel (%p2687) target = $region97
                $region94: #{tpu_custom_call.1} parent=89 // loop_body
                  %v2694 = vld [vmem:[%s2692] sm:$0xff]
                  %2695 = vst [vmem:[%s2693] sm:$0xff] %v2694
                  %v2696 = vld [vmem:[%s2692 + $0x8] sm:$0xff]
                  %2697 = vst [vmem:[%s2693 + $0x8] sm:$0xff] %v2696
                  %v2698 = vld [vmem:[%s2692 + $0x10] sm:$0xff]
                  %2699 = vst [vmem:[%s2693 + $0x10] sm:$0xff] %v2698
                  %v2700 = vld [vmem:[%s2692 + $0x18] sm:$0xff]
                  %2701 = vst [vmem:[%s2693 + $0x18] sm:$0xff] %v2700
                  %v2702 = vld [vmem:[%s2692 + $0x20] sm:$0xff]
                  %2703 = vst [vmem:[%s2693 + $0x20] sm:$0xff] %v2702
                  %v2704 = vld [vmem:[%s2692 + $0x28] sm:$0xff]
                  %2705 = vst [vmem:[%s2693 + $0x28] sm:$0xff] %v2704
                  %v2706 = vld [vmem:[%s2692 + $0x30] sm:$0xff]
                  %2707 = vst [vmem:[%s2693 + $0x30] sm:$0xff] %v2706
                  %v2708 = vld [vmem:[%s2692 + $0x38] sm:$0xff]
                  %2709 = vst [vmem:[%s2693 + $0x38] sm:$0xff] %v2708
                  %v2710 = vld [vmem:[%s2692 + $0x40] sm:$0xff]
                  %2711 = vst [vmem:[%s2693 + $0x40] sm:$0xff] %v2710
                  %v2712 = vld [vmem:[%s2692 + $0x48] sm:$0xff]
                  %2713 = vst [vmem:[%s2693 + $0x48] sm:$0xff] %v2712
                  %s2714 = sadd.s32 1, %s2691
                  %p2715 = scmp.ge.s32.totalorder %s2714, %s2683
                  %s2716 = scalar_select %p2715, 0, %s2714
                  %s2717 = smul.u32 %s2716, 80
                  %s2718 = smul.u32 %s2716, 80
                  %s2719 = scalar_lea.vmem %s2593, %s2717 [#allocation4]
                  %s2720 = scalar_lea.vmem %s2608, %s2718
                $region95: #{tpu_custom_call.1} parent=89 // loop_footer
                  %s2688 = sadd.s32 %s2686, 1
                $region96: #{tpu_custom_call.1} parent=89 // loop_footer_branch
                  %2685 = sbr.rel target = $region92
                $region97: #{tpu_custom_call.1} parent=89 // loop_exit
                  _
                %s2721 = sdiv.u32.pop %s2609, 10
                %s2722 = srem.u32.pop %s2609, 10
                %s2723 = smul.u32 %s2721, 10
                %s2724 = smul.u32 8, %s2723
                %s2725 = scalar_lea.vmem %s2593, %s2724 [#allocation4]
                %s2726 = smul.u32 8, %s2723
                %s2727 = scalar_lea.vmem %s2608, %s2726
                // While loop
                $region98: #{tpu_custom_call.1} parent=89 // loop_pre_header
                  _
                $region99: #{tpu_custom_call.1} parent=89 // loop_header
                  %s2729 = sphi 0, %s2731
                  %p2730 = scmp.ge.s32.totalorder %s2729, %s2722
                  %s2734 = sphi 0, %s2741
                  %s2735 = sphi %s2725, %s2744
                  %s2736 = sphi %s2727, %s2745
                $region100: #{tpu_custom_call.1} parent=89 // loop_header_branch
                  %2733 = sbr.rel (%p2730) target = $region104
                $region101: #{tpu_custom_call.1} parent=89 // loop_body
                  %v2737 = vld [vmem:[%s2735] sm:$0xff]
                  %2738 = vst [vmem:[%s2736] sm:$0xff] %v2737
                  %s2739 = sadd.s32 1, %s2734
                  %p2740 = scmp.ge.s32.totalorder %s2739, %s2722
                  %s2741 = scalar_select %p2740, 0, %s2739
                  %s2742 = smul.u32 %s2741, 8
                  %s2743 = smul.u32 %s2741, 8
                  %s2744 = scalar_lea.vmem %s2725, %s2742 [#allocation4]
                  %s2745 = scalar_lea.vmem %s2727, %s2743
                $region102: #{tpu_custom_call.1} parent=89 // loop_footer
                  %s2731 = sadd.s32 %s2729, 1
                $region103: #{tpu_custom_call.1} parent=89 // loop_footer_branch
                  %2728 = sbr.rel target = $region99
                $region104: #{tpu_custom_call.1} parent=89 // loop_exit
                  _
              $region90: #{tpu_custom_call.1} parent=67 // pred_fallthru
                _
              // Predicated region
              $region105: #{tpu_custom_call.1} parent=67 // pred_check
                _
              $region106: #{tpu_custom_call.1} parent=67 // pred_check_branch
                %2747 = sbr.rel target = $region108
              $region107: #{tpu_custom_call.1} parent=67 // pred_region
                _
              $region108: #{tpu_custom_call.1} parent=67 // pred_fallthru
                _
            $region68: #{tpu_custom_call.1} parent=63 // pred_fallthru
              _
            // Predicated region
            $region69: #{tpu_custom_call.1} parent=63 // pred_check
              _
            $region70: #{tpu_custom_call.1} parent=63 // pred_check_branch
              %2616 = sbr.rel target = $region72
            $region71: #{tpu_custom_call.1} parent=63 // pred_region
              %s2618 = sdiv.u32.pop %s2609, 10
              %s2619 = srem.u32.pop %s2609, 10
              // While loop
              $region73: #{tpu_custom_call.1} parent=71 // loop_pre_header
                _
              $region74: #{tpu_custom_call.1} parent=71 // loop_header
                %s2621 = sphi 0, %s2623
                %p2622 = scmp.ge.s32.totalorder %s2621, %s2618
                %s2626 = sphi 0, %s2651
                %s2627 = sphi %s2593, %s2654
                %s2628 = sphi %s2608, %s2655
              $region75: #{tpu_custom_call.1} parent=71 // loop_header_branch
                %2625 = sbr.rel (%p2622) target = $region79
              $region76: #{tpu_custom_call.1} parent=71 // loop_body
                %v2629 = vld [vmem:[%s2627] sm:$0xff]
                %2630 = vst [vmem:[%s2628] sm:$0xff] %v2629
                %v2631 = vld [vmem:[%s2627 + $0x8] sm:$0xff]
                %2632 = vst [vmem:[%s2628 + $0x8] sm:$0xff] %v2631
                %v2633 = vld [vmem:[%s2627 + $0x10] sm:$0xff]
                %2634 = vst [vmem:[%s2628 + $0x10] sm:$0xff] %v2633
                %v2635 = vld [vmem:[%s2627 + $0x18] sm:$0xff]
                %2636 = vst [vmem:[%s2628 + $0x18] sm:$0xff] %v2635
                %v2637 = vld [vmem:[%s2627 + $0x20] sm:$0xff]
                %2638 = vst [vmem:[%s2628 + $0x20] sm:$0xff] %v2637
                %v2639 = vld [vmem:[%s2627 + $0x28] sm:$0xff]
                %2640 = vst [vmem:[%s2628 + $0x28] sm:$0xff] %v2639
                %v2641 = vld [vmem:[%s2627 + $0x30] sm:$0xff]
                %2642 = vst [vmem:[%s2628 + $0x30] sm:$0xff] %v2641
                %v2643 = vld [vmem:[%s2627 + $0x38] sm:$0xff]
                %2644 = vst [vmem:[%s2628 + $0x38] sm:$0xff] %v2643
                %v2645 = vld [vmem:[%s2627 + $0x40] sm:$0xff]
                %2646 = vst [vmem:[%s2628 + $0x40] sm:$0xff] %v2645
                %v2647 = vld [vmem:[%s2627 + $0x48] sm:$0xff]
                %2648 = vst [vmem:[%s2628 + $0x48] sm:$0xff] %v2647
                %s2649 = sadd.s32 1, %s2626
                %p2650 = scmp.ge.s32.totalorder %s2649, %s2618
                %s2651 = scalar_select %p2650, 0, %s2649
                %s2652 = smul.u32 %s2651, 80
                %s2653 = smul.u32 %s2651, 80
                %s2654 = scalar_lea.vmem %s2593, %s2652 [#allocation4]
                %s2655 = scalar_lea.vmem %s2608, %s2653
              $region77: #{tpu_custom_call.1} parent=71 // loop_footer
                %s2623 = sadd.s32 %s2621, 1
              $region78: #{tpu_custom_call.1} parent=71 // loop_footer_branch
                %2620 = sbr.rel target = $region74
              $region79: #{tpu_custom_call.1} parent=71 // loop_exit
                _
              %s2656 = sdiv.u32.pop %s2609, 10
              %s2657 = srem.u32.pop %s2609, 10
              %s2658 = smul.u32 %s2656, 10
              %s2659 = smul.u32 8, %s2658
              %s2660 = scalar_lea.vmem %s2593, %s2659 [#allocation4]
              %s2661 = smul.u32 8, %s2658
              %s2662 = scalar_lea.vmem %s2608, %s2661
              // While loop
              $region80: #{tpu_custom_call.1} parent=71 // loop_pre_header
                _
              $region81: #{tpu_custom_call.1} parent=71 // loop_header
                %s2664 = sphi 0, %s2666
                %p2665 = scmp.ge.s32.totalorder %s2664, %s2657
                %s2669 = sphi 0, %s2676
                %s2670 = sphi %s2660, %s2679
                %s2671 = sphi %s2662, %s2680
              $region82: #{tpu_custom_call.1} parent=71 // loop_header_branch
                %2668 = sbr.rel (%p2665) target = $region86
              $region83: #{tpu_custom_call.1} parent=71 // loop_body
                %v2672 = vld [vmem:[%s2670] sm:$0xff]
                %2673 = vst [vmem:[%s2671] sm:$0xff] %v2672
                %s2674 = sadd.s32 1, %s2669
                %p2675 = scmp.ge.s32.totalorder %s2674, %s2657
                %s2676 = scalar_select %p2675, 0, %s2674
                %s2677 = smul.u32 %s2676, 8
                %s2678 = smul.u32 %s2676, 8
                %s2679 = scalar_lea.vmem %s2660, %s2677 [#allocation4]
                %s2680 = scalar_lea.vmem %s2662, %s2678
              $region84: #{tpu_custom_call.1} parent=71 // loop_footer
                %s2666 = sadd.s32 %s2664, 1
              $region85: #{tpu_custom_call.1} parent=71 // loop_footer_branch
                %2663 = sbr.rel target = $region81
              $region86: #{tpu_custom_call.1} parent=71 // loop_exit
                _
            $region72: #{tpu_custom_call.1} parent=63 // pred_fallthru
              _
          $region64: #{tpu_custom_call.1} parent=59 // pred_fallthru
            _
          %2748 = vnop
        $region60: #{tpu_custom_call.1} parent=39 // pred_fallthru
          _
      $region40: #{tpu_custom_call.1} parent=5 // pred_fallthru
        _
      %p2749 = scmp.le.s32.totalorder 2, %s11
      // Predicated region
      $region109: #{tpu_custom_call.1} parent=5 // pred_check
        %p2750 = pneg %p2749
      $region110: #{tpu_custom_call.1} parent=5 // pred_check_branch
        %2752 = sbr.rel (%p2750) target = $region112
      $region111: #{tpu_custom_call.1} parent=5 // pred_region
        %s2753 = ssub.s32 %s11, 2
        // Predicated region
        $region113: #{tpu_custom_call.1} parent=111 // pred_check
          %p2754 = pneg %p196
        $region114: #{tpu_custom_call.1} parent=111 // pred_check_branch
          %2756 = sbr.rel (%p2754) target = $region116
        $region115: #{tpu_custom_call.1} parent=111 // pred_region
          %s2757 = sand.u32 %s181, 1
          %s2758 = sand.u32 %s181, 1
          %s2759 = smul.addr %s2758, 80
          %s2760 = scalar_lea.vmem [#allocation4], %s2759
        $region116: #{tpu_custom_call.1} parent=111 // pred_fallthru
          _
      $region112: #{tpu_custom_call.1} parent=5 // pred_fallthru
        _
    $region6: #{tpu_custom_call.1} parent=1 // loop_footer
      %s15 = sadd.s32 1, %s11
    $region7: #{tpu_custom_call.1} parent=1 // loop_footer_branch
      %10 = sbr.rel target = $region3
    $region8: #{tpu_custom_call.1} parent=1 // loop_exit
      _

</llo_original>
